<compile_context>
chip_gen: v7x
topology: tpu7x:2x2x1
jax: 0.10.0
libtpu: 0.0.40
codegen_flags: <defaults>
</compile_context>

<pallas_src>
import functools

import jax
import jax.numpy as jnp
from jax.experimental import pallas as pl
from jax.experimental.pallas import tpu as pltpu


_PAD = 4  # grid margin around the image: covers 1x1 conv pad(1) + 5x5 taps(2) + slack
# Safe on every generation: v5e/v6e have 128 MiB physical VMEM, v7x has 64 MiB.
# Per-step footprint here is only ~0.1 MiB, so a fixed conservative cap is fine.
_VMEM_LIMIT_BYTES = 32 * 1024 * 1024


# ---------------------------------------------------------------------------
# Fused InceptionBlock kernel (one grid step = one image)
# ---------------------------------------------------------------------------
def _inception_kernel(x_ref, m_in_ref, m_core_ref,
                      wh_ref, bh_ref, w2_ref, b2_ref, w3_ref, b3_ref,
                      w4_ref, b4_ref, o_ref, *,
                      w0, wl, offs3, offs5, c1, c2a, c2b, c3a, c3b, c4):
    """Pixels-on-lanes layout.

    x_ref      : (Cin, L)  bf16 -- image zero-padded by _PAD, spatially flattened.
    m_in_ref   : (1, L)    f32  -- 1 on the (H+2)x(W+2) conv-output window, else 0.
    m_core_ref : (1, L)    f32  -- 1 on the HxW image support, else 0.
    wh/bh      : concatenated 1x1-head weights (c1+c2a+c3a, Cin) / bias column.
    w2/w3      : (9, c2b, c2a) / (25, c3b, c3a) per-tap weights; w4: (c4, Cin).
    o_ref      : (Ctot, WL) f32 -- all four branches channel-concatenated over the
                 full-width output window (invalid columns sliced off in the wrapper).
    """
    x = x_ref[...]                                   # (cin, L) bf16
    m_in = m_in_ref[...]                             # (1, L) f32
    m_core = m_core_ref[...]                         # (1, L) f32

    # --- p1_1 / p2_1 / p3_1: three shared-input 1x1 convs as ONE matmul -------------
    heads = jnp.dot(wh_ref[...], x, preferred_element_type=jnp.float32)   # (12, L)
    heads = jnp.maximum(heads + bh_ref[...], 0.0)
    p1 = heads[:c1, w0:w0 + wl]                                           # (c1, WL)
    # t2/t3 feed the 3x3/5x5 convs: zero them outside the conv-output window (this IS
    # those convs' own zero padding) and keep them in VMEM/vregs as bf16.
    t2 = (heads[c1:c1 + c2a, :] * m_in).astype(jnp.bfloat16)              # (c2a, L)
    t3 = (heads[c1 + c2a:c1 + c2a + c3a, :] * m_in).astype(jnp.bfloat16)  # (c3a, L)

    # --- p2_2: 3x3 conv, taps = lane-shifted slices, dense f32 accumulator ----------
    acc2 = jnp.zeros((c2b, wl), jnp.float32)
    for t, off in enumerate(offs3):
        acc2 += jnp.dot(w2_ref[t], t2[:, w0 + off:w0 + off + wl],
                        preferred_element_type=jnp.float32)
    p2 = jnp.maximum(acc2 + b2_ref[...], 0.0)                             # (c2b, WL)

    # --- p3_2: 5x5 conv -------------------------------------------------------------
    acc3 = jnp.zeros((c3b, wl), jnp.float32)
    for t, off in enumerate(offs5):
        acc3 += jnp.dot(w3_ref[t], t3[:, w0 + off:w0 + off + wl],
                        preferred_element_type=jnp.float32)
    p3 = jnp.maximum(acc3 + b3_ref[...], 0.0)                             # (c3b, WL)

    # --- p4_1 (maxpool 3x3, s1, pad 1) fused with p4_2 (1x1 conv, pad 1) ------------
    xf = x.astype(jnp.float32)
    xneg = jnp.where(m_core > 0.0, xf, -jnp.inf)      # -inf outside the image support
    pooled = xneg[:, w0 + offs3[0]:w0 + offs3[0] + wl]
    for off in offs3[1:]:
        pooled = jnp.maximum(pooled, xneg[:, w0 + off:w0 + off + wl])
    # zero-pad ring of the pooled map (the 1x1 conv's own padding), never -inf/NaN
    p4in = jnp.where(m_core[:, w0:w0 + wl] > 0.0, pooled, 0.0).astype(jnp.bfloat16)
    p4 = jnp.maximum(jnp.dot(w4_ref[...], p4in, preferred_element_type=jnp.float32)
                     + b4_ref[...], 0.0)                                  # (c4, WL)

    # --- channel-concatenated output slab (single lane-dense block, already NCHW) ---
    o_ref[0:c1, :] = p1.astype(o_ref.dtype)
    o_ref[c1:c1 + c2b, :] = p2.astype(o_ref.dtype)
    o_ref[c1 + c2b:c1 + c2b + c3b, :] = p3.astype(o_ref.dtype)
    o_ref[c1 + c2b + c3b:c1 + c2b + c3b + c4, :] = p4.astype(o_ref.dtype)


# ---------------------------------------------------------------------------
# Wrapper (layout/padding glue in plain JAX, everything hot in one Pallas call)
# ---------------------------------------------------------------------------
def _window_mask(gh, gw, r0, r1, c0, c1):
    r = jnp.arange(gh)
    c = jnp.arange(gw)
    mr = ((r >= r0) & (r < r1)).astype(jnp.float32)
    mc = ((c >= c0) & (c < c1)).astype(jnp.float32)
    return (mr[:, None] * mc[None, :]).reshape(1, gh * gw)


def inception_block(params, x_nchw):
    """InceptionBlock forward: (N, Cin, H, W) -> (N, Ctot, H+2, W+2) (NCHW)."""
    n, cin, h, w = x_nchw.shape
    w1, b1 = params["p1_1"]
    w21, b21 = params["p2_1"]
    w22, b22 = params["p2_2"]
    w31, b31 = params["p3_1"]
    w32, b32 = params["p3_2"]
    w4, b4 = params["p4_2"]
    c1 = w1.shape[0]
    c2a, c2b = w21.shape[0], w22.shape[0]
    c3a, c3b = w31.shape[0], w32.shape[0]
    c4 = w4.shape[0]
    ctot = c1 + c2b + c3b + c4
    ho, wo = h + 2, w + 2                        # ConvBlock 1x1 convs use padding=1
    gh, gw = h + 2 * _PAD, w + 2 * _PAD          # padded working grid
    lp = gh * gw                                 # flat padded-grid size
    w0 = (_PAD - 1) * gw                         # output window start (row _PAD-1)
    wl = ho * gw                                 # full-width output window length

    # NCHW is already channels-on-sublanes / pixels-on-lanes: just pad + flatten.
    xp = jnp.pad(x_nchw, ((0, 0), (0, 0), (_PAD, _PAD), (_PAD, _PAD)))
    xflat = xp.reshape(n, cin, lp).astype(jnp.bfloat16)

    # Masks (tiny; VMEM-resident across grid steps via constant index_maps).
    m_in = _window_mask(gh, gw, _PAD - 1, _PAD - 1 + ho, _PAD - 1, _PAD - 1 + wo)
    m_core = _window_mask(gh, gw, _PAD, _PAD + h, _PAD, _PAD + w)

    # Weights: 1x1 heads concatenated along Cout; KxK convs repacked as per-tap mats.
    wh = jnp.concatenate([w1.reshape(c1, cin), w21.reshape(c2a, cin),
                          w31.reshape(c3a, cin)], axis=0).astype(jnp.bfloat16)
    bh = jnp.concatenate([b1, b21, b31]).reshape(-1, 1).astype(jnp.float32)
    w2t = jnp.transpose(w22, (2, 3, 0, 1)).reshape(9, c2b, c2a).astype(jnp.bfloat16)
    b2c = b22.reshape(-1, 1).astype(jnp.float32)
    w3t = jnp.transpose(w32, (2, 3, 0, 1)).reshape(25, c3b, c3a).astype(jnp.bfloat16)
    b3c = b32.reshape(-1, 1).astype(jnp.float32)
    w4t = w4.reshape(c4, cin).astype(jnp.bfloat16)
    b4c = b4.reshape(-1, 1).astype(jnp.float32)

    # Flat tap offsets on the padded grid (di-major to match the weight repack).
    offs3 = tuple((di - 1) * gw + (dj - 1) for di in range(3) for dj in range(3))
    offs5 = tuple((di - 2) * gw + (dj - 2) for di in range(5) for dj in range(5))

    kernel = functools.partial(
        _inception_kernel, w0=w0, wl=wl, offs3=offs3, offs5=offs5,
        c1=c1, c2a=c2a, c2b=c2b, c3a=c3a, c3b=c3b, c4=c4)

    cmap2 = lambda g: (0, 0)
    cmap3 = lambda g: (0, 0, 0)
    out = pl.pallas_call(
        kernel,
        grid=(n,),                      # one image / step; even grid keeps both v7x TCs busy
        in_specs=[
            pl.BlockSpec((None, cin, lp), lambda g: (g, 0, 0)),
            pl.BlockSpec((1, lp), cmap2),
            pl.BlockSpec((1, lp), cmap2),
            pl.BlockSpec((c1 + c2a + c3a, cin), cmap2),
            pl.BlockSpec((c1 + c2a + c3a, 1), cmap2),
            pl.BlockSpec((9, c2b, c2a), cmap3),
            pl.BlockSpec((c2b, 1), cmap2),
            pl.BlockSpec((25, c3b, c3a), cmap3),
            pl.BlockSpec((c3b, 1), cmap2),
            pl.BlockSpec((c4, cin), cmap2),
            pl.BlockSpec((c4, 1), cmap2),
        ],
        out_specs=pl.BlockSpec((None, ctot, wl), lambda g: (g, 0, 0)),
        out_shape=jax.ShapeDtypeStruct((n, ctot, wl), jnp.float32),
        compiler_params=pltpu.CompilerParams(
            dimension_semantics=("parallel",),
            vmem_limit_bytes=_VMEM_LIMIT_BYTES),
    )(xflat, m_in, m_core, wh, bh, w2t, b2c, w3t, b3c, w4t, b4c)

    # The window spans all gw columns; keep only the valid (W+2)-wide output columns.
    out = out.reshape(n, ctot, ho, gw)[:, :, :, _PAD - 1:_PAD - 1 + wo]
    return out                                    # already NCHW


# ---------------------------------------------------------------------------
# InceptionBlock parameters
# ---------------------------------------------------------------------------
def _init_conv(key, cin, cout, k):
    kw_, kb = jax.random.split(key)
    bound = 1.0 / float(jnp.sqrt(cin * k * k))    # PyTorch default init
    wgt = jax.random.uniform(kw_, (cout, cin, k, k), jnp.float32, -bound, bound)
    b = jax.random.uniform(kb, (cout,), jnp.float32, -bound, bound)
    return wgt, b


def init_inception_params(key, cin, c1, c2, c3, c4):
    ks = jax.random.split(key, 6)
    return {
        "p1_1": _init_conv(ks[0], cin, c1, 1),
        "p2_1": _init_conv(ks[1], cin, c2[0], 1),
        "p2_2": _init_conv(ks[2], c2[0], c2[1], 3),
        "p3_1": _init_conv(ks[3], cin, c3[0], 1),
        "p3_2": _init_conv(ks[4], c3[0], c3[1], 5),
        "p4_2": _init_conv(ks[5], cin, c4, 1),
    }


# ---------------------------------------------------------------------------
# Pure-JAX reference (for verification)
# ---------------------------------------------------------------------------
def _conv_relu_ref(x_nhwc, w_oihw, b, pad):
    w_hwio = jnp.transpose(w_oihw, (2, 3, 1, 0))
    y = jax.lax.conv_general_dilated(
        x_nhwc, w_hwio, (1, 1), [(pad, pad), (pad, pad)],
        dimension_numbers=("NHWC", "HWIO", "NHWC"),
        precision=jax.lax.Precision.HIGHEST)
    return jax.nn.relu(y + b)


def _maxpool_ref(x_nhwc, pad):
    return jax.lax.reduce_window(
        x_nhwc, -jnp.inf, jax.lax.max, (1, 3, 3, 1), (1, 1, 1, 1),
        [(0, 0), (pad, pad), (pad, pad), (0, 0)])


def inception_ref(params, x_nchw):
    x = jnp.transpose(x_nchw, (0, 2, 3, 1))
    p1 = _conv_relu_ref(x, *params["p1_1"], 1)
    p2 = _conv_relu_ref(_conv_relu_ref(x, *params["p2_1"], 1), *params["p2_2"], 1)
    p3 = _conv_relu_ref(_conv_relu_ref(x, *params["p3_1"], 1), *params["p3_2"], 2)
    # TODO(synk): the original module uses MaxPool2d(3, stride=1, padding=0), which makes
    # p4 spatially (H, W) while p1/p2/p3 are (H+2, W+2) (ConvBlock's default padding=1 on
    # the 1x1 convs), so torch.cat(dim=1) raises in PyTorch; we keep the standard Inception
    # maxpool padding=1 (-inf pad) so the channel concat is well-defined.
    p4 = _conv_relu_ref(_maxpool_ref(x, 1), *params["p4_2"], 1)
    return jnp.transpose(jnp.concatenate([p1, p2, p3, p4], -1), (0, 3, 1, 2))


if __name__ == "__main__":
    key = jax.random.PRNGKey(0)
    kx, kp = jax.random.split(key)
    # NCHW input, like PyTorch: batch=2, in_channels=4, 16x16 spatial
    x = jax.random.normal(kx, (2, 4, 16, 16), jnp.float32)
    params = init_inception_params(kp, 4, 4, (4, 8), (4, 8), 4)

    out = jax.block_until_ready(jax.jit(inception_block)(params, x))
    assert out.shape == (2, 4 + 8 + 8 + 4, 18, 18), out.shape

    ref = inception_ref(params, x)
    err = float(jnp.max(jnp.abs(out - ref)))
    # bf16 MXU operands (f32 accumulation) -> slightly looser tolerance than pure f32.
    assert jnp.allclose(out, ref, atol=2e-2, rtol=2e-2), f"max abs err {err}"

    print("KERNEL_OK")
</pallas_src>

<mosaic_0001>
module attributes {stable_mosaic.version = 11 : i64} {
  func.func @_inception_kernel(%arg0: i32, %arg1: memref<1x4x576xbf16, #tpu.memory_space<vmem>>, %arg2: memref<1x576xf32, #tpu.memory_space<vmem>>, %arg3: memref<1x576xf32, #tpu.memory_space<vmem>>, %arg4: memref<12x4xbf16, #tpu.memory_space<vmem>>, %arg5: memref<12x1xf32, #tpu.memory_space<vmem>>, %arg6: memref<9x8x4xbf16, #tpu.memory_space<vmem>>, %arg7: memref<8x1xf32, #tpu.memory_space<vmem>>, %arg8: memref<25x8x4xbf16, #tpu.memory_space<vmem>>, %arg9: memref<8x1xf32, #tpu.memory_space<vmem>>, %arg10: memref<4x4xbf16, #tpu.memory_space<vmem>>, %arg11: memref<4x1xf32, #tpu.memory_space<vmem>>, %arg12: memref<1x24x432xf32, #tpu.memory_space<vmem>>) attributes {dimension_semantics = [#tpu.dimension_semantics<parallel>], iteration_bounds = array<i64: 2>, scalar_prefetch = 0 : i64, scratch_operands = 0 : i64, tpu.core_type = #tpu.core_type<tc>, window_params = [{transform_indices = @transform_0, window_bounds = array<i64: 1, 4, 576>}, {pipeline_mode = #tpu.pipeline_mode<synchronous>, transform_indices = @transform_1, window_bounds = array<i64: 1, 576>}, {pipeline_mode = #tpu.pipeline_mode<synchronous>, transform_indices = @transform_2, window_bounds = array<i64: 1, 576>}, {pipeline_mode = #tpu.pipeline_mode<synchronous>, transform_indices = @transform_3, window_bounds = array<i64: 12, 4>}, {pipeline_mode = #tpu.pipeline_mode<synchronous>, transform_indices = @transform_4, window_bounds = array<i64: 12, 1>}, {pipeline_mode = #tpu.pipeline_mode<synchronous>, transform_indices = @transform_5, window_bounds = array<i64: 9, 8, 4>}, {pipeline_mode = #tpu.pipeline_mode<synchronous>, transform_indices = @transform_6, window_bounds = array<i64: 8, 1>}, {pipeline_mode = #tpu.pipeline_mode<synchronous>, transform_indices = @transform_7, window_bounds = array<i64: 25, 8, 4>}, {pipeline_mode = #tpu.pipeline_mode<synchronous>, transform_indices = @transform_8, window_bounds = array<i64: 8, 1>}, {pipeline_mode = #tpu.pipeline_mode<synchronous>, transform_indices = @transform_9, window_bounds = array<i64: 4, 4>}, {pipeline_mode = #tpu.pipeline_mode<synchronous>, transform_indices = @transform_10, window_bounds = array<i64: 4, 1>}, {transform_indices = @transform_11, window_bounds = array<i64: 1, 24, 432>}]} {
    %c0 = arith.constant 0 : index
    %c0_0 = arith.constant 0 : index
    %c0_1 = arith.constant 0 : index
    %0 = vector.load %arg1[%c0, %c0_0, %c0_1] : memref<1x4x576xbf16, #tpu.memory_space<vmem>>, vector<1x4x576xbf16>
    %1 = vector.shape_cast %0 : vector<1x4x576xbf16> to vector<4x576xbf16>
    %c0_2 = arith.constant 0 : index
    %c0_3 = arith.constant 0 : index
    %2 = vector.load %arg2[%c0_2, %c0_3] : memref<1x576xf32, #tpu.memory_space<vmem>>, vector<1x576xf32>
    %c0_4 = arith.constant 0 : index
    %c0_5 = arith.constant 0 : index
    %3 = vector.load %arg3[%c0_4, %c0_5] : memref<1x576xf32, #tpu.memory_space<vmem>>, vector<1x576xf32>
    %c0_6 = arith.constant 0 : index
    %c0_7 = arith.constant 0 : index
    %4 = vector.load %arg4[%c0_6, %c0_7] : memref<12x4xbf16, #tpu.memory_space<vmem>>, vector<12x4xbf16>
    %cst = arith.constant dense<0.000000e+00> : vector<12x576xf32>
    %5 = tpu.matmul %4, %1, %cst {dimension_numbers = #tpu.dot_dimension_numbers<[1], [0], [0], [1], [0, 0, 1, 1], [], []>} : vector<12x4xbf16>, vector<4x576xbf16>, vector<12x576xf32> -> vector<12x576xf32>
    %c0_8 = arith.constant 0 : index
    %c0_9 = arith.constant 0 : index
    %6 = vector.load %arg5[%c0_8, %c0_9] : memref<12x1xf32, #tpu.memory_space<vmem>>, vector<12x1xf32>
    %7 = vector.broadcast %6 : vector<12x1xf32> to vector<12x576xf32>
    %8 = arith.addf %5, %7 : vector<12x576xf32>
    %cst_10 = arith.constant 0.000000e+00 : f32
    %9 = vector.broadcast %cst_10 : f32 to vector<12x576xf32>
    %10 = arith.maximumf %8, %9 : vector<12x576xf32>
    %11 = vector.extract_strided_slice %10 {offsets = [0, 72], sizes = [4, 432], strides = [1, 1]} : vector<12x576xf32> to vector<4x432xf32>
    %12 = vector.extract_strided_slice %10 {offsets = [4, 0], sizes = [4, 576], strides = [1, 1]} : vector<12x576xf32> to vector<4x576xf32>
    %13 = vector.broadcast %2 : vector<1x576xf32> to vector<4x576xf32>
    %14 = arith.mulf %12, %13 : vector<4x576xf32>
    %15 = arith.truncf %14 : vector<4x576xf32> to vector<4x576xbf16>
    %16 = vector.extract_strided_slice %10 {offsets = [8, 0], sizes = [4, 576], strides = [1, 1]} : vector<12x576xf32> to vector<4x576xf32>
    %17 = vector.broadcast %2 : vector<1x576xf32> to vector<4x576xf32>
    %18 = arith.mulf %16, %17 : vector<4x576xf32>
    %19 = arith.truncf %18 : vector<4x576xf32> to vector<4x576xbf16>
    %cst_11 = arith.constant 0.000000e+00 : f32
    %20 = vector.broadcast %cst_11 : f32 to vector<8x432xf32>
    %c0_12 = arith.constant 0 : index
    %c0_13 = arith.constant 0 : index
    %c0_14 = arith.constant 0 : index
    %21 = vector.load %arg6[%c0_12, %c0_13, %c0_14] : memref<9x8x4xbf16, #tpu.memory_space<vmem>>, vector<1x8x4xbf16>
    %22 = vector.shape_cast %21 : vector<1x8x4xbf16> to vector<8x4xbf16>
    %23 = vector.extract_strided_slice %15 {offsets = [0, 47], sizes = [4, 432], strides = [1, 1]} : vector<4x576xbf16> to vector<4x432xbf16>
    %cst_15 = arith.constant dense<0.000000e+00> : vector<8x432xf32>
    %24 = tpu.matmul %22, %23, %cst_15 {dimension_numbers = #tpu.dot_dimension_numbers<[1], [0], [0], [1], [0, 0, 1, 1], [], []>} : vector<8x4xbf16>, vector<4x432xbf16>, vector<8x432xf32> -> vector<8x432xf32>
    %25 = arith.addf %20, %24 : vector<8x432xf32>
    %c1 = arith.constant 1 : index
    %c0_16 = arith.constant 0 : index
    %c0_17 = arith.constant 0 : index
    %26 = vector.load %arg6[%c1, %c0_16, %c0_17] : memref<9x8x4xbf16, #tpu.memory_space<vmem>>, vector<1x8x4xbf16>
    %27 = vector.shape_cast %26 : vector<1x8x4xbf16> to vector<8x4xbf16>
    %28 = vector.extract_strided_slice %15 {offsets = [0, 48], sizes = [4, 432], strides = [1, 1]} : vector<4x576xbf16> to vector<4x432xbf16>
    %cst_18 = arith.constant dense<0.000000e+00> : vector<8x432xf32>
    %29 = tpu.matmul %27, %28, %cst_18 {dimension_numbers = #tpu.dot_dimension_numbers<[1], [0], [0], [1], [0, 0, 1, 1], [], []>} : vector<8x4xbf16>, vector<4x432xbf16>, vector<8x432xf32> -> vector<8x432xf32>
    %30 = arith.addf %25, %29 : vector<8x432xf32>
    %c2 = arith.constant 2 : index
    %c0_19 = arith.constant 0 : index
    %c0_20 = arith.constant 0 : index
    %31 = vector.load %arg6[%c2, %c0_19, %c0_20] : memref<9x8x4xbf16, #tpu.memory_space<vmem>>, vector<1x8x4xbf16>
    %32 = vector.shape_cast %31 : vector<1x8x4xbf16> to vector<8x4xbf16>
    %33 = vector.extract_strided_slice %15 {offsets = [0, 49], sizes = [4, 432], strides = [1, 1]} : vector<4x576xbf16> to vector<4x432xbf16>
    %cst_21 = arith.constant dense<0.000000e+00> : vector<8x432xf32>
    %34 = tpu.matmul %32, %33, %cst_21 {dimension_numbers = #tpu.dot_dimension_numbers<[1], [0], [0], [1], [0, 0, 1, 1], [], []>} : vector<8x4xbf16>, vector<4x432xbf16>, vector<8x432xf32> -> vector<8x432xf32>
    %35 = arith.addf %30, %34 : vector<8x432xf32>
    %c3 = arith.constant 3 : index
    %c0_22 = arith.constant 0 : index
    %c0_23 = arith.constant 0 : index
    %36 = vector.load %arg6[%c3, %c0_22, %c0_23] : memref<9x8x4xbf16, #tpu.memory_space<vmem>>, vector<1x8x4xbf16>
    %37 = vector.shape_cast %36 : vector<1x8x4xbf16> to vector<8x4xbf16>
    %38 = vector.extract_strided_slice %15 {offsets = [0, 71], sizes = [4, 432], strides = [1, 1]} : vector<4x576xbf16> to vector<4x432xbf16>
    %cst_24 = arith.constant dense<0.000000e+00> : vector<8x432xf32>
    %39 = tpu.matmul %37, %38, %cst_24 {dimension_numbers = #tpu.dot_dimension_numbers<[1], [0], [0], [1], [0, 0, 1, 1], [], []>} : vector<8x4xbf16>, vector<4x432xbf16>, vector<8x432xf32> -> vector<8x432xf32>
    %40 = arith.addf %35, %39 : vector<8x432xf32>
    %c4 = arith.constant 4 : index
    %c0_25 = arith.constant 0 : index
    %c0_26 = arith.constant 0 : index
    %41 = vector.load %arg6[%c4, %c0_25, %c0_26] : memref<9x8x4xbf16, #tpu.memory_space<vmem>>, vector<1x8x4xbf16>
    %42 = vector.shape_cast %41 : vector<1x8x4xbf16> to vector<8x4xbf16>
    %43 = vector.extract_strided_slice %15 {offsets = [0, 72], sizes = [4, 432], strides = [1, 1]} : vector<4x576xbf16> to vector<4x432xbf16>
    %cst_27 = arith.constant dense<0.000000e+00> : vector<8x432xf32>
    %44 = tpu.matmul %42, %43, %cst_27 {dimension_numbers = #tpu.dot_dimension_numbers<[1], [0], [0], [1], [0, 0, 1, 1], [], []>} : vector<8x4xbf16>, vector<4x432xbf16>, vector<8x432xf32> -> vector<8x432xf32>
    %45 = arith.addf %40, %44 : vector<8x432xf32>
    %c5 = arith.constant 5 : index
    %c0_28 = arith.constant 0 : index
    %c0_29 = arith.constant 0 : index
    %46 = vector.load %arg6[%c5, %c0_28, %c0_29] : memref<9x8x4xbf16, #tpu.memory_space<vmem>>, vector<1x8x4xbf16>
    %47 = vector.shape_cast %46 : vector<1x8x4xbf16> to vector<8x4xbf16>
    %48 = vector.extract_strided_slice %15 {offsets = [0, 73], sizes = [4, 432], strides = [1, 1]} : vector<4x576xbf16> to vector<4x432xbf16>
    %cst_30 = arith.constant dense<0.000000e+00> : vector<8x432xf32>
    %49 = tpu.matmul %47, %48, %cst_30 {dimension_numbers = #tpu.dot_dimension_numbers<[1], [0], [0], [1], [0, 0, 1, 1], [], []>} : vector<8x4xbf16>, vector<4x432xbf16>, vector<8x432xf32> -> vector<8x432xf32>
    %50 = arith.addf %45, %49 : vector<8x432xf32>
    %c6 = arith.constant 6 : index
    %c0_31 = arith.constant 0 : index
    %c0_32 = arith.constant 0 : index
    %51 = vector.load %arg6[%c6, %c0_31, %c0_32] : memref<9x8x4xbf16, #tpu.memory_space<vmem>>, vector<1x8x4xbf16>
    %52 = vector.shape_cast %51 : vector<1x8x4xbf16> to vector<8x4xbf16>
    %53 = vector.extract_strided_slice %15 {offsets = [0, 95], sizes = [4, 432], strides = [1, 1]} : vector<4x576xbf16> to vector<4x432xbf16>
    %cst_33 = arith.constant dense<0.000000e+00> : vector<8x432xf32>
    %54 = tpu.matmul %52, %53, %cst_33 {dimension_numbers = #tpu.dot_dimension_numbers<[1], [0], [0], [1], [0, 0, 1, 1], [], []>} : vector<8x4xbf16>, vector<4x432xbf16>, vector<8x432xf32> -> vector<8x432xf32>
    %55 = arith.addf %50, %54 : vector<8x432xf32>
    %c7 = arith.constant 7 : index
    %c0_34 = arith.constant 0 : index
    %c0_35 = arith.constant 0 : index
    %56 = vector.load %arg6[%c7, %c0_34, %c0_35] : memref<9x8x4xbf16, #tpu.memory_space<vmem>>, vector<1x8x4xbf16>
    %57 = vector.shape_cast %56 : vector<1x8x4xbf16> to vector<8x4xbf16>
    %58 = vector.extract_strided_slice %15 {offsets = [0, 96], sizes = [4, 432], strides = [1, 1]} : vector<4x576xbf16> to vector<4x432xbf16>
    %cst_36 = arith.constant dense<0.000000e+00> : vector<8x432xf32>
    %59 = tpu.matmul %57, %58, %cst_36 {dimension_numbers = #tpu.dot_dimension_numbers<[1], [0], [0], [1], [0, 0, 1, 1], [], []>} : vector<8x4xbf16>, vector<4x432xbf16>, vector<8x432xf32> -> vector<8x432xf32>
    %60 = arith.addf %55, %59 : vector<8x432xf32>
    %c8 = arith.constant 8 : index
    %c0_37 = arith.constant 0 : index
    %c0_38 = arith.constant 0 : index
    %61 = vector.load %arg6[%c8, %c0_37, %c0_38] : memref<9x8x4xbf16, #tpu.memory_space<vmem>>, vector<1x8x4xbf16>
    %62 = vector.shape_cast %61 : vector<1x8x4xbf16> to vector<8x4xbf16>
    %63 = vector.extract_strided_slice %15 {offsets = [0, 97], sizes = [4, 432], strides = [1, 1]} : vector<4x576xbf16> to vector<4x432xbf16>
    %cst_39 = arith.constant dense<0.000000e+00> : vector<8x432xf32>
    %64 = tpu.matmul %62, %63, %cst_39 {dimension_numbers = #tpu.dot_dimension_numbers<[1], [0], [0], [1], [0, 0, 1, 1], [], []>} : vector<8x4xbf16>, vector<4x432xbf16>, vector<8x432xf32> -> vector<8x432xf32>
    %65 = arith.addf %60, %64 : vector<8x432xf32>
    %c0_40 = arith.constant 0 : index
    %c0_41 = arith.constant 0 : index
    %66 = vector.load %arg7[%c0_40, %c0_41] : memref<8x1xf32, #tpu.memory_space<vmem>>, vector<8x1xf32>
    %67 = vector.broadcast %66 : vector<8x1xf32> to vector<8x432xf32>
    %68 = arith.addf %65, %67 : vector<8x432xf32>
    %cst_42 = arith.constant 0.000000e+00 : f32
    %69 = vector.broadcast %cst_42 : f32 to vector<8x432xf32>
    %70 = arith.maximumf %68, %69 : vector<8x432xf32>
    %cst_43 = arith.constant 0.000000e+00 : f32
    %71 = vector.broadcast %cst_43 : f32 to vector<8x432xf32>
    %c0_44 = arith.constant 0 : index
    %c0_45 = arith.constant 0 : index
    %c0_46 = arith.constant 0 : index
    %72 = vector.load %arg8[%c0_44, %c0_45, %c0_46] : memref<25x8x4xbf16, #tpu.memory_space<vmem>>, vector<1x8x4xbf16>
    %73 = vector.shape_cast %72 : vector<1x8x4xbf16> to vector<8x4xbf16>
    %74 = vector.extract_strided_slice %19 {offsets = [0, 22], sizes = [4, 432], strides = [1, 1]} : vector<4x576xbf16> to vector<4x432xbf16>
    %cst_47 = arith.constant dense<0.000000e+00> : vector<8x432xf32>
    %75 = tpu.matmul %73, %74, %cst_47 {dimension_numbers = #tpu.dot_dimension_numbers<[1], [0], [0], [1], [0, 0, 1, 1], [], []>} : vector<8x4xbf16>, vector<4x432xbf16>, vector<8x432xf32> -> vector<8x432xf32>
    %76 = arith.addf %71, %75 : vector<8x432xf32>
    %c1_48 = arith.constant 1 : index
    %c0_49 = arith.constant 0 : index
    %c0_50 = arith.constant 0 : index
    %77 = vector.load %arg8[%c1_48, %c0_49, %c0_50] : memref<25x8x4xbf16, #tpu.memory_space<vmem>>, vector<1x8x4xbf16>
    %78 = vector.shape_cast %77 : vector<1x8x4xbf16> to vector<8x4xbf16>
    %79 = vector.extract_strided_slice %19 {offsets = [0, 23], sizes = [4, 432], strides = [1, 1]} : vector<4x576xbf16> to vector<4x432xbf16>
    %cst_51 = arith.constant dense<0.000000e+00> : vector<8x432xf32>
    %80 = tpu.matmul %78, %79, %cst_51 {dimension_numbers = #tpu.dot_dimension_numbers<[1], [0], [0], [1], [0, 0, 1, 1], [], []>} : vector<8x4xbf16>, vector<4x432xbf16>, vector<8x432xf32> -> vector<8x432xf32>
    %81 = arith.addf %76, %80 : vector<8x432xf32>
    %c2_52 = arith.constant 2 : index
    %c0_53 = arith.constant 0 : index
    %c0_54 = arith.constant 0 : index
    %82 = vector.load %arg8[%c2_52, %c0_53, %c0_54] : memref<25x8x4xbf16, #tpu.memory_space<vmem>>, vector<1x8x4xbf16>
    %83 = vector.shape_cast %82 : vector<1x8x4xbf16> to vector<8x4xbf16>
    %84 = vector.extract_strided_slice %19 {offsets = [0, 24], sizes = [4, 432], strides = [1, 1]} : vector<4x576xbf16> to vector<4x432xbf16>
    %cst_55 = arith.constant dense<0.000000e+00> : vector<8x432xf32>
    %85 = tpu.matmul %83, %84, %cst_55 {dimension_numbers = #tpu.dot_dimension_numbers<[1], [0], [0], [1], [0, 0, 1, 1], [], []>} : vector<8x4xbf16>, vector<4x432xbf16>, vector<8x432xf32> -> vector<8x432xf32>
    %86 = arith.addf %81, %85 : vector<8x432xf32>
    %c3_56 = arith.constant 3 : index
    %c0_57 = arith.constant 0 : index
    %c0_58 = arith.constant 0 : index
    %87 = vector.load %arg8[%c3_56, %c0_57, %c0_58] : memref<25x8x4xbf16, #tpu.memory_space<vmem>>, vector<1x8x4xbf16>
    %88 = vector.shape_cast %87 : vector<1x8x4xbf16> to vector<8x4xbf16>
    %89 = vector.extract_strided_slice %19 {offsets = [0, 25], sizes = [4, 432], strides = [1, 1]} : vector<4x576xbf16> to vector<4x432xbf16>
    %cst_59 = arith.constant dense<0.000000e+00> : vector<8x432xf32>
    %90 = tpu.matmul %88, %89, %cst_59 {dimension_numbers = #tpu.dot_dimension_numbers<[1], [0], [0], [1], [0, 0, 1, 1], [], []>} : vector<8x4xbf16>, vector<4x432xbf16>, vector<8x432xf32> -> vector<8x432xf32>
    %91 = arith.addf %86, %90 : vector<8x432xf32>
    %c4_60 = arith.constant 4 : index
    %c0_61 = arith.constant 0 : index
    %c0_62 = arith.constant 0 : index
    %92 = vector.load %arg8[%c4_60, %c0_61, %c0_62] : memref<25x8x4xbf16, #tpu.memory_space<vmem>>, vector<1x8x4xbf16>
    %93 = vector.shape_cast %92 : vector<1x8x4xbf16> to vector<8x4xbf16>
    %94 = vector.extract_strided_slice %19 {offsets = [0, 26], sizes = [4, 432], strides = [1, 1]} : vector<4x576xbf16> to vector<4x432xbf16>
    %cst_63 = arith.constant dense<0.000000e+00> : vector<8x432xf32>
    %95 = tpu.matmul %93, %94, %cst_63 {dimension_numbers = #tpu.dot_dimension_numbers<[1], [0], [0], [1], [0, 0, 1, 1], [], []>} : vector<8x4xbf16>, vector<4x432xbf16>, vector<8x432xf32> -> vector<8x432xf32>
    %96 = arith.addf %91, %95 : vector<8x432xf32>
    %c5_64 = arith.constant 5 : index
    %c0_65 = arith.constant 0 : index
    %c0_66 = arith.constant 0 : index
    %97 = vector.load %arg8[%c5_64, %c0_65, %c0_66] : memref<25x8x4xbf16, #tpu.memory_space<vmem>>, vector<1x8x4xbf16>
    %98 = vector.shape_cast %97 : vector<1x8x4xbf16> to vector<8x4xbf16>
    %99 = vector.extract_strided_slice %19 {offsets = [0, 46], sizes = [4, 432], strides = [1, 1]} : vector<4x576xbf16> to vector<4x432xbf16>
    %cst_67 = arith.constant dense<0.000000e+00> : vector<8x432xf32>
    %100 = tpu.matmul %98, %99, %cst_67 {dimension_numbers = #tpu.dot_dimension_numbers<[1], [0], [0], [1], [0, 0, 1, 1], [], []>} : vector<8x4xbf16>, vector<4x432xbf16>, vector<8x432xf32> -> vector<8x432xf32>
    %101 = arith.addf %96, %100 : vector<8x432xf32>
    %c6_68 = arith.constant 6 : index
    %c0_69 = arith.constant 0 : index
    %c0_70 = arith.constant 0 : index
    %102 = vector.load %arg8[%c6_68, %c0_69, %c0_70] : memref<25x8x4xbf16, #tpu.memory_space<vmem>>, vector<1x8x4xbf16>
    %103 = vector.shape_cast %102 : vector<1x8x4xbf16> to vector<8x4xbf16>
    %104 = vector.extract_strided_slice %19 {offsets = [0, 47], sizes = [4, 432], strides = [1, 1]} : vector<4x576xbf16> to vector<4x432xbf16>
    %cst_71 = arith.constant dense<0.000000e+00> : vector<8x432xf32>
    %105 = tpu.matmul %103, %104, %cst_71 {dimension_numbers = #tpu.dot_dimension_numbers<[1], [0], [0], [1], [0, 0, 1, 1], [], []>} : vector<8x4xbf16>, vector<4x432xbf16>, vector<8x432xf32> -> vector<8x432xf32>
    %106 = arith.addf %101, %105 : vector<8x432xf32>
    %c7_72 = arith.constant 7 : index
    %c0_73 = arith.constant 0 : index
    %c0_74 = arith.constant 0 : index
    %107 = vector.load %arg8[%c7_72, %c0_73, %c0_74] : memref<25x8x4xbf16, #tpu.memory_space<vmem>>, vector<1x8x4xbf16>
    %108 = vector.shape_cast %107 : vector<1x8x4xbf16> to vector<8x4xbf16>
    %109 = vector.extract_strided_slice %19 {offsets = [0, 48], sizes = [4, 432], strides = [1, 1]} : vector<4x576xbf16> to vector<4x432xbf16>
    %cst_75 = arith.constant dense<0.000000e+00> : vector<8x432xf32>
    %110 = tpu.matmul %108, %109, %cst_75 {dimension_numbers = #tpu.dot_dimension_numbers<[1], [0], [0], [1], [0, 0, 1, 1], [], []>} : vector<8x4xbf16>, vector<4x432xbf16>, vector<8x432xf32> -> vector<8x432xf32>
    %111 = arith.addf %106, %110 : vector<8x432xf32>
    %c8_76 = arith.constant 8 : index
    %c0_77 = arith.constant 0 : index
    %c0_78 = arith.constant 0 : index
    %112 = vector.load %arg8[%c8_76, %c0_77, %c0_78] : memref<25x8x4xbf16, #tpu.memory_space<vmem>>, vector<1x8x4xbf16>
    %113 = vector.shape_cast %112 : vector<1x8x4xbf16> to vector<8x4xbf16>
    %114 = vector.extract_strided_slice %19 {offsets = [0, 49], sizes = [4, 432], strides = [1, 1]} : vector<4x576xbf16> to vector<4x432xbf16>
    %cst_79 = arith.constant dense<0.000000e+00> : vector<8x432xf32>
    %115 = tpu.matmul %113, %114, %cst_79 {dimension_numbers = #tpu.dot_dimension_numbers<[1], [0], [0], [1], [0, 0, 1, 1], [], []>} : vector<8x4xbf16>, vector<4x432xbf16>, vector<8x432xf32> -> vector<8x432xf32>
    %116 = arith.addf %111, %115 : vector<8x432xf32>
    %c9 = arith.constant 9 : index
    %c0_80 = arith.constant 0 : index
    %c0_81 = arith.constant 0 : index
    %117 = vector.load %arg8[%c9, %c0_80, %c0_81] : memref<25x8x4xbf16, #tpu.memory_space<vmem>>, vector<1x8x4xbf16>
    %118 = vector.shape_cast %117 : vector<1x8x4xbf16> to vector<8x4xbf16>
    %119 = vector.extract_strided_slice %19 {offsets = [0, 50], sizes = [4, 432], strides = [1, 1]} : vector<4x576xbf16> to vector<4x432xbf16>
    %cst_82 = arith.constant dense<0.000000e+00> : vector<8x432xf32>
    %120 = tpu.matmul %118, %119, %cst_82 {dimension_numbers = #tpu.dot_dimension_numbers<[1], [0], [0], [1], [0, 0, 1, 1], [], []>} : vector<8x4xbf16>, vector<4x432xbf16>, vector<8x432xf32> -> vector<8x432xf32>
    %121 = arith.addf %116, %120 : vector<8x432xf32>
    %c10 = arith.constant 10 : index
    %c0_83 = arith.constant 0 : index
    %c0_84 = arith.constant 0 : index
    %122 = vector.load %arg8[%c10, %c0_83, %c0_84] : memref<25x8x4xbf16, #tpu.memory_space<vmem>>, vector<1x8x4xbf16>
    %123 = vector.shape_cast %122 : vector<1x8x4xbf16> to vector<8x4xbf16>
    %124 = vector.extract_strided_slice %19 {offsets = [0, 70], sizes = [4, 432], strides = [1, 1]} : vector<4x576xbf16> to vector<4x432xbf16>
    %cst_85 = arith.constant dense<0.000000e+00> : vector<8x432xf32>
    %125 = tpu.matmul %123, %124, %cst_85 {dimension_numbers = #tpu.dot_dimension_numbers<[1], [0], [0], [1], [0, 0, 1, 1], [], []>} : vector<8x4xbf16>, vector<4x432xbf16>, vector<8x432xf32> -> vector<8x432xf32>
    %126 = arith.addf %121, %125 : vector<8x432xf32>
    %c11 = arith.constant 11 : index
    %c0_86 = arith.constant 0 : index
    %c0_87 = arith.constant 0 : index
    %127 = vector.load %arg8[%c11, %c0_86, %c0_87] : memref<25x8x4xbf16, #tpu.memory_space<vmem>>, vector<1x8x4xbf16>
    %128 = vector.shape_cast %127 : vector<1x8x4xbf16> to vector<8x4xbf16>
    %129 = vector.extract_strided_slice %19 {offsets = [0, 71], sizes = [4, 432], strides = [1, 1]} : vector<4x576xbf16> to vector<4x432xbf16>
    %cst_88 = arith.constant dense<0.000000e+00> : vector<8x432xf32>
    %130 = tpu.matmul %128, %129, %cst_88 {dimension_numbers = #tpu.dot_dimension_numbers<[1], [0], [0], [1], [0, 0, 1, 1], [], []>} : vector<8x4xbf16>, vector<4x432xbf16>, vector<8x432xf32> -> vector<8x432xf32>
    %131 = arith.addf %126, %130 : vector<8x432xf32>
    %c12 = arith.constant 12 : index
    %c0_89 = arith.constant 0 : index
    %c0_90 = arith.constant 0 : index
    %132 = vector.load %arg8[%c12, %c0_89, %c0_90] : memref<25x8x4xbf16, #tpu.memory_space<vmem>>, vector<1x8x4xbf16>
    %133 = vector.shape_cast %132 : vector<1x8x4xbf16> to vector<8x4xbf16>
    %134 = vector.extract_strided_slice %19 {offsets = [0, 72], sizes = [4, 432], strides = [1, 1]} : vector<4x576xbf16> to vector<4x432xbf16>
    %cst_91 = arith.constant dense<0.000000e+00> : vector<8x432xf32>
    %135 = tpu.matmul %133, %134, %cst_91 {dimension_numbers = #tpu.dot_dimension_numbers<[1], [0], [0], [1], [0, 0, 1, 1], [], []>} : vector<8x4xbf16>, vector<4x432xbf16>, vector<8x432xf32> -> vector<8x432xf32>
    %136 = arith.addf %131, %135 : vector<8x432xf32>
    %c13 = arith.constant 13 : index
    %c0_92 = arith.constant 0 : index
    %c0_93 = arith.constant 0 : index
    %137 = vector.load %arg8[%c13, %c0_92, %c0_93] : memref<25x8x4xbf16, #tpu.memory_space<vmem>>, vector<1x8x4xbf16>
    %138 = vector.shape_cast %137 : vector<1x8x4xbf16> to vector<8x4xbf16>
    %139 = vector.extract_strided_slice %19 {offsets = [0, 73], sizes = [4, 432], strides = [1, 1]} : vector<4x576xbf16> to vector<4x432xbf16>
    %cst_94 = arith.constant dense<0.000000e+00> : vector<8x432xf32>
    %140 = tpu.matmul %138, %139, %cst_94 {dimension_numbers = #tpu.dot_dimension_numbers<[1], [0], [0], [1], [0, 0, 1, 1], [], []>} : vector<8x4xbf16>, vector<4x432xbf16>, vector<8x432xf32> -> vector<8x432xf32>
    %141 = arith.addf %136, %140 : vector<8x432xf32>
    %c14 = arith.constant 14 : index
    %c0_95 = arith.constant 0 : index
    %c0_96 = arith.constant 0 : index
    %142 = vector.load %arg8[%c14, %c0_95, %c0_96] : memref<25x8x4xbf16, #tpu.memory_space<vmem>>, vector<1x8x4xbf16>
    %143 = vector.shape_cast %142 : vector<1x8x4xbf16> to vector<8x4xbf16>
    %144 = vector.extract_strided_slice %19 {offsets = [0, 74], sizes = [4, 432], strides = [1, 1]} : vector<4x576xbf16> to vector<4x432xbf16>
    %cst_97 = arith.constant dense<0.000000e+00> : vector<8x432xf32>
    %145 = tpu.matmul %143, %144, %cst_97 {dimension_numbers = #tpu.dot_dimension_numbers<[1], [0], [0], [1], [0, 0, 1, 1], [], []>} : vector<8x4xbf16>, vector<4x432xbf16>, vector<8x432xf32> -> vector<8x432xf32>
    %146 = arith.addf %141, %145 : vector<8x432xf32>
    %c15 = arith.constant 15 : index
    %c0_98 = arith.constant 0 : index
    %c0_99 = arith.constant 0 : index
    %147 = vector.load %arg8[%c15, %c0_98, %c0_99] : memref<25x8x4xbf16, #tpu.memory_space<vmem>>, vector<1x8x4xbf16>
    %148 = vector.shape_cast %147 : vector<1x8x4xbf16> to vector<8x4xbf16>
    %149 = vector.extract_strided_slice %19 {offsets = [0, 94], sizes = [4, 432], strides = [1, 1]} : vector<4x576xbf16> to vector<4x432xbf16>
    %cst_100 = arith.constant dense<0.000000e+00> : vector<8x432xf32>
    %150 = tpu.matmul %148, %149, %cst_100 {dimension_numbers = #tpu.dot_dimension_numbers<[1], [0], [0], [1], [0, 0, 1, 1], [], []>} : vector<8x4xbf16>, vector<4x432xbf16>, vector<8x432xf32> -> vector<8x432xf32>
    %151 = arith.addf %146, %150 : vector<8x432xf32>
    %c16 = arith.constant 16 : index
    %c0_101 = arith.constant 0 : index
    %c0_102 = arith.constant 0 : index
    %152 = vector.load %arg8[%c16, %c0_101, %c0_102] : memref<25x8x4xbf16, #tpu.memory_space<vmem>>, vector<1x8x4xbf16>
    %153 = vector.shape_cast %152 : vector<1x8x4xbf16> to vector<8x4xbf16>
    %154 = vector.extract_strided_slice %19 {offsets = [0, 95], sizes = [4, 432], strides = [1, 1]} : vector<4x576xbf16> to vector<4x432xbf16>
    %cst_103 = arith.constant dense<0.000000e+00> : vector<8x432xf32>
    %155 = tpu.matmul %153, %154, %cst_103 {dimension_numbers = #tpu.dot_dimension_numbers<[1], [0], [0], [1], [0, 0, 1, 1], [], []>} : vector<8x4xbf16>, vector<4x432xbf16>, vector<8x432xf32> -> vector<8x432xf32>
    %156 = arith.addf %151, %155 : vector<8x432xf32>
    %c17 = arith.constant 17 : index
    %c0_104 = arith.constant 0 : index
    %c0_105 = arith.constant 0 : index
    %157 = vector.load %arg8[%c17, %c0_104, %c0_105] : memref<25x8x4xbf16, #tpu.memory_space<vmem>>, vector<1x8x4xbf16>
    %158 = vector.shape_cast %157 : vector<1x8x4xbf16> to vector<8x4xbf16>
    %159 = vector.extract_strided_slice %19 {offsets = [0, 96], sizes = [4, 432], strides = [1, 1]} : vector<4x576xbf16> to vector<4x432xbf16>
    %cst_106 = arith.constant dense<0.000000e+00> : vector<8x432xf32>
    %160 = tpu.matmul %158, %159, %cst_106 {dimension_numbers = #tpu.dot_dimension_numbers<[1], [0], [0], [1], [0, 0, 1, 1], [], []>} : vector<8x4xbf16>, vector<4x432xbf16>, vector<8x432xf32> -> vector<8x432xf32>
    %161 = arith.addf %156, %160 : vector<8x432xf32>
    %c18 = arith.constant 18 : index
    %c0_107 = arith.constant 0 : index
    %c0_108 = arith.constant 0 : index
    %162 = vector.load %arg8[%c18, %c0_107, %c0_108] : memref<25x8x4xbf16, #tpu.memory_space<vmem>>, vector<1x8x4xbf16>
    %163 = vector.shape_cast %162 : vector<1x8x4xbf16> to vector<8x4xbf16>
    %164 = vector.extract_strided_slice %19 {offsets = [0, 97], sizes = [4, 432], strides = [1, 1]} : vector<4x576xbf16> to vector<4x432xbf16>
    %cst_109 = arith.constant dense<0.000000e+00> : vector<8x432xf32>
    %165 = tpu.matmul %163, %164, %cst_109 {dimension_numbers = #tpu.dot_dimension_numbers<[1], [0], [0], [1], [0, 0, 1, 1], [], []>} : vector<8x4xbf16>, vector<4x432xbf16>, vector<8x432xf32> -> vector<8x432xf32>
    %166 = arith.addf %161, %165 : vector<8x432xf32>
    %c19 = arith.constant 19 : index
    %c0_110 = arith.constant 0 : index
    %c0_111 = arith.constant 0 : index
    %167 = vector.load %arg8[%c19, %c0_110, %c0_111] : memref<25x8x4xbf16, #tpu.memory_space<vmem>>, vector<1x8x4xbf16>
    %168 = vector.shape_cast %167 : vector<1x8x4xbf16> to vector<8x4xbf16>
    %169 = vector.extract_strided_slice %19 {offsets = [0, 98], sizes = [4, 432], strides = [1, 1]} : vector<4x576xbf16> to vector<4x432xbf16>
    %cst_112 = arith.constant dense<0.000000e+00> : vector<8x432xf32>
    %170 = tpu.matmul %168, %169, %cst_112 {dimension_numbers = #tpu.dot_dimension_numbers<[1], [0], [0], [1], [0, 0, 1, 1], [], []>} : vector<8x4xbf16>, vector<4x432xbf16>, vector<8x432xf32> -> vector<8x432xf32>
    %171 = arith.addf %166, %170 : vector<8x432xf32>
    %c20 = arith.constant 20 : index
    %c0_113 = arith.constant 0 : index
    %c0_114 = arith.constant 0 : index
    %172 = vector.load %arg8[%c20, %c0_113, %c0_114] : memref<25x8x4xbf16, #tpu.memory_space<vmem>>, vector<1x8x4xbf16>
    %173 = vector.shape_cast %172 : vector<1x8x4xbf16> to vector<8x4xbf16>
    %174 = vector.extract_strided_slice %19 {offsets = [0, 118], sizes = [4, 432], strides = [1, 1]} : vector<4x576xbf16> to vector<4x432xbf16>
    %cst_115 = arith.constant dense<0.000000e+00> : vector<8x432xf32>
    %175 = tpu.matmul %173, %174, %cst_115 {dimension_numbers = #tpu.dot_dimension_numbers<[1], [0], [0], [1], [0, 0, 1, 1], [], []>} : vector<8x4xbf16>, vector<4x432xbf16>, vector<8x432xf32> -> vector<8x432xf32>
    %176 = arith.addf %171, %175 : vector<8x432xf32>
    %c21 = arith.constant 21 : index
    %c0_116 = arith.constant 0 : index
    %c0_117 = arith.constant 0 : index
    %177 = vector.load %arg8[%c21, %c0_116, %c0_117] : memref<25x8x4xbf16, #tpu.memory_space<vmem>>, vector<1x8x4xbf16>
    %178 = vector.shape_cast %177 : vector<1x8x4xbf16> to vector<8x4xbf16>
    %179 = vector.extract_strided_slice %19 {offsets = [0, 119], sizes = [4, 432], strides = [1, 1]} : vector<4x576xbf16> to vector<4x432xbf16>
    %cst_118 = arith.constant dense<0.000000e+00> : vector<8x432xf32>
    %180 = tpu.matmul %178, %179, %cst_118 {dimension_numbers = #tpu.dot_dimension_numbers<[1], [0], [0], [1], [0, 0, 1, 1], [], []>} : vector<8x4xbf16>, vector<4x432xbf16>, vector<8x432xf32> -> vector<8x432xf32>
    %181 = arith.addf %176, %180 : vector<8x432xf32>
    %c22 = arith.constant 22 : index
    %c0_119 = arith.constant 0 : index
    %c0_120 = arith.constant 0 : index
    %182 = vector.load %arg8[%c22, %c0_119, %c0_120] : memref<25x8x4xbf16, #tpu.memory_space<vmem>>, vector<1x8x4xbf16>
    %183 = vector.shape_cast %182 : vector<1x8x4xbf16> to vector<8x4xbf16>
    %184 = vector.extract_strided_slice %19 {offsets = [0, 120], sizes = [4, 432], strides = [1, 1]} : vector<4x576xbf16> to vector<4x432xbf16>
    %cst_121 = arith.constant dense<0.000000e+00> : vector<8x432xf32>
    %185 = tpu.matmul %183, %184, %cst_121 {dimension_numbers = #tpu.dot_dimension_numbers<[1], [0], [0], [1], [0, 0, 1, 1], [], []>} : vector<8x4xbf16>, vector<4x432xbf16>, vector<8x432xf32> -> vector<8x432xf32>
    %186 = arith.addf %181, %185 : vector<8x432xf32>
    %c23 = arith.constant 23 : index
    %c0_122 = arith.constant 0 : index
    %c0_123 = arith.constant 0 : index
    %187 = vector.load %arg8[%c23, %c0_122, %c0_123] : memref<25x8x4xbf16, #tpu.memory_space<vmem>>, vector<1x8x4xbf16>
    %188 = vector.shape_cast %187 : vector<1x8x4xbf16> to vector<8x4xbf16>
    %189 = vector.extract_strided_slice %19 {offsets = [0, 121], sizes = [4, 432], strides = [1, 1]} : vector<4x576xbf16> to vector<4x432xbf16>
    %cst_124 = arith.constant dense<0.000000e+00> : vector<8x432xf32>
    %190 = tpu.matmul %188, %189, %cst_124 {dimension_numbers = #tpu.dot_dimension_numbers<[1], [0], [0], [1], [0, 0, 1, 1], [], []>} : vector<8x4xbf16>, vector<4x432xbf16>, vector<8x432xf32> -> vector<8x432xf32>
    %191 = arith.addf %186, %190 : vector<8x432xf32>
    %c24 = arith.constant 24 : index
    %c0_125 = arith.constant 0 : index
    %c0_126 = arith.constant 0 : index
    %192 = vector.load %arg8[%c24, %c0_125, %c0_126] : memref<25x8x4xbf16, #tpu.memory_space<vmem>>, vector<1x8x4xbf16>
    %193 = vector.shape_cast %192 : vector<1x8x4xbf16> to vector<8x4xbf16>
    %194 = vector.extract_strided_slice %19 {offsets = [0, 122], sizes = [4, 432], strides = [1, 1]} : vector<4x576xbf16> to vector<4x432xbf16>
    %cst_127 = arith.constant dense<0.000000e+00> : vector<8x432xf32>
    %195 = tpu.matmul %193, %194, %cst_127 {dimension_numbers = #tpu.dot_dimension_numbers<[1], [0], [0], [1], [0, 0, 1, 1], [], []>} : vector<8x4xbf16>, vector<4x432xbf16>, vector<8x432xf32> -> vector<8x432xf32>
    %196 = arith.addf %191, %195 : vector<8x432xf32>
    %c0_128 = arith.constant 0 : index
    %c0_129 = arith.constant 0 : index
    %197 = vector.load %arg9[%c0_128, %c0_129] : memref<8x1xf32, #tpu.memory_space<vmem>>, vector<8x1xf32>
    %198 = vector.broadcast %197 : vector<8x1xf32> to vector<8x432xf32>
    %199 = arith.addf %196, %198 : vector<8x432xf32>
    %cst_130 = arith.constant 0.000000e+00 : f32
    %200 = vector.broadcast %cst_130 : f32 to vector<8x432xf32>
    %201 = arith.maximumf %199, %200 : vector<8x432xf32>
    %202 = arith.extf %1 : vector<4x576xbf16> to vector<4x576xf32>
    %cst_131 = arith.constant 0.000000e+00 : f32
    %203 = vector.broadcast %cst_131 : f32 to vector<1x576xf32>
    %204 = arith.cmpf ogt, %3, %203 : vector<1x576xf32>
    %cst_132 = arith.constant 0xFF800000 : f32
    %205 = vector.shape_cast %204 : vector<1x576xi1> to vector<1x576xi1>
    %206 = vector.broadcast %205 : vector<1x576xi1> to vector<4x576xi1>
    %207 = vector.broadcast %cst_132 : f32 to vector<4x576xf32>
    %208 = arith.select %206, %202, %207 : vector<4x576xi1>, vector<4x576xf32>
    %209 = vector.extract_strided_slice %208 {offsets = [0, 47], sizes = [4, 432], strides = [1, 1]} : vector<4x576xf32> to vector<4x432xf32>
    %210 = vector.extract_strided_slice %208 {offsets = [0, 48], sizes = [4, 432], strides = [1, 1]} : vector<4x576xf32> to vector<4x432xf32>
    %211 = arith.maximumf %209, %210 : vector<4x432xf32>
    %212 = vector.extract_strided_slice %208 {offsets = [0, 49], sizes = [4, 432], strides = [1, 1]} : vector<4x576xf32> to vector<4x432xf32>
    %213 = arith.maximumf %211, %212 : vector<4x432xf32>
    %214 = vector.extract_strided_slice %208 {offsets = [0, 71], sizes = [4, 432], strides = [1, 1]} : vector<4x576xf32> to vector<4x432xf32>
    %215 = arith.maximumf %213, %214 : vector<4x432xf32>
    %216 = vector.extract_strided_slice %208 {offsets = [0, 72], sizes = [4, 432], strides = [1, 1]} : vector<4x576xf32> to vector<4x432xf32>
    %217 = arith.maximumf %215, %216 : vector<4x432xf32>
    %218 = vector.extract_strided_slice %208 {offsets = [0, 73], sizes = [4, 432], strides = [1, 1]} : vector<4x576xf32> to vector<4x432xf32>
    %219 = arith.maximumf %217, %218 : vector<4x432xf32>
    %220 = vector.extract_strided_slice %208 {offsets = [0, 95], sizes = [4, 432], strides = [1, 1]} : vector<4x576xf32> to vector<4x432xf32>
    %221 = arith.maximumf %219, %220 : vector<4x432xf32>
    %222 = vector.extract_strided_slice %208 {offsets = [0, 96], sizes = [4, 432], strides = [1, 1]} : vector<4x576xf32> to vector<4x432xf32>
    %223 = arith.maximumf %221, %222 : vector<4x432xf32>
    %224 = vector.extract_strided_slice %208 {offsets = [0, 97], sizes = [4, 432], strides = [1, 1]} : vector<4x576xf32> to vector<4x432xf32>
    %225 = arith.maximumf %223, %224 : vector<4x432xf32>
    %226 = vector.extract_strided_slice %3 {offsets = [0, 72], sizes = [1, 432], strides = [1, 1]} : vector<1x576xf32> to vector<1x432xf32>
    %cst_133 = arith.constant 0.000000e+00 : f32
    %227 = vector.broadcast %cst_133 : f32 to vector<1x432xf32>
    %228 = arith.cmpf ogt, %226, %227 : vector<1x432xf32>
    %cst_134 = arith.constant 0.000000e+00 : f32
    %229 = vector.shape_cast %228 : vector<1x432xi1> to vector<1x432xi1>
    %230 = vector.broadcast %229 : vector<1x432xi1> to vector<4x432xi1>
    %231 = vector.broadcast %cst_134 : f32 to vector<4x432xf32>
    %232 = arith.select %230, %225, %231 : vector<4x432xi1>, vector<4x432xf32>
    %233 = arith.truncf %232 : vector<4x432xf32> to vector<4x432xbf16>
    %c0_135 = arith.constant 0 : index
    %c0_136 = arith.constant 0 : index
    %234 = vector.load %arg10[%c0_135, %c0_136] : memref<4x4xbf16, #tpu.memory_space<vmem>>, vector<4x4xbf16>
    %cst_137 = arith.constant dense<0.000000e+00> : vector<4x432xf32>
    %235 = tpu.matmul %234, %233, %cst_137 {dimension_numbers = #tpu.dot_dimension_numbers<[1], [0], [0], [1], [0, 0, 1, 1], [], []>} : vector<4x4xbf16>, vector<4x432xbf16>, vector<4x432xf32> -> vector<4x432xf32>
    %c0_138 = arith.constant 0 : index
    %c0_139 = arith.constant 0 : index
    %236 = vector.load %arg11[%c0_138, %c0_139] : memref<4x1xf32, #tpu.memory_space<vmem>>, vector<4x1xf32>
    %237 = vector.broadcast %236 : vector<4x1xf32> to vector<4x432xf32>
    %238 = arith.addf %235, %237 : vector<4x432xf32>
    %cst_140 = arith.constant 0.000000e+00 : f32
    %239 = vector.broadcast %cst_140 : f32 to vector<4x432xf32>
    %240 = arith.maximumf %238, %239 : vector<4x432xf32>
    %c0_141 = arith.constant 0 : index
    %c0_142 = arith.constant 0 : index
    %c0_143 = arith.constant 0 : index
    %241 = vector.load %arg12[%c0_141, %c0_142, %c0_143] : memref<1x24x432xf32, #tpu.memory_space<vmem>>, vector<1x4x432xf32>
    %242 = vector.shape_cast %241 : vector<1x4x432xf32> to vector<4x432xf32>
    %243 = vector.shape_cast %11 : vector<4x432xf32> to vector<1x4x432xf32>
    tpu.vector_store %arg12[%c0_141, %c0_142, %c0_143], %243 {strides = array<i32>} : memref<1x24x432xf32, #tpu.memory_space<vmem>>, vector<1x4x432xf32>,
    %c0_144 = arith.constant 0 : index
    %c4_145 = arith.constant 4 : index
    %c0_146 = arith.constant 0 : index
    %244 = vector.load %arg12[%c0_144, %c4_145, %c0_146] : memref<1x24x432xf32, #tpu.memory_space<vmem>>, vector<1x8x432xf32>
    %245 = vector.shape_cast %244 : vector<1x8x432xf32> to vector<8x432xf32>
    %246 = vector.shape_cast %70 : vector<8x432xf32> to vector<1x8x432xf32>
    tpu.vector_store %arg12[%c0_144, %c4_145, %c0_146], %246 {strides = array<i32>} : memref<1x24x432xf32, #tpu.memory_space<vmem>>, vector<1x8x432xf32>,
    %c0_147 = arith.constant 0 : index
    %c12_148 = arith.constant 12 : index
    %c0_149 = arith.constant 0 : index
    %247 = vector.load %arg12[%c0_147, %c12_148, %c0_149] : memref<1x24x432xf32, #tpu.memory_space<vmem>>, vector<1x8x432xf32>
    %248 = vector.shape_cast %247 : vector<1x8x432xf32> to vector<8x432xf32>
    %249 = vector.shape_cast %201 : vector<8x432xf32> to vector<1x8x432xf32>
    tpu.vector_store %arg12[%c0_147, %c12_148, %c0_149], %249 {strides = array<i32>} : memref<1x24x432xf32, #tpu.memory_space<vmem>>, vector<1x8x432xf32>,
    %c0_150 = arith.constant 0 : index
    %c20_151 = arith.constant 20 : index
    %c0_152 = arith.constant 0 : index
    %250 = vector.load %arg12[%c0_150, %c20_151, %c0_152] : memref<1x24x432xf32, #tpu.memory_space<vmem>>, vector<1x4x432xf32>
    %251 = vector.shape_cast %250 : vector<1x4x432xf32> to vector<4x432xf32>
    %252 = vector.shape_cast %240 : vector<4x432xf32> to vector<1x4x432xf32>
    tpu.vector_store %arg12[%c0_150, %c20_151, %c0_152], %252 {strides = array<i32>} : memref<1x24x432xf32, #tpu.memory_space<vmem>>, vector<1x4x432xf32>,
    return
  }
  func.func @transform_0(%arg0: i32) -> (i32, i32, i32) {
    %c0_i32 = arith.constant 0 : i32
    %c0_i32_0 = arith.constant 0 : i32
    %c0_i32_1 = arith.constant 0 : i32
    return %arg0, %c0_i32, %c0_i32_0 : i32, i32, i32
  }
  func.func @transform_1(%arg0: i32) -> (i32, i32) {
    %c0_i32 = arith.constant 0 : i32
    %c0_i32_0 = arith.constant 0 : i32
    %c0_i32_1 = arith.constant 0 : i32
    return %c0_i32, %c0_i32_0 : i32, i32
  }
  func.func @transform_2(%arg0: i32) -> (i32, i32) {
    %c0_i32 = arith.constant 0 : i32
    %c0_i32_0 = arith.constant 0 : i32
    %c0_i32_1 = arith.constant 0 : i32
    return %c0_i32, %c0_i32_0 : i32, i32
  }
  func.func @transform_3(%arg0: i32) -> (i32, i32) {
    %c0_i32 = arith.constant 0 : i32
    %c0_i32_0 = arith.constant 0 : i32
    %c0_i32_1 = arith.constant 0 : i32
    return %c0_i32, %c0_i32_0 : i32, i32
  }
  func.func @transform_4(%arg0: i32) -> (i32, i32) {
    %c0_i32 = arith.constant 0 : i32
    %c0_i32_0 = arith.constant 0 : i32
    %c0_i32_1 = arith.constant 0 : i32
    return %c0_i32, %c0_i32_0 : i32, i32
  }
  func.func @transform_5(%arg0: i32) -> (i32, i32, i32) {
    %c0_i32 = arith.constant 0 : i32
    %c0_i32_0 = arith.constant 0 : i32
    %c0_i32_1 = arith.constant 0 : i32
    %c0_i32_2 = arith.constant 0 : i32
    return %c0_i32, %c0_i32_0, %c0_i32_1 : i32, i32, i32
  }
  func.func @transform_6(%arg0: i32) -> (i32, i32) {
    %c0_i32 = arith.constant 0 : i32
    %c0_i32_0 = arith.constant 0 : i32
    %c0_i32_1 = arith.constant 0 : i32
    return %c0_i32, %c0_i32_0 : i32, i32
  }
  func.func @transform_7(%arg0: i32) -> (i32, i32, i32) {
    %c0_i32 = arith.constant 0 : i32
    %c0_i32_0 = arith.constant 0 : i32
    %c0_i32_1 = arith.constant 0 : i32
    %c0_i32_2 = arith.constant 0 : i32
    return %c0_i32, %c0_i32_0, %c0_i32_1 : i32, i32, i32
  }
  func.func @transform_8(%arg0: i32) -> (i32, i32) {
    %c0_i32 = arith.constant 0 : i32
    %c0_i32_0 = arith.constant 0 : i32
    %c0_i32_1 = arith.constant 0 : i32
    return %c0_i32, %c0_i32_0 : i32, i32
  }
  func.func @transform_9(%arg0: i32) -> (i32, i32) {
    %c0_i32 = arith.constant 0 : i32
    %c0_i32_0 = arith.constant 0 : i32
    %c0_i32_1 = arith.constant 0 : i32
    return %c0_i32, %c0_i32_0 : i32, i32
  }
  func.func @transform_10(%arg0: i32) -> (i32, i32) {
    %c0_i32 = arith.constant 0 : i32
    %c0_i32_0 = arith.constant 0 : i32
    %c0_i32_1 = arith.constant 0 : i32
    return %c0_i32, %c0_i32_0 : i32, i32
  }
  func.func @transform_11(%arg0: i32) -> (i32, i32, i32) {
    %c0_i32 = arith.constant 0 : i32
    %c0_i32_0 = arith.constant 0 : i32
    %c0_i32_1 = arith.constant 0 : i32
    return %arg0, %c0_i32, %c0_i32_0 : i32, i32, i32
  }
}

</mosaic_0001>

<llo_original>
// kernel: inception_block.1
$region0: #{inception_block.1}
  #allocation0 [shape = 'u32[]', space=smem, size = 0x4, offset = 0x4, fixed_abs, tag = 'smem constant byte address 0x4 - core index']
  #allocation1 [shape = 'u32[144,128]{1,0:T(1,128)}', space=vmem, size = 0x12000, scoped, tag = 'internal scratch']
  %s0 = inlined_call_operand.vmem [shape: bf16[2,4,576], index: 0, kind: input, shape index: {}]
  %s1 = inlined_call_operand.vmem [shape: f32[1,576], index: 1, kind: input, shape index: {}]
  %s2 = inlined_call_operand.vmem [shape: f32[1,576], index: 2, kind: input, shape index: {}]
  %s3 = inlined_call_operand.vmem [shape: bf16[12,4], index: 3, kind: input, shape index: {}]
  %s4 = inlined_call_operand.vmem [shape: f32[12,1], index: 4, kind: input, shape index: {}]
  %s5 = inlined_call_operand.vmem [shape: bf16[9,8,4], index: 5, kind: input, shape index: {}]
  %s6 = inlined_call_operand.vmem [shape: f32[8,1], index: 6, kind: input, shape index: {}]
  %s7 = inlined_call_operand.vmem [shape: bf16[25,8,4], index: 7, kind: input, shape index: {}]
  %s8 = inlined_call_operand.vmem [shape: f32[8,1], index: 8, kind: input, shape index: {}]
  %s9 = inlined_call_operand.vmem [shape: bf16[4,4], index: 9, kind: input, shape index: {}]
  %s10 = inlined_call_operand.vmem [shape: f32[4,1], index: 10, kind: input, shape index: {}]
  %s11 = inlined_call_operand.vmem [shape: f32[2,24,432], index: 11, kind: output, shape index: {}]
  %s12 = sld [smem:[#allocation0]]
  $region77: #{inception_block.1} parent=0
    _
  %s14 = ssub.s32 1, %s12
  %s15 = scalar_select 0, %s14, %s12
  loop: start=0, step=1, limit=4
  $region2: #{inception_block.1} parent=0 // loop_pre_header
    _
  $region3: #{inception_block.1} parent=0 // loop_header
    %s17 = sphi 0, %s21
    %p18 = scmp.ge.s32.totalorder %s17, 4
    %s27 = sphi 0, %s29
    %s30 = sphi 0, %s27
    %s31 = sphi 0, %s30
    %s47 = sphi 0, %s31
    %s51 = sphi 0, %s51
    %s53 = sphi 0, %s51
    %s54 = sphi 0, %s53
    %s68 = sphi 0, %s54
    %s72 = sphi 0, %s72
    %s74 = sphi 0, %s72
    %s75 = sphi 0, %s74
    %s89 = sphi 0, %s75
    %s93 = sphi 0, %s93
    %s95 = sphi 0, %s93
    %s96 = sphi 0, %s95
    %s110 = sphi 0, %s96
    %s114 = sphi 0, %s114
    %s116 = sphi 0, %s114
    %s117 = sphi 0, %s116
    %s131 = sphi 0, %s117
    %s135 = sphi 0, %s135
    %s137 = sphi 0, %s135
    %s138 = sphi 0, %s137
    %s152 = sphi 0, %s138
    %s156 = sphi 0, %s156
    %s158 = sphi 0, %s156
    %s159 = sphi 0, %s158
    %s173 = sphi 0, %s159
    %s177 = sphi 0, %s177
    %s179 = sphi 0, %s177
    %s180 = sphi 0, %s179
    %s194 = sphi 0, %s180
    %s198 = sphi 0, %s198
    %s200 = sphi 0, %s198
    %s201 = sphi 0, %s200
    %s215 = sphi 0, %s201
    %s219 = sphi 0, %s219
    %s221 = sphi 0, %s219
    %s222 = sphi 0, %s221
    %s236 = sphi 0, %s222
    %s240 = sphi 0, %s240
    %s242 = sphi 0, %s240
    %s243 = sphi 0, %s242
    %s257 = sphi 0, %s243
    %s263 = sphi 0, %s265
    %s266 = sphi 0, %s263
    %s267 = sphi 0, %s266
    %s283 = sphi 0, %s267
  $region4: #{inception_block.1} parent=0 // loop_header_branch
    %20 = sbr.rel (%p18) target = $region8
  $region5: #{inception_block.1} parent=0 // loop_body
    %s22 = ssub.s32 %s17, 1
    %s23 = ssub.s32 %s17, 2
    %s24 = sadd.s32 %s17, 1
    %s25 = ssub.s32 %s17, %s24
    %p26 = scmp.eq.s32.totalorder %s25, 0
    %s28 = sadd.s32 %s27, 1
    %s29 = scalar_select %p26, %s27, %s28
    %p32 = pneg %p26
    %p33 = scmp.eq.s32.totalorder %s17, 1
    %p34 = por %p32, %p33
    %p35 = scmp.ne.s32.totalorder %s27, %s30
    %p36 = scmp.eq.s32.totalorder %s17, 0
    %p37 = por %p35, %p36
    %p38 = scmp.ne.s32.totalorder %s27, %s30
    %p39 = scmp.eq.s32.totalorder %s22, 1
    %p40 = por %p38, %p39
    %p41 = scmp.ne.s32.totalorder %s30, %s31
    %p42 = scmp.eq.s32.totalorder %s22, 0
    %p43 = por %p41, %p42
    %p44 = scmp.ne.s32.totalorder %s30, %s31
    %p45 = scmp.eq.s32.totalorder %s23, 1
    %p46 = por %p44, %p45
    %p48 = scmp.ne.s32.totalorder %s31, %s47
    %p49 = scmp.eq.s32.totalorder %s23, 0
    %p50 = por %p48, %p49
    %s52 = sadd.s32 %s51, 1
    %p55 = scmp.eq.s32.totalorder %s17, 1
    %p56 = scmp.ne.s32.totalorder %s51, %s53
    %p57 = scmp.eq.s32.totalorder %s17, 0
    %p58 = por %p56, %p57
    %p59 = scmp.ne.s32.totalorder %s51, %s53
    %p60 = scmp.eq.s32.totalorder %s22, 1
    %p61 = por %p59, %p60
    %p62 = scmp.ne.s32.totalorder %s53, %s54
    %p63 = scmp.eq.s32.totalorder %s22, 0
    %p64 = por %p62, %p63
    %p65 = scmp.ne.s32.totalorder %s53, %s54
    %p66 = scmp.eq.s32.totalorder %s23, 1
    %p67 = por %p65, %p66
    %p69 = scmp.ne.s32.totalorder %s54, %s68
    %p70 = scmp.eq.s32.totalorder %s23, 0
    %p71 = por %p69, %p70
    %s73 = sadd.s32 %s72, 1
    %p76 = scmp.eq.s32.totalorder %s17, 1
    %p77 = scmp.ne.s32.totalorder %s72, %s74
    %p78 = scmp.eq.s32.totalorder %s17, 0
    %p79 = por %p77, %p78
    %p80 = scmp.ne.s32.totalorder %s72, %s74
    %p81 = scmp.eq.s32.totalorder %s22, 1
    %p82 = por %p80, %p81
    %p83 = scmp.ne.s32.totalorder %s74, %s75
    %p84 = scmp.eq.s32.totalorder %s22, 0
    %p85 = por %p83, %p84
    %p86 = scmp.ne.s32.totalorder %s74, %s75
    %p87 = scmp.eq.s32.totalorder %s23, 1
    %p88 = por %p86, %p87
    %p90 = scmp.ne.s32.totalorder %s75, %s89
    %p91 = scmp.eq.s32.totalorder %s23, 0
    %p92 = por %p90, %p91
    %s94 = sadd.s32 %s93, 1
    %p97 = scmp.eq.s32.totalorder %s17, 1
    %p98 = scmp.ne.s32.totalorder %s93, %s95
    %p99 = scmp.eq.s32.totalorder %s17, 0
    %p100 = por %p98, %p99
    %p101 = scmp.ne.s32.totalorder %s93, %s95
    %p102 = scmp.eq.s32.totalorder %s22, 1
    %p103 = por %p101, %p102
    %p104 = scmp.ne.s32.totalorder %s95, %s96
    %p105 = scmp.eq.s32.totalorder %s22, 0
    %p106 = por %p104, %p105
    %p107 = scmp.ne.s32.totalorder %s95, %s96
    %p108 = scmp.eq.s32.totalorder %s23, 1
    %p109 = por %p107, %p108
    %p111 = scmp.ne.s32.totalorder %s96, %s110
    %p112 = scmp.eq.s32.totalorder %s23, 0
    %p113 = por %p111, %p112
    %s115 = sadd.s32 %s114, 1
    %p118 = scmp.eq.s32.totalorder %s17, 1
    %p119 = scmp.ne.s32.totalorder %s114, %s116
    %p120 = scmp.eq.s32.totalorder %s17, 0
    %p121 = por %p119, %p120
    %p122 = scmp.ne.s32.totalorder %s114, %s116
    %p123 = scmp.eq.s32.totalorder %s22, 1
    %p124 = por %p122, %p123
    %p125 = scmp.ne.s32.totalorder %s116, %s117
    %p126 = scmp.eq.s32.totalorder %s22, 0
    %p127 = por %p125, %p126
    %p128 = scmp.ne.s32.totalorder %s116, %s117
    %p129 = scmp.eq.s32.totalorder %s23, 1
    %p130 = por %p128, %p129
    %p132 = scmp.ne.s32.totalorder %s117, %s131
    %p133 = scmp.eq.s32.totalorder %s23, 0
    %p134 = por %p132, %p133
    %s136 = sadd.s32 %s135, 1
    %p139 = scmp.eq.s32.totalorder %s17, 1
    %p140 = scmp.ne.s32.totalorder %s135, %s137
    %p141 = scmp.eq.s32.totalorder %s17, 0
    %p142 = por %p140, %p141
    %p143 = scmp.ne.s32.totalorder %s135, %s137
    %p144 = scmp.eq.s32.totalorder %s22, 1
    %p145 = por %p143, %p144
    %p146 = scmp.ne.s32.totalorder %s137, %s138
    %p147 = scmp.eq.s32.totalorder %s22, 0
    %p148 = por %p146, %p147
    %p149 = scmp.ne.s32.totalorder %s137, %s138
    %p150 = scmp.eq.s32.totalorder %s23, 1
    %p151 = por %p149, %p150
    %p153 = scmp.ne.s32.totalorder %s138, %s152
    %p154 = scmp.eq.s32.totalorder %s23, 0
    %p155 = por %p153, %p154
    %s157 = sadd.s32 %s156, 1
    %p160 = scmp.eq.s32.totalorder %s17, 1
    %p161 = scmp.ne.s32.totalorder %s156, %s158
    %p162 = scmp.eq.s32.totalorder %s17, 0
    %p163 = por %p161, %p162
    %p164 = scmp.ne.s32.totalorder %s156, %s158
    %p165 = scmp.eq.s32.totalorder %s22, 1
    %p166 = por %p164, %p165
    %p167 = scmp.ne.s32.totalorder %s158, %s159
    %p168 = scmp.eq.s32.totalorder %s22, 0
    %p169 = por %p167, %p168
    %p170 = scmp.ne.s32.totalorder %s158, %s159
    %p171 = scmp.eq.s32.totalorder %s23, 1
    %p172 = por %p170, %p171
    %p174 = scmp.ne.s32.totalorder %s159, %s173
    %p175 = scmp.eq.s32.totalorder %s23, 0
    %p176 = por %p174, %p175
    %s178 = sadd.s32 %s177, 1
    %p181 = scmp.eq.s32.totalorder %s17, 1
    %p182 = scmp.ne.s32.totalorder %s177, %s179
    %p183 = scmp.eq.s32.totalorder %s17, 0
    %p184 = por %p182, %p183
    %p185 = scmp.ne.s32.totalorder %s177, %s179
    %p186 = scmp.eq.s32.totalorder %s22, 1
    %p187 = por %p185, %p186
    %p188 = scmp.ne.s32.totalorder %s179, %s180
    %p189 = scmp.eq.s32.totalorder %s22, 0
    %p190 = por %p188, %p189
    %p191 = scmp.ne.s32.totalorder %s179, %s180
    %p192 = scmp.eq.s32.totalorder %s23, 1
    %p193 = por %p191, %p192
    %p195 = scmp.ne.s32.totalorder %s180, %s194
    %p196 = scmp.eq.s32.totalorder %s23, 0
    %p197 = por %p195, %p196
    %s199 = sadd.s32 %s198, 1
    %p202 = scmp.eq.s32.totalorder %s17, 1
    %p203 = scmp.ne.s32.totalorder %s198, %s200
    %p204 = scmp.eq.s32.totalorder %s17, 0
    %p205 = por %p203, %p204
    %p206 = scmp.ne.s32.totalorder %s198, %s200
    %p207 = scmp.eq.s32.totalorder %s22, 1
    %p208 = por %p206, %p207
    %p209 = scmp.ne.s32.totalorder %s200, %s201
    %p210 = scmp.eq.s32.totalorder %s22, 0
    %p211 = por %p209, %p210
    %p212 = scmp.ne.s32.totalorder %s200, %s201
    %p213 = scmp.eq.s32.totalorder %s23, 1
    %p214 = por %p212, %p213
    %p216 = scmp.ne.s32.totalorder %s201, %s215
    %p217 = scmp.eq.s32.totalorder %s23, 0
    %p218 = por %p216, %p217
    %s220 = sadd.s32 %s219, 1
    %p223 = scmp.eq.s32.totalorder %s17, 1
    %p224 = scmp.ne.s32.totalorder %s219, %s221
    %p225 = scmp.eq.s32.totalorder %s17, 0
    %p226 = por %p224, %p225
    %p227 = scmp.ne.s32.totalorder %s219, %s221
    %p228 = scmp.eq.s32.totalorder %s22, 1
    %p229 = por %p227, %p228
    %p230 = scmp.ne.s32.totalorder %s221, %s222
    %p231 = scmp.eq.s32.totalorder %s22, 0
    %p232 = por %p230, %p231
    %p233 = scmp.ne.s32.totalorder %s221, %s222
    %p234 = scmp.eq.s32.totalorder %s23, 1
    %p235 = por %p233, %p234
    %p237 = scmp.ne.s32.totalorder %s222, %s236
    %p238 = scmp.eq.s32.totalorder %s23, 0
    %p239 = por %p237, %p238
    %s241 = sadd.s32 %s240, 1
    %p244 = scmp.eq.s32.totalorder %s17, 1
    %p245 = scmp.ne.s32.totalorder %s240, %s242
    %p246 = scmp.eq.s32.totalorder %s17, 0
    %p247 = por %p245, %p246
    %p248 = scmp.ne.s32.totalorder %s240, %s242
    %p249 = scmp.eq.s32.totalorder %s22, 1
    %p250 = por %p248, %p249
    %p251 = scmp.ne.s32.totalorder %s242, %s243
    %p252 = scmp.eq.s32.totalorder %s22, 0
    %p253 = por %p251, %p252
    %p254 = scmp.ne.s32.totalorder %s242, %s243
    %p255 = scmp.eq.s32.totalorder %s23, 1
    %p256 = por %p254, %p255
    %p258 = scmp.ne.s32.totalorder %s243, %s257
    %p259 = scmp.eq.s32.totalorder %s23, 0
    %p260 = por %p258, %p259
    %s261 = ssub.s32 %s17, %s24
    %p262 = scmp.eq.s32.totalorder %s261, 0
    %s264 = sadd.s32 %s263, 1
    %s265 = scalar_select %p262, %s263, %s264
    %p268 = pneg %p262
    %p269 = scmp.eq.s32.totalorder %s17, 1
    %p270 = por %p268, %p269
    %p271 = scmp.ne.s32.totalorder %s263, %s266
    %p272 = scmp.eq.s32.totalorder %s17, 0
    %p273 = por %p271, %p272
    %p274 = scmp.ne.s32.totalorder %s263, %s266
    %p275 = scmp.eq.s32.totalorder %s22, 1
    %p276 = por %p274, %p275
    %p277 = scmp.ne.s32.totalorder %s266, %s267
    %p278 = scmp.eq.s32.totalorder %s22, 0
    %p279 = por %p277, %p278
    %p280 = scmp.ne.s32.totalorder %s266, %s267
    %p281 = scmp.eq.s32.totalorder %s23, 1
    %p282 = por %p280, %p281
    %p284 = scmp.ne.s32.totalorder %s267, %s283
    %p285 = scmp.eq.s32.totalorder %s23, 0
    %p286 = por %p284, %p285
    %p287 = scmp.le.s32.totalorder 1, %s17
    %p288 = scmp.lt.s32.totalorder %s17, 3
    %p289 = pnand %p287, %p288
    %p290 = pneg %p289
    // Predicated region
    $region9: #{inception_block.1} parent=5 // pred_check
      _
    $region10: #{inception_block.1} parent=5 // pred_check_branch
      %292 = sbr.rel (%p289) target = $region12
    $region11: #{inception_block.1} parent=5 // pred_region
      %s293 = ssub.s32 %s17, 1
      // Predicated region
      $region13: #{inception_block.1} parent=11 // pred_check
        %p294 = pneg %p64
      $region14: #{inception_block.1} parent=11 // pred_check_branch
        %296 = sbr.rel (%p294) target = $region16
      $region15: #{inception_block.1} parent=11 // pred_region
        _
      $region16: #{inception_block.1} parent=11 // pred_fallthru
        _
      // Predicated region
      $region17: #{inception_block.1} parent=11 // pred_check
        %p297 = pneg %p85
      $region18: #{inception_block.1} parent=11 // pred_check_branch
        %299 = sbr.rel (%p297) target = $region20
      $region19: #{inception_block.1} parent=11 // pred_region
        _
      $region20: #{inception_block.1} parent=11 // pred_fallthru
        _
      // Predicated region
      $region21: #{inception_block.1} parent=11 // pred_check
        %p300 = pneg %p106
      $region22: #{inception_block.1} parent=11 // pred_check_branch
        %302 = sbr.rel (%p300) target = $region24
      $region23: #{inception_block.1} parent=11 // pred_region
        _
      $region24: #{inception_block.1} parent=11 // pred_fallthru
        _
      // Predicated region
      $region25: #{inception_block.1} parent=11 // pred_check
        %p303 = pneg %p127
      $region26: #{inception_block.1} parent=11 // pred_check_branch
        %305 = sbr.rel (%p303) target = $region28
      $region27: #{inception_block.1} parent=11 // pred_region
        _
      $region28: #{inception_block.1} parent=11 // pred_fallthru
        _
      // Predicated region
      $region29: #{inception_block.1} parent=11 // pred_check
        %p306 = pneg %p148
      $region30: #{inception_block.1} parent=11 // pred_check_branch
        %308 = sbr.rel (%p306) target = $region32
      $region31: #{inception_block.1} parent=11 // pred_region
        _
      $region32: #{inception_block.1} parent=11 // pred_fallthru
        _
      // Predicated region
      $region33: #{inception_block.1} parent=11 // pred_check
        %p309 = pneg %p169
      $region34: #{inception_block.1} parent=11 // pred_check_branch
        %311 = sbr.rel (%p309) target = $region36
      $region35: #{inception_block.1} parent=11 // pred_region
        _
      $region36: #{inception_block.1} parent=11 // pred_fallthru
        _
      // Predicated region
      $region37: #{inception_block.1} parent=11 // pred_check
        %p312 = pneg %p190
      $region38: #{inception_block.1} parent=11 // pred_check_branch
        %314 = sbr.rel (%p312) target = $region40
      $region39: #{inception_block.1} parent=11 // pred_region
        _
      $region40: #{inception_block.1} parent=11 // pred_fallthru
        _
      // Predicated region
      $region41: #{inception_block.1} parent=11 // pred_check
        %p315 = pneg %p211
      $region42: #{inception_block.1} parent=11 // pred_check_branch
        %317 = sbr.rel (%p315) target = $region44
      $region43: #{inception_block.1} parent=11 // pred_region
        _
      $region44: #{inception_block.1} parent=11 // pred_fallthru
        _
      // Predicated region
      $region45: #{inception_block.1} parent=11 // pred_check
        %p318 = pneg %p232
      $region46: #{inception_block.1} parent=11 // pred_check_branch
        %320 = sbr.rel (%p318) target = $region48
      $region47: #{inception_block.1} parent=11 // pred_region
        _
      $region48: #{inception_block.1} parent=11 // pred_fallthru
        _
      // Predicated region
      $region49: #{inception_block.1} parent=11 // pred_check
        %p321 = pneg %p253
      $region50: #{inception_block.1} parent=11 // pred_check_branch
        %323 = sbr.rel (%p321) target = $region52
      $region51: #{inception_block.1} parent=11 // pred_region
        _
      $region52: #{inception_block.1} parent=11 // pred_fallthru
        _
    $region12: #{inception_block.1} parent=5 // pred_fallthru
      _
    %p324 = scmp.lt.s32.totalorder %s17, 2
    // Predicated region
    $region53: #{inception_block.1} parent=5 // pred_check
      %p325 = pneg %p324
    $region54: #{inception_block.1} parent=5 // pred_check_branch
      %327 = sbr.rel (%p325) target = $region56
    $region55: #{inception_block.1} parent=5 // pred_region
      // Predicated region
      $region57: #{inception_block.1} parent=55 // pred_check
        %p328 = pneg %p37
      $region58: #{inception_block.1} parent=55 // pred_check_branch
        %330 = sbr.rel (%p328) target = $region60
      $region59: #{inception_block.1} parent=55 // pred_region
        %p331 = scmp.lt.s32.totalorder %s17, 1
        %s332 = scalar_select %p331, %s17, 1
        %s333 = smul.addr %s332, 5
        %s334 = smul.addr %s333, 2
        %s335 = scalar_lea.vmem %s0, %s334
      $region60: #{inception_block.1} parent=55 // pred_fallthru
        _
    $region56: #{inception_block.1} parent=5 // pred_fallthru
      _
    %p336 = scmp.le.s32.totalorder 1, %s17
    %p337 = scmp.lt.s32.totalorder %s17, 3
    %p338 = pnand %p336, %p337
    %p339 = pneg %p338
    // Predicated region
    $region61: #{inception_block.1} parent=5 // pred_check
      _
    $region62: #{inception_block.1} parent=5 // pred_check_branch
      %341 = sbr.rel (%p338) target = $region64
    $region63: #{inception_block.1} parent=5 // pred_region
      %s342 = ssub.s32 %s17, 1
      %p343 = scmp.lt.s32.totalorder %s22, 1
      %s344 = scalar_select %p343, %s22, 1
      %s345 = smul.addr %s344, 5
      %s346 = smul.addr %s345, 2
      %s347 = scalar_lea.vmem %s0, %s346
      %p348 = pneg %p43
      %p349 = pneg %p40
      %p350 = pneg %p64
      %p351 = pneg %p61
      %p352 = pneg %p85
      %p353 = pneg %p82
      %p354 = pneg %p106
      %p355 = pneg %p103
      %p356 = pneg %p127
      %p357 = pneg %p124
      %p358 = pneg %p148
      %p359 = pneg %p145
      %p360 = pneg %p169
      %p361 = pneg %p166
      %p362 = pneg %p190
      %p363 = pneg %p187
      %p364 = pneg %p211
      %p365 = pneg %p208
      %p366 = pneg %p232
      %p367 = pneg %p229
      %p368 = pneg %p253
      %p369 = pneg %p250
      %p370 = pneg %p279
      %p371 = pneg %p276
      %p372 = scmp.lt.s32.totalorder %s22, 1
      %s373 = scalar_select %p372, %s22, 1
      %s374 = smul.addr %s373, 12
      %s375 = smul.addr %s374, 8
      %s376 = scalar_lea.vmem %s11, %s375
      %p377 = scmp.lt.s32.totalorder %s22, 1
      %s378 = scalar_select %p377, %s22, 1
      %s379 = smul.addr %s378, 5
      %s380 = smul.addr %s379, 2
      %s381 = scalar_lea.vmem %s0, %s380
      %p382 = scmp.lt.s32.totalorder %s22, 1
      %s383 = scalar_select %p382, %s22, 1
      %s384 = smul.addr %s383, 12
      %s385 = smul.addr %s384, 8
      %s386 = scalar_lea.vmem %s11, %s385
      %v388 = vld [vmem:[%s381] sm:$0xff]
      %v389 = vld [vmem:[%s381 + $0x8] sm:$0x3]
      %v390 = vld [vmem:[%s1] sm:$0x1f]
      %v391 = vld [vmem:[%s2] sm:$0x1f]
      %v392 = vld [vmem:[%s3] sm:$0xf]
      %v393 = vld [vmem:[%s3 + $0x4] sm:$0x3]
      %v394 = vld [vmem:[%s4] sm:$0xff]
      %v395 = vld [vmem:[%s4 + $0x8] sm:$0xf]
      %397 = vset.pattern.permute.xlu0 0
      %398 = vperm.xlu0 %397, %v394
      %v399 = vpop.permute.xlu0 %398
      %402 = vset.pattern.permute.xlu0 0
      %403 = vperm.xlu0 %402, %v395
      %v404 = vpop.permute.xlu0 %403
      %v408 = vunpack.c.l.b16 %v392
      %v409 = vunpack.c.l.b16 %v393
      %v410 = vpack.c.b16 %v409, %v408
      %v413 = vcombine.high %v388, %v388
      %v415 = vunpack.c.l.s4 1983009808
      %v416 = vunpack.c.0.s8 %v415
      %v417 = vlaneseq
      %v418 = vshrl.u32 %v417, 7
      %v419 = vsub.s32 %v416, %v418
      %v420 = vrot.slane %v388, %v419
      %v422 = vunpack.c.l.s4 1983009808
      %v423 = vunpack.c.0.s8 %v422
      %v424 = vlaneseq
      %v425 = vshrl.u32 %v424, 7
      %v426 = vsub.s32 %v423, %v425
      %v427 = vrot.slane %v413, %v426
      %v428 = vcombine.high %v420, %v420
      %v429 = vcombine.high %v427, %v427
      %v431 = vunpack.c.l.s4 1983009808
      %v432 = vunpack.c.0.s8 %v431
      %v433 = vlaneseq
      %v434 = vshrl.u32 %v433, 7
      %v435 = vsub.s32 %v432, %v434
      %v436 = vrot.slane %v389, %v435
      %vm437 = vcmask 31744
      %v439 = vsel %vm437, %v410, 0
      %vm441 = vcmask 1041408
      %v443 = vsel %vm441, %v420, 0
      %v446 = vsel %vm441, %v428, 0
      %v449 = vsel %vm441, %v427, 0
      %v452 = vsel %vm441, %v429, 0
      %v455 = vsel %vm441, %v436, 0
      %457 = vmatprep.subr.bf16.mxu0 %v446
      %458 = vmatpush1.bf16.msra.mxu0 %v443
      %459 = vmatprep.subr.bf16.mxu0 0
      %460 = vmatpush1.bf16.msra.mxu0 0
      %461 = vmatprep.subr.bf16.mxu0 0
      %462 = vmatpush1.bf16.msra.mxu0 0
      %463 = vmatprep.subr.bf16.mxu0 0
      %464 = vmatpush1.bf16.msra.mxu0 0
      %465 = vmatprep.subr.bf16.mxu0 0
      %466 = vmatpush1.bf16.msra.mxu0 0
      %467 = vmatprep.subr.bf16.mxu0 0
      %468 = vmatpush1.bf16.msra.mxu0 0
      %469 = vmatprep.subr.bf16.mxu0 0
      %470 = vmatpush1.bf16.msra.mxu0 0
      %471 = vmatprep.subr.bf16.mxu0 0
      %472 = vmatpush1.bf16.msra.mxu0 0
      %473 = vmatprep.subr.bf16.mxu0 0
      %474 = vmatpush1.bf16.msra.mxu0 0
      %475 = vmatprep.subr.bf16.mxu0 0
      %476 = vmatpush1.bf16.msra.mxu0 0
      %477 = vmatprep.subr.bf16.mxu0 0
      %478 = vmatpush1.bf16.msra.mxu0 0
      %479 = vmatprep.subr.bf16.mxu0 0
      %480 = vmatpush1.bf16.msra.mxu0 0
      %481 = vmatprep.subr.bf16.mxu0 0
      %482 = vmatpush1.bf16.msra.mxu0 0
      %483 = vmatprep.subr.bf16.mxu0 0
      %484 = vmatpush1.bf16.msra.mxu0 0
      %485 = vmatprep.subr.bf16.mxu0 0
      %486 = vmatpush1.bf16.msra.mxu0 0
      %487 = vmatprep.subr.bf16.mxu0 0
      %488 = vmatpush1.bf16.msra.mxu0 0
      %489 = vmatprep.mubr.bf16.mxu0 0
      %490 = vmatmul.mubr.bf16.gmra.mrb[0].mxu0 %v439
      %v491 = vpop.f32.mrb[0].mxu0
      %v492 = vadd.f32 %v399, %v491
      %v493 = vpop.f32.mrb[0].mxu0
      %v494 = vadd.f32 %v399, %v493
      %v495 = vpop.f32.mrb[0].mxu0
      %v496 = vadd.f32 %v404, %v495
      %v497 = vpop.f32.mrb[0].mxu0
      %v498 = vadd.f32 %v404, %v497
      %499 = vdwg.mxu0
      %500 = vmatprep.subr.bf16.mxu0 %v452
      %501 = vmatpush1.bf16.msra.mxu0 %v449
      %502 = vmatprep.subr.bf16.mxu0 0
      %503 = vmatpush1.bf16.msra.mxu0 0
      %504 = vmatprep.subr.bf16.mxu0 0
      %505 = vmatpush1.bf16.msra.mxu0 0
      %506 = vmatprep.subr.bf16.mxu0 0
      %507 = vmatpush1.bf16.msra.mxu0 0
      %508 = vmatprep.subr.bf16.mxu0 0
      %509 = vmatpush1.bf16.msra.mxu0 0
      %510 = vmatprep.subr.bf16.mxu0 0
      %511 = vmatpush1.bf16.msra.mxu0 0
      %512 = vmatprep.subr.bf16.mxu0 0
      %513 = vmatpush1.bf16.msra.mxu0 0
      %514 = vmatprep.subr.bf16.mxu0 0
      %515 = vmatpush1.bf16.msra.mxu0 0
      %516 = vmatprep.subr.bf16.mxu0 0
      %517 = vmatpush1.bf16.msra.mxu0 0
      %518 = vmatprep.subr.bf16.mxu0 0
      %519 = vmatpush1.bf16.msra.mxu0 0
      %520 = vmatprep.subr.bf16.mxu0 0
      %521 = vmatpush1.bf16.msra.mxu0 0
      %522 = vmatprep.subr.bf16.mxu0 0
      %523 = vmatpush1.bf16.msra.mxu0 0
      %524 = vmatprep.subr.bf16.mxu0 0
      %525 = vmatpush1.bf16.msra.mxu0 0
      %526 = vmatprep.subr.bf16.mxu0 0
      %527 = vmatpush1.bf16.msra.mxu0 0
      %528 = vmatprep.subr.bf16.mxu0 0
      %529 = vmatpush1.bf16.msra.mxu0 0
      %530 = vmatprep.subr.bf16.mxu0 0
      %531 = vmatpush1.bf16.msra.mxu0 0
      %532 = vmatprep.mubr.bf16.mxu0 0
      %533 = vmatmul.mubr.bf16.gmra.mrb[0].mxu0 %v439
      %v534 = vpop.f32.mrb[0].mxu0
      %v535 = vadd.f32 %v399, %v534
      %v536 = vpop.f32.mrb[0].mxu0
      %v537 = vadd.f32 %v399, %v536
      %v538 = vpop.f32.mrb[0].mxu0
      %v539 = vadd.f32 %v404, %v538
      %v540 = vpop.f32.mrb[0].mxu0
      %v541 = vadd.f32 %v404, %v540
      %542 = vdwg.mxu0
      %543 = vmatprep.subr.bf16.mxu0 0
      %544 = vmatpush1.bf16.msra.mxu0 %v455
      %545 = vmatprep.subr.bf16.mxu0 0
      %546 = vmatpush1.bf16.msra.mxu0 0
      %547 = vmatprep.subr.bf16.mxu0 0
      %548 = vmatpush1.bf16.msra.mxu0 0
      %549 = vmatprep.subr.bf16.mxu0 0
      %550 = vmatpush1.bf16.msra.mxu0 0
      %551 = vmatprep.subr.bf16.mxu0 0
      %552 = vmatpush1.bf16.msra.mxu0 0
      %553 = vmatprep.subr.bf16.mxu0 0
      %554 = vmatpush1.bf16.msra.mxu0 0
      %555 = vmatprep.subr.bf16.mxu0 0
      %556 = vmatpush1.bf16.msra.mxu0 0
      %557 = vmatprep.subr.bf16.mxu0 0
      %558 = vmatpush1.bf16.msra.mxu0 0
      %559 = vmatprep.subr.bf16.mxu0 0
      %560 = vmatpush1.bf16.msra.mxu0 0
      %561 = vmatprep.subr.bf16.mxu0 0
      %562 = vmatpush1.bf16.msra.mxu0 0
      %563 = vmatprep.subr.bf16.mxu0 0
      %564 = vmatpush1.bf16.msra.mxu0 0
      %565 = vmatprep.subr.bf16.mxu0 0
      %566 = vmatpush1.bf16.msra.mxu0 0
      %567 = vmatprep.subr.bf16.mxu0 0
      %568 = vmatpush1.bf16.msra.mxu0 0
      %569 = vmatprep.subr.bf16.mxu0 0
      %570 = vmatpush1.bf16.msra.mxu0 0
      %571 = vmatprep.subr.bf16.mxu0 0
      %572 = vmatpush1.bf16.msra.mxu0 0
      %573 = vmatprep.subr.bf16.mxu0 0
      %574 = vmatpush1.bf16.msra.mxu0 0
      %575 = vmatprep.mubr.bf16.mxu0 0
      %576 = vmatmul.mubr.bf16.gmra.mrb[0].mxu0 %v439
      %v577 = vpop.f32.mrb[0].mxu0
      %v578 = vadd.f32 %v399, %v577
      %v579 = vpop.f32.mrb[0].mxu0
      %v580 = vpop.f32.mrb[0].mxu0
      %v581 = vadd.f32 %v404, %v580
      %v582 = vpop.f32.mrb[0].mxu0
      %583 = vdwg.mxu0
      %v584 = vmax.f32 %v492, 0.0
      %v585 = vmax.f32 %v494, 0.0
      %v586 = vmax.f32 %v535, 0.0
      %v587 = vmax.f32 %v537, 0.0
      %v588 = vmax.f32 %v578, 0.0
      %v589 = vmax.f32 %v496, 0.0
      %v590 = vmax.f32 %v498, 0.0
      %v591 = vmax.f32 %v539, 0.0
      %v592 = vmax.f32 %v541, 0.0
      %v593 = vmax.f32 %v581, 0.0
      %v595 = vlaneseq
      %v596 = vshrl.u32 %v595, 7
      %v597 = vsub.s32 0, %v596
      %v598 = vrot.slane %v390, %v597
      %v599 = vlaneseq
      %v600 = vshrl.u32 %v599, 7
      %v601 = vsub.s32 1, %v600
      %v602 = vrot.slane %v390, %v601
      %v603 = vlaneseq
      %v604 = vshrl.u32 %v603, 7
      %v605 = vsub.s32 2, %v604
      %v606 = vrot.slane %v390, %v605
      %v607 = vlaneseq
      %v608 = vshrl.u32 %v607, 7
      %v609 = vsub.s32 3, %v608
      %v610 = vrot.slane %v390, %v609
      %v611 = vlaneseq
      %v612 = vshrl.u32 %v611, 7
      %v613 = vsub.s32 4, %v612
      %v614 = vrot.slane %v390, %v613
      %v620 = vmul.f32 %v584, %v598
      %v621 = vmul.f32 %v585, %v602
      %v622 = vmul.f32 %v586, %v606
      %v623 = vmul.f32 %v587, %v610
      %v624 = vmul.f32 %v588, %v614
      %v625 = vpack.c.bf16 %v620, %v620
      %v626 = vpack.c.bf16 %v621, %v621
      %v627 = vpack.c.bf16 %v622, %v622
      %v628 = vpack.c.bf16 %v623, %v623
      %v629 = vpack.c.bf16 %v624, %v624
      %v630 = vmul.f32 %v589, %v598
      %v631 = vmul.f32 %v590, %v602
      %v632 = vmul.f32 %v591, %v606
      %v633 = vmul.f32 %v592, %v610
      %v634 = vmul.f32 %v593, %v614
      %v635 = vpack.c.bf16 %v630, %v630
      %v636 = vpack.c.bf16 %v631, %v631
      %v637 = vpack.c.bf16 %v632, %v632
      %v638 = vpack.c.bf16 %v633, %v633
      %v639 = vpack.c.bf16 %v634, %v634
      %v640 = vld [vmem:[%s5] sm:$0xf]
      %s641 = scalar_lea.vmem %s5, 4
      %v642 = vld [vmem:[%s641] sm:$0xf]
      %v647 = vrot.slane %v625, 2
      %v648 = vrot.slane %v626, 2
      %v649 = vrot.slane %v627, 2
      %v650 = vrot.slane %v628, 2
      %651 = vrot.lane.b32.xlu0 %v647, 80
      %v652 = vpop.permute.xlu0 %651
      %653 = vrot.lane.b32.xlu0 %v648, 80
      %v654 = vpop.permute.xlu0 %653
      %655 = vrot.lane.b32.xlu0 %v649, 80
      %v656 = vpop.permute.xlu0 %655
      %657 = vrot.lane.b32.xlu0 %v650, 80
      %v658 = vpop.permute.xlu0 %657
      %vm659 = vcmask 654336
      %v660 = vsel %vm659, %v652, %v654
      %v661 = vsel %vm659, %v654, %v656
      %v662 = vsel %vm659, %v656, %v658
      %v664 = vsel %vm437, %v642, 0
      %v667 = vsel %vm441, %v660, 0
      %v670 = vsel %vm441, %v661, 0
      %v673 = vsel %vm441, %v662, 0
      %v676 = vsel %vm441, %v658, 0
      %678 = vmatprep.subr.bf16.mxu0 %v670
      %679 = vmatpush1.bf16.msra.mxu0 %v667
      %680 = vmatprep.subr.bf16.mxu0 0
      %681 = vmatpush1.bf16.msra.mxu0 0
      %682 = vmatprep.subr.bf16.mxu0 0
      %683 = vmatpush1.bf16.msra.mxu0 0
      %684 = vmatprep.subr.bf16.mxu0 0
      %685 = vmatpush1.bf16.msra.mxu0 0
      %686 = vmatprep.subr.bf16.mxu0 0
      %687 = vmatpush1.bf16.msra.mxu0 0
      %688 = vmatprep.subr.bf16.mxu0 0
      %689 = vmatpush1.bf16.msra.mxu0 0
      %690 = vmatprep.subr.bf16.mxu0 0
      %691 = vmatpush1.bf16.msra.mxu0 0
      %692 = vmatprep.subr.bf16.mxu0 0
      %693 = vmatpush1.bf16.msra.mxu0 0
      %694 = vmatprep.subr.bf16.mxu0 0
      %695 = vmatpush1.bf16.msra.mxu0 0
      %696 = vmatprep.subr.bf16.mxu0 0
      %697 = vmatpush1.bf16.msra.mxu0 0
      %698 = vmatprep.subr.bf16.mxu0 0
      %699 = vmatpush1.bf16.msra.mxu0 0
      %700 = vmatprep.subr.bf16.mxu0 0
      %701 = vmatpush1.bf16.msra.mxu0 0
      %702 = vmatprep.subr.bf16.mxu0 0
      %703 = vmatpush1.bf16.msra.mxu0 0
      %704 = vmatprep.subr.bf16.mxu0 0
      %705 = vmatpush1.bf16.msra.mxu0 0
      %706 = vmatprep.subr.bf16.mxu0 0
      %707 = vmatpush1.bf16.msra.mxu0 0
      %708 = vmatprep.subr.bf16.mxu0 0
      %709 = vmatpush1.bf16.msra.mxu0 0
      %710 = vmatprep.mubr.bf16.mxu0 0
      %711 = vmatmul.mubr.bf16.gmra.mrb[0].mxu0 %v664
      %v712 = vpop.f32.mrb[0].mxu0
      %v713 = vadd.f32 0.0, %v712
      %v714 = vpop.f32.mrb[0].mxu0
      %v715 = vadd.f32 0.0, %v714
      %v716 = vpop.f32.mrb[0].mxu0
      %v717 = vpop.f32.mrb[0].mxu0
      %718 = vdwg.mxu0
      %719 = vmatprep.subr.bf16.mxu0 %v676
      %720 = vmatpush1.bf16.msra.mxu0 %v673
      %721 = vmatprep.subr.bf16.mxu0 0
      %722 = vmatpush1.bf16.msra.mxu0 0
      %723 = vmatprep.subr.bf16.mxu0 0
      %724 = vmatpush1.bf16.msra.mxu0 0
      %725 = vmatprep.subr.bf16.mxu0 0
      %726 = vmatpush1.bf16.msra.mxu0 0
      %727 = vmatprep.subr.bf16.mxu0 0
      %728 = vmatpush1.bf16.msra.mxu0 0
      %729 = vmatprep.subr.bf16.mxu0 0
      %730 = vmatpush1.bf16.msra.mxu0 0
      %731 = vmatprep.subr.bf16.mxu0 0
      %732 = vmatpush1.bf16.msra.mxu0 0
      %733 = vmatprep.subr.bf16.mxu0 0
      %734 = vmatpush1.bf16.msra.mxu0 0
      %735 = vmatprep.subr.bf16.mxu0 0
      %736 = vmatpush1.bf16.msra.mxu0 0
      %737 = vmatprep.subr.bf16.mxu0 0
      %738 = vmatpush1.bf16.msra.mxu0 0
      %739 = vmatprep.subr.bf16.mxu0 0
      %740 = vmatpush1.bf16.msra.mxu0 0
      %741 = vmatprep.subr.bf16.mxu0 0
      %742 = vmatpush1.bf16.msra.mxu0 0
      %743 = vmatprep.subr.bf16.mxu0 0
      %744 = vmatpush1.bf16.msra.mxu0 0
      %745 = vmatprep.subr.bf16.mxu0 0
      %746 = vmatpush1.bf16.msra.mxu0 0
      %747 = vmatprep.subr.bf16.mxu0 0
      %748 = vmatpush1.bf16.msra.mxu0 0
      %749 = vmatprep.subr.bf16.mxu0 0
      %750 = vmatpush1.bf16.msra.mxu0 0
      %751 = vmatprep.mubr.bf16.mxu0 0
      %752 = vmatmul.mubr.bf16.gmra.mrb[0].mxu0 %v664
      %v753 = vpop.f32.mrb[0].mxu0
      %v754 = vadd.f32 0.0, %v753
      %v755 = vpop.f32.mrb[0].mxu0
      %v756 = vadd.f32 0.0, %v755
      %v757 = vpop.f32.mrb[0].mxu0
      %v758 = vpop.f32.mrb[0].mxu0
      %759 = vdwg.mxu0
      %760 = vrot.lane.b32.xlu0 %v647, 81
      %v761 = vpop.permute.xlu0 %760
      %762 = vrot.lane.b32.xlu0 %v648, 81
      %v763 = vpop.permute.xlu0 %762
      %764 = vrot.lane.b32.xlu0 %v649, 81
      %v765 = vpop.permute.xlu0 %764
      %766 = vrot.lane.b32.xlu0 %v650, 81
      %v767 = vpop.permute.xlu0 %766
      %vm768 = vcmask 662528
      %v769 = vsel %vm768, %v761, %v763
      %v770 = vsel %vm768, %v763, %v765
      %v771 = vsel %vm768, %v765, %v767
      %v773 = vsel %vm437, %v640, 0
      %v776 = vsel %vm441, %v769, 0
      %v779 = vsel %vm441, %v770, 0
      %v782 = vsel %vm441, %v771, 0
      %v785 = vsel %vm441, %v767, 0
      %787 = vmatprep.subr.bf16.mxu0 %v779
      %788 = vmatpush1.bf16.msra.mxu0 %v776
      %789 = vmatprep.subr.bf16.mxu0 0
      %790 = vmatpush1.bf16.msra.mxu0 0
      %791 = vmatprep.subr.bf16.mxu0 0
      %792 = vmatpush1.bf16.msra.mxu0 0
      %793 = vmatprep.subr.bf16.mxu0 0
      %794 = vmatpush1.bf16.msra.mxu0 0
      %795 = vmatprep.subr.bf16.mxu0 0
      %796 = vmatpush1.bf16.msra.mxu0 0
      %797 = vmatprep.subr.bf16.mxu0 0
      %798 = vmatpush1.bf16.msra.mxu0 0
      %799 = vmatprep.subr.bf16.mxu0 0
      %800 = vmatpush1.bf16.msra.mxu0 0
      %801 = vmatprep.subr.bf16.mxu0 0
      %802 = vmatpush1.bf16.msra.mxu0 0
      %803 = vmatprep.subr.bf16.mxu0 0
      %804 = vmatpush1.bf16.msra.mxu0 0
      %805 = vmatprep.subr.bf16.mxu0 0
      %806 = vmatpush1.bf16.msra.mxu0 0
      %807 = vmatprep.subr.bf16.mxu0 0
      %808 = vmatpush1.bf16.msra.mxu0 0
      %809 = vmatprep.subr.bf16.mxu0 0
      %810 = vmatpush1.bf16.msra.mxu0 0
      %811 = vmatprep.subr.bf16.mxu0 0
      %812 = vmatpush1.bf16.msra.mxu0 0
      %813 = vmatprep.subr.bf16.mxu0 0
      %814 = vmatpush1.bf16.msra.mxu0 0
      %815 = vmatprep.subr.bf16.mxu0 0
      %816 = vmatpush1.bf16.msra.mxu0 0
      %817 = vmatprep.subr.bf16.mxu0 0
      %818 = vmatpush1.bf16.msra.mxu0 0
      %819 = vmatprep.mubr.bf16.mxu0 0
      %820 = vmatmul.mubr.bf16.gmra.mrb[0].mxu0 %v773
      %v821 = vpop.f32.mrb[0].mxu0
      %v822 = vadd.f32 %v713, %v821
      %v823 = vpop.f32.mrb[0].mxu0
      %v824 = vadd.f32 %v715, %v823
      %v825 = vpop.f32.mrb[0].mxu0
      %v826 = vpop.f32.mrb[0].mxu0
      %827 = vdwg.mxu0
      %828 = vmatprep.subr.bf16.mxu0 %v785
      %829 = vmatpush1.bf16.msra.mxu0 %v782
      %830 = vmatprep.subr.bf16.mxu0 0
      %831 = vmatpush1.bf16.msra.mxu0 0
      %832 = vmatprep.subr.bf16.mxu0 0
      %833 = vmatpush1.bf16.msra.mxu0 0
      %834 = vmatprep.subr.bf16.mxu0 0
      %835 = vmatpush1.bf16.msra.mxu0 0
      %836 = vmatprep.subr.bf16.mxu0 0
      %837 = vmatpush1.bf16.msra.mxu0 0
      %838 = vmatprep.subr.bf16.mxu0 0
      %839 = vmatpush1.bf16.msra.mxu0 0
      %840 = vmatprep.subr.bf16.mxu0 0
      %841 = vmatpush1.bf16.msra.mxu0 0
      %842 = vmatprep.subr.bf16.mxu0 0
      %843 = vmatpush1.bf16.msra.mxu0 0
      %844 = vmatprep.subr.bf16.mxu0 0
      %845 = vmatpush1.bf16.msra.mxu0 0
      %846 = vmatprep.subr.bf16.mxu0 0
      %847 = vmatpush1.bf16.msra.mxu0 0
      %848 = vmatprep.subr.bf16.mxu0 0
      %849 = vmatpush1.bf16.msra.mxu0 0
      %850 = vmatprep.subr.bf16.mxu0 0
      %851 = vmatpush1.bf16.msra.mxu0 0
      %852 = vmatprep.subr.bf16.mxu0 0
      %853 = vmatpush1.bf16.msra.mxu0 0
      %854 = vmatprep.subr.bf16.mxu0 0
      %855 = vmatpush1.bf16.msra.mxu0 0
      %856 = vmatprep.subr.bf16.mxu0 0
      %857 = vmatpush1.bf16.msra.mxu0 0
      %858 = vmatprep.subr.bf16.mxu0 0
      %859 = vmatpush1.bf16.msra.mxu0 0
      %860 = vmatprep.mubr.bf16.mxu0 0
      %861 = vmatmul.mubr.bf16.gmra.mrb[0].mxu0 %v773
      %v862 = vpop.f32.mrb[0].mxu0
      %v863 = vadd.f32 %v754, %v862
      %v864 = vpop.f32.mrb[0].mxu0
      %v865 = vadd.f32 %v756, %v864
      %v866 = vpop.f32.mrb[0].mxu0
      %v867 = vpop.f32.mrb[0].mxu0
      %868 = vdwg.mxu0
      %s869 = scalar_lea.vmem %s5, 8
      %v870 = vld [vmem:[%s869] sm:$0xf]
      %871 = vrot.lane.b32.xlu0 %v647, 79
      %v872 = vpop.permute.xlu0 %871
      %873 = vrot.lane.b32.xlu0 %v648, 79
      %v874 = vpop.permute.xlu0 %873
      %875 = vrot.lane.b32.xlu0 %v649, 79
      %v876 = vpop.permute.xlu0 %875
      %877 = vrot.lane.b32.xlu0 %v650, 79
      %v878 = vpop.permute.xlu0 %877
      %vm879 = vcmask 646144
      %v880 = vsel %vm879, %v872, %v874
      %v881 = vsel %vm879, %v874, %v876
      %v882 = vsel %vm879, %v876, %v878
      %v884 = vsel %vm437, %v870, 0
      %v887 = vsel %vm441, %v880, 0
      %v890 = vsel %vm441, %v881, 0
      %v893 = vsel %vm441, %v882, 0
      %v896 = vsel %vm441, %v878, 0
      %898 = vmatprep.subr.bf16.mxu0 %v890
      %899 = vmatpush1.bf16.msra.mxu0 %v887
      %900 = vmatprep.subr.bf16.mxu0 0
      %901 = vmatpush1.bf16.msra.mxu0 0
      %902 = vmatprep.subr.bf16.mxu0 0
      %903 = vmatpush1.bf16.msra.mxu0 0
      %904 = vmatprep.subr.bf16.mxu0 0
      %905 = vmatpush1.bf16.msra.mxu0 0
      %906 = vmatprep.subr.bf16.mxu0 0
      %907 = vmatpush1.bf16.msra.mxu0 0
      %908 = vmatprep.subr.bf16.mxu0 0
      %909 = vmatpush1.bf16.msra.mxu0 0
      %910 = vmatprep.subr.bf16.mxu0 0
      %911 = vmatpush1.bf16.msra.mxu0 0
      %912 = vmatprep.subr.bf16.mxu0 0
      %913 = vmatpush1.bf16.msra.mxu0 0
      %914 = vmatprep.subr.bf16.mxu0 0
      %915 = vmatpush1.bf16.msra.mxu0 0
      %916 = vmatprep.subr.bf16.mxu0 0
      %917 = vmatpush1.bf16.msra.mxu0 0
      %918 = vmatprep.subr.bf16.mxu0 0
      %919 = vmatpush1.bf16.msra.mxu0 0
      %920 = vmatprep.subr.bf16.mxu0 0
      %921 = vmatpush1.bf16.msra.mxu0 0
      %922 = vmatprep.subr.bf16.mxu0 0
      %923 = vmatpush1.bf16.msra.mxu0 0
      %924 = vmatprep.subr.bf16.mxu0 0
      %925 = vmatpush1.bf16.msra.mxu0 0
      %926 = vmatprep.subr.bf16.mxu0 0
      %927 = vmatpush1.bf16.msra.mxu0 0
      %928 = vmatprep.subr.bf16.mxu0 0
      %929 = vmatpush1.bf16.msra.mxu0 0
      %930 = vmatprep.mubr.bf16.mxu0 0
      %931 = vmatmul.mubr.bf16.gmra.mrb[0].mxu0 %v884
      %v932 = vpop.f32.mrb[0].mxu0
      %v933 = vadd.f32 0.0, %v932
      %v934 = vpop.f32.mrb[0].mxu0
      %v935 = vadd.f32 0.0, %v934
      %v936 = vpop.f32.mrb[0].mxu0
      %v937 = vpop.f32.mrb[0].mxu0
      %938 = vdwg.mxu0
      %939 = vmatprep.subr.bf16.mxu0 %v896
      %940 = vmatpush1.bf16.msra.mxu0 %v893
      %941 = vmatprep.subr.bf16.mxu0 0
      %942 = vmatpush1.bf16.msra.mxu0 0
      %943 = vmatprep.subr.bf16.mxu0 0
      %944 = vmatpush1.bf16.msra.mxu0 0
      %945 = vmatprep.subr.bf16.mxu0 0
      %946 = vmatpush1.bf16.msra.mxu0 0
      %947 = vmatprep.subr.bf16.mxu0 0
      %948 = vmatpush1.bf16.msra.mxu0 0
      %949 = vmatprep.subr.bf16.mxu0 0
      %950 = vmatpush1.bf16.msra.mxu0 0
      %951 = vmatprep.subr.bf16.mxu0 0
      %952 = vmatpush1.bf16.msra.mxu0 0
      %953 = vmatprep.subr.bf16.mxu0 0
      %954 = vmatpush1.bf16.msra.mxu0 0
      %955 = vmatprep.subr.bf16.mxu0 0
      %956 = vmatpush1.bf16.msra.mxu0 0
      %957 = vmatprep.subr.bf16.mxu0 0
      %958 = vmatpush1.bf16.msra.mxu0 0
      %959 = vmatprep.subr.bf16.mxu0 0
      %960 = vmatpush1.bf16.msra.mxu0 0
      %961 = vmatprep.subr.bf16.mxu0 0
      %962 = vmatpush1.bf16.msra.mxu0 0
      %963 = vmatprep.subr.bf16.mxu0 0
      %964 = vmatpush1.bf16.msra.mxu0 0
      %965 = vmatprep.subr.bf16.mxu0 0
      %966 = vmatpush1.bf16.msra.mxu0 0
      %967 = vmatprep.subr.bf16.mxu0 0
      %968 = vmatpush1.bf16.msra.mxu0 0
      %969 = vmatprep.subr.bf16.mxu0 0
      %970 = vmatpush1.bf16.msra.mxu0 0
      %971 = vmatprep.mubr.bf16.mxu0 0
      %972 = vmatmul.mubr.bf16.gmra.mrb[0].mxu0 %v884
      %v973 = vpop.f32.mrb[0].mxu0
      %v974 = vadd.f32 0.0, %v973
      %v975 = vpop.f32.mrb[0].mxu0
      %v976 = vadd.f32 0.0, %v975
      %v977 = vpop.f32.mrb[0].mxu0
      %v978 = vpop.f32.mrb[0].mxu0
      %979 = vdwg.mxu0
      %v980 = vadd.f32 %v822, %v933
      %v981 = vadd.f32 %v824, %v935
      %v982 = vadd.f32 %v863, %v974
      %v983 = vadd.f32 %v865, %v976
      %s984 = scalar_lea.vmem %s5, 12
      %v985 = vld [vmem:[%s984] sm:$0xf]
      %986 = vrot.lane.b32.xlu0 %v647, 57
      %v987 = vpop.permute.xlu0 %986
      %988 = vrot.lane.b32.xlu0 %v648, 57
      %v989 = vpop.permute.xlu0 %988
      %990 = vrot.lane.b32.xlu0 %v649, 57
      %v991 = vpop.permute.xlu0 %990
      %992 = vrot.lane.b32.xlu0 %v650, 57
      %v993 = vpop.permute.xlu0 %992
      %vm994 = vcmask 465920
      %v995 = vsel %vm994, %v987, %v989
      %v996 = vsel %vm994, %v989, %v991
      %v997 = vsel %vm994, %v991, %v993
      %v999 = vsel %vm437, %v985, 0
      %v1002 = vsel %vm441, %v995, 0
      %v1005 = vsel %vm441, %v996, 0
      %v1008 = vsel %vm441, %v997, 0
      %v1011 = vsel %vm441, %v993, 0
      %1013 = vmatprep.subr.bf16.mxu0 %v1005
      %1014 = vmatpush1.bf16.msra.mxu0 %v1002
      %1015 = vmatprep.subr.bf16.mxu0 0
      %1016 = vmatpush1.bf16.msra.mxu0 0
      %1017 = vmatprep.subr.bf16.mxu0 0
      %1018 = vmatpush1.bf16.msra.mxu0 0
      %1019 = vmatprep.subr.bf16.mxu0 0
      %1020 = vmatpush1.bf16.msra.mxu0 0
      %1021 = vmatprep.subr.bf16.mxu0 0
      %1022 = vmatpush1.bf16.msra.mxu0 0
      %1023 = vmatprep.subr.bf16.mxu0 0
      %1024 = vmatpush1.bf16.msra.mxu0 0
      %1025 = vmatprep.subr.bf16.mxu0 0
      %1026 = vmatpush1.bf16.msra.mxu0 0
      %1027 = vmatprep.subr.bf16.mxu0 0
      %1028 = vmatpush1.bf16.msra.mxu0 0
      %1029 = vmatprep.subr.bf16.mxu0 0
      %1030 = vmatpush1.bf16.msra.mxu0 0
      %1031 = vmatprep.subr.bf16.mxu0 0
      %1032 = vmatpush1.bf16.msra.mxu0 0
      %1033 = vmatprep.subr.bf16.mxu0 0
      %1034 = vmatpush1.bf16.msra.mxu0 0
      %1035 = vmatprep.subr.bf16.mxu0 0
      %1036 = vmatpush1.bf16.msra.mxu0 0
      %1037 = vmatprep.subr.bf16.mxu0 0
      %1038 = vmatpush1.bf16.msra.mxu0 0
      %1039 = vmatprep.subr.bf16.mxu0 0
      %1040 = vmatpush1.bf16.msra.mxu0 0
      %1041 = vmatprep.subr.bf16.mxu0 0
      %1042 = vmatpush1.bf16.msra.mxu0 0
      %1043 = vmatprep.subr.bf16.mxu0 0
      %1044 = vmatpush1.bf16.msra.mxu0 0
      %1045 = vmatprep.mubr.bf16.mxu0 0
      %1046 = vmatmul.mubr.bf16.gmra.mrb[0].mxu0 %v999
      %v1047 = vpop.f32.mrb[0].mxu0
      %v1048 = vadd.f32 0.0, %v1047
      %v1049 = vpop.f32.mrb[0].mxu0
      %v1050 = vadd.f32 0.0, %v1049
      %v1051 = vpop.f32.mrb[0].mxu0
      %v1052 = vpop.f32.mrb[0].mxu0
      %1053 = vdwg.mxu0
      %1054 = vmatprep.subr.bf16.mxu0 %v1011
      %1055 = vmatpush1.bf16.msra.mxu0 %v1008
      %1056 = vmatprep.subr.bf16.mxu0 0
      %1057 = vmatpush1.bf16.msra.mxu0 0
      %1058 = vmatprep.subr.bf16.mxu0 0
      %1059 = vmatpush1.bf16.msra.mxu0 0
      %1060 = vmatprep.subr.bf16.mxu0 0
      %1061 = vmatpush1.bf16.msra.mxu0 0
      %1062 = vmatprep.subr.bf16.mxu0 0
      %1063 = vmatpush1.bf16.msra.mxu0 0
      %1064 = vmatprep.subr.bf16.mxu0 0
      %1065 = vmatpush1.bf16.msra.mxu0 0
      %1066 = vmatprep.subr.bf16.mxu0 0
      %1067 = vmatpush1.bf16.msra.mxu0 0
      %1068 = vmatprep.subr.bf16.mxu0 0
      %1069 = vmatpush1.bf16.msra.mxu0 0
      %1070 = vmatprep.subr.bf16.mxu0 0
      %1071 = vmatpush1.bf16.msra.mxu0 0
      %1072 = vmatprep.subr.bf16.mxu0 0
      %1073 = vmatpush1.bf16.msra.mxu0 0
      %1074 = vmatprep.subr.bf16.mxu0 0
      %1075 = vmatpush1.bf16.msra.mxu0 0
      %1076 = vmatprep.subr.bf16.mxu0 0
      %1077 = vmatpush1.bf16.msra.mxu0 0
      %1078 = vmatprep.subr.bf16.mxu0 0
      %1079 = vmatpush1.bf16.msra.mxu0 0
      %1080 = vmatprep.subr.bf16.mxu0 0
      %1081 = vmatpush1.bf16.msra.mxu0 0
      %1082 = vmatprep.subr.bf16.mxu0 0
      %1083 = vmatpush1.bf16.msra.mxu0 0
      %1084 = vmatprep.subr.bf16.mxu0 0
      %1085 = vmatpush1.bf16.msra.mxu0 0
      %1086 = vmatprep.mubr.bf16.mxu0 0
      %1087 = vmatmul.mubr.bf16.gmra.mrb[0].mxu0 %v999
      %v1088 = vpop.f32.mrb[0].mxu0
      %v1089 = vadd.f32 0.0, %v1088
      %v1090 = vpop.f32.mrb[0].mxu0
      %v1091 = vadd.f32 0.0, %v1090
      %v1092 = vpop.f32.mrb[0].mxu0
      %v1093 = vpop.f32.mrb[0].mxu0
      %1094 = vdwg.mxu0
      %v1095 = vadd.f32 %v980, %v1048
      %v1096 = vadd.f32 %v981, %v1050
      %v1097 = vadd.f32 %v982, %v1089
      %v1098 = vadd.f32 %v983, %v1091
      %s1099 = scalar_lea.vmem %s5, 16
      %v1100 = vld [vmem:[%s1099] sm:$0xf]
      %1101 = vrot.lane.b32.xlu0 %v647, 56
      %v1102 = vpop.permute.xlu0 %1101
      %1103 = vrot.lane.b32.xlu0 %v648, 56
      %v1104 = vpop.permute.xlu0 %1103
      %1105 = vrot.lane.b32.xlu0 %v649, 56
      %v1106 = vpop.permute.xlu0 %1105
      %1107 = vrot.lane.b32.xlu0 %v650, 56
      %v1108 = vpop.permute.xlu0 %1107
      %vm1109 = vcmask 457728
      %v1110 = vsel %vm1109, %v1102, %v1104
      %v1111 = vsel %vm1109, %v1104, %v1106
      %v1112 = vsel %vm1109, %v1106, %v1108
      %v1114 = vsel %vm437, %v1100, 0
      %v1117 = vsel %vm441, %v1110, 0
      %v1120 = vsel %vm441, %v1111, 0
      %v1123 = vsel %vm441, %v1112, 0
      %v1126 = vsel %vm441, %v1108, 0
      %1128 = vmatprep.subr.bf16.mxu0 %v1120
      %1129 = vmatpush1.bf16.msra.mxu0 %v1117
      %1130 = vmatprep.subr.bf16.mxu0 0
      %1131 = vmatpush1.bf16.msra.mxu0 0
      %1132 = vmatprep.subr.bf16.mxu0 0
      %1133 = vmatpush1.bf16.msra.mxu0 0
      %1134 = vmatprep.subr.bf16.mxu0 0
      %1135 = vmatpush1.bf16.msra.mxu0 0
      %1136 = vmatprep.subr.bf16.mxu0 0
      %1137 = vmatpush1.bf16.msra.mxu0 0
      %1138 = vmatprep.subr.bf16.mxu0 0
      %1139 = vmatpush1.bf16.msra.mxu0 0
      %1140 = vmatprep.subr.bf16.mxu0 0
      %1141 = vmatpush1.bf16.msra.mxu0 0
      %1142 = vmatprep.subr.bf16.mxu0 0
      %1143 = vmatpush1.bf16.msra.mxu0 0
      %1144 = vmatprep.subr.bf16.mxu0 0
      %1145 = vmatpush1.bf16.msra.mxu0 0
      %1146 = vmatprep.subr.bf16.mxu0 0
      %1147 = vmatpush1.bf16.msra.mxu0 0
      %1148 = vmatprep.subr.bf16.mxu0 0
      %1149 = vmatpush1.bf16.msra.mxu0 0
      %1150 = vmatprep.subr.bf16.mxu0 0
      %1151 = vmatpush1.bf16.msra.mxu0 0
      %1152 = vmatprep.subr.bf16.mxu0 0
      %1153 = vmatpush1.bf16.msra.mxu0 0
      %1154 = vmatprep.subr.bf16.mxu0 0
      %1155 = vmatpush1.bf16.msra.mxu0 0
      %1156 = vmatprep.subr.bf16.mxu0 0
      %1157 = vmatpush1.bf16.msra.mxu0 0
      %1158 = vmatprep.subr.bf16.mxu0 0
      %1159 = vmatpush1.bf16.msra.mxu0 0
      %1160 = vmatprep.mubr.bf16.mxu0 0
      %1161 = vmatmul.mubr.bf16.gmra.mrb[0].mxu0 %v1114
      %v1162 = vpop.f32.mrb[0].mxu0
      %v1163 = vadd.f32 0.0, %v1162
      %v1164 = vpop.f32.mrb[0].mxu0
      %v1165 = vadd.f32 0.0, %v1164
      %v1166 = vpop.f32.mrb[0].mxu0
      %v1167 = vpop.f32.mrb[0].mxu0
      %1168 = vdwg.mxu0
      %1169 = vmatprep.subr.bf16.mxu0 %v1126
      %1170 = vmatpush1.bf16.msra.mxu0 %v1123
      %1171 = vmatprep.subr.bf16.mxu0 0
      %1172 = vmatpush1.bf16.msra.mxu0 0
      %1173 = vmatprep.subr.bf16.mxu0 0
      %1174 = vmatpush1.bf16.msra.mxu0 0
      %1175 = vmatprep.subr.bf16.mxu0 0
      %1176 = vmatpush1.bf16.msra.mxu0 0
      %1177 = vmatprep.subr.bf16.mxu0 0
      %1178 = vmatpush1.bf16.msra.mxu0 0
      %1179 = vmatprep.subr.bf16.mxu0 0
      %1180 = vmatpush1.bf16.msra.mxu0 0
      %1181 = vmatprep.subr.bf16.mxu0 0
      %1182 = vmatpush1.bf16.msra.mxu0 0
      %1183 = vmatprep.subr.bf16.mxu0 0
      %1184 = vmatpush1.bf16.msra.mxu0 0
      %1185 = vmatprep.subr.bf16.mxu0 0
      %1186 = vmatpush1.bf16.msra.mxu0 0
      %1187 = vmatprep.subr.bf16.mxu0 0
      %1188 = vmatpush1.bf16.msra.mxu0 0
      %1189 = vmatprep.subr.bf16.mxu0 0
      %1190 = vmatpush1.bf16.msra.mxu0 0
      %1191 = vmatprep.subr.bf16.mxu0 0
      %1192 = vmatpush1.bf16.msra.mxu0 0
      %1193 = vmatprep.subr.bf16.mxu0 0
      %1194 = vmatpush1.bf16.msra.mxu0 0
      %1195 = vmatprep.subr.bf16.mxu0 0
      %1196 = vmatpush1.bf16.msra.mxu0 0
      %1197 = vmatprep.subr.bf16.mxu0 0
      %1198 = vmatpush1.bf16.msra.mxu0 0
      %1199 = vmatprep.subr.bf16.mxu0 0
      %1200 = vmatpush1.bf16.msra.mxu0 0
      %1201 = vmatprep.mubr.bf16.mxu0 0
      %1202 = vmatmul.mubr.bf16.gmra.mrb[0].mxu0 %v1114
      %v1203 = vpop.f32.mrb[0].mxu0
      %v1204 = vadd.f32 0.0, %v1203
      %v1205 = vpop.f32.mrb[0].mxu0
      %v1206 = vadd.f32 0.0, %v1205
      %v1207 = vpop.f32.mrb[0].mxu0
      %v1208 = vpop.f32.mrb[0].mxu0
      %1209 = vdwg.mxu0
      %v1210 = vadd.f32 %v1095, %v1163
      %v1211 = vadd.f32 %v1096, %v1165
      %v1212 = vadd.f32 %v1097, %v1204
      %v1213 = vadd.f32 %v1098, %v1206
      %s1214 = scalar_lea.vmem %s5, 20
      %v1215 = vld [vmem:[%s1214] sm:$0xf]
      %1216 = vrot.lane.b32.xlu0 %v647, 55
      %v1217 = vpop.permute.xlu0 %1216
      %1218 = vrot.lane.b32.xlu0 %v648, 55
      %v1219 = vpop.permute.xlu0 %1218
      %1220 = vrot.lane.b32.xlu0 %v649, 55
      %v1221 = vpop.permute.xlu0 %1220
      %1222 = vrot.lane.b32.xlu0 %v650, 55
      %v1223 = vpop.permute.xlu0 %1222
      %vm1224 = vcmask 449536
      %v1225 = vsel %vm1224, %v1217, %v1219
      %v1226 = vsel %vm1224, %v1219, %v1221
      %v1227 = vsel %vm1224, %v1221, %v1223
      %v1229 = vsel %vm437, %v1215, 0
      %v1232 = vsel %vm441, %v1225, 0
      %v1235 = vsel %vm441, %v1226, 0
      %v1238 = vsel %vm441, %v1227, 0
      %v1241 = vsel %vm441, %v1223, 0
      %1243 = vmatprep.subr.bf16.mxu0 %v1235
      %1244 = vmatpush1.bf16.msra.mxu0 %v1232
      %1245 = vmatprep.subr.bf16.mxu0 0
      %1246 = vmatpush1.bf16.msra.mxu0 0
      %1247 = vmatprep.subr.bf16.mxu0 0
      %1248 = vmatpush1.bf16.msra.mxu0 0
      %1249 = vmatprep.subr.bf16.mxu0 0
      %1250 = vmatpush1.bf16.msra.mxu0 0
      %1251 = vmatprep.subr.bf16.mxu0 0
      %1252 = vmatpush1.bf16.msra.mxu0 0
      %1253 = vmatprep.subr.bf16.mxu0 0
      %1254 = vmatpush1.bf16.msra.mxu0 0
      %1255 = vmatprep.subr.bf16.mxu0 0
      %1256 = vmatpush1.bf16.msra.mxu0 0
      %1257 = vmatprep.subr.bf16.mxu0 0
      %1258 = vmatpush1.bf16.msra.mxu0 0
      %1259 = vmatprep.subr.bf16.mxu0 0
      %1260 = vmatpush1.bf16.msra.mxu0 0
      %1261 = vmatprep.subr.bf16.mxu0 0
      %1262 = vmatpush1.bf16.msra.mxu0 0
      %1263 = vmatprep.subr.bf16.mxu0 0
      %1264 = vmatpush1.bf16.msra.mxu0 0
      %1265 = vmatprep.subr.bf16.mxu0 0
      %1266 = vmatpush1.bf16.msra.mxu0 0
      %1267 = vmatprep.subr.bf16.mxu0 0
      %1268 = vmatpush1.bf16.msra.mxu0 0
      %1269 = vmatprep.subr.bf16.mxu0 0
      %1270 = vmatpush1.bf16.msra.mxu0 0
      %1271 = vmatprep.subr.bf16.mxu0 0
      %1272 = vmatpush1.bf16.msra.mxu0 0
      %1273 = vmatprep.subr.bf16.mxu0 0
      %1274 = vmatpush1.bf16.msra.mxu0 0
      %1275 = vmatprep.mubr.bf16.mxu0 0
      %1276 = vmatmul.mubr.bf16.gmra.mrb[0].mxu0 %v1229
      %v1277 = vpop.f32.mrb[0].mxu0
      %v1278 = vadd.f32 0.0, %v1277
      %v1279 = vpop.f32.mrb[0].mxu0
      %v1280 = vadd.f32 0.0, %v1279
      %v1281 = vpop.f32.mrb[0].mxu0
      %v1282 = vpop.f32.mrb[0].mxu0
      %1283 = vdwg.mxu0
      %1284 = vmatprep.subr.bf16.mxu0 %v1241
      %1285 = vmatpush1.bf16.msra.mxu0 %v1238
      %1286 = vmatprep.subr.bf16.mxu0 0
      %1287 = vmatpush1.bf16.msra.mxu0 0
      %1288 = vmatprep.subr.bf16.mxu0 0
      %1289 = vmatpush1.bf16.msra.mxu0 0
      %1290 = vmatprep.subr.bf16.mxu0 0
      %1291 = vmatpush1.bf16.msra.mxu0 0
      %1292 = vmatprep.subr.bf16.mxu0 0
      %1293 = vmatpush1.bf16.msra.mxu0 0
      %1294 = vmatprep.subr.bf16.mxu0 0
      %1295 = vmatpush1.bf16.msra.mxu0 0
      %1296 = vmatprep.subr.bf16.mxu0 0
      %1297 = vmatpush1.bf16.msra.mxu0 0
      %1298 = vmatprep.subr.bf16.mxu0 0
      %1299 = vmatpush1.bf16.msra.mxu0 0
      %1300 = vmatprep.subr.bf16.mxu0 0
      %1301 = vmatpush1.bf16.msra.mxu0 0
      %1302 = vmatprep.subr.bf16.mxu0 0
      %1303 = vmatpush1.bf16.msra.mxu0 0
      %1304 = vmatprep.subr.bf16.mxu0 0
      %1305 = vmatpush1.bf16.msra.mxu0 0
      %1306 = vmatprep.subr.bf16.mxu0 0
      %1307 = vmatpush1.bf16.msra.mxu0 0
      %1308 = vmatprep.subr.bf16.mxu0 0
      %1309 = vmatpush1.bf16.msra.mxu0 0
      %1310 = vmatprep.subr.bf16.mxu0 0
      %1311 = vmatpush1.bf16.msra.mxu0 0
      %1312 = vmatprep.subr.bf16.mxu0 0
      %1313 = vmatpush1.bf16.msra.mxu0 0
      %1314 = vmatprep.subr.bf16.mxu0 0
      %1315 = vmatpush1.bf16.msra.mxu0 0
      %1316 = vmatprep.mubr.bf16.mxu0 0
      %1317 = vmatmul.mubr.bf16.gmra.mrb[0].mxu0 %v1229
      %v1318 = vpop.f32.mrb[0].mxu0
      %v1319 = vadd.f32 0.0, %v1318
      %v1320 = vpop.f32.mrb[0].mxu0
      %v1321 = vadd.f32 0.0, %v1320
      %v1322 = vpop.f32.mrb[0].mxu0
      %v1323 = vpop.f32.mrb[0].mxu0
      %1324 = vdwg.mxu0
      %v1325 = vadd.f32 %v1210, %v1278
      %v1326 = vadd.f32 %v1211, %v1280
      %v1327 = vadd.f32 %v1212, %v1319
      %v1328 = vadd.f32 %v1213, %v1321
      %s1329 = scalar_lea.vmem %s5, 24
      %v1330 = vld [vmem:[%s1329] sm:$0xf]
      %v1332 = vrot.slane %v629, 2
      %1333 = vrot.lane.b32.xlu0 %v647, 33
      %v1334 = vpop.permute.xlu0 %1333
      %1335 = vrot.lane.b32.xlu0 %v648, 33
      %v1336 = vpop.permute.xlu0 %1335
      %1337 = vrot.lane.b32.xlu0 %v649, 33
      %v1338 = vpop.permute.xlu0 %1337
      %1339 = vrot.lane.b32.xlu0 %v650, 33
      %v1340 = vpop.permute.xlu0 %1339
      %1341 = vrot.lane.b32.xlu0 %v1332, 33
      %v1342 = vpop.permute.xlu0 %1341
      %vm1343 = vcmask 269312
      %v1344 = vsel %vm1343, %v1334, %v1336
      %v1345 = vsel %vm1343, %v1336, %v1338
      %v1346 = vsel %vm1343, %v1338, %v1340
      %v1347 = vsel %vm1343, %v1340, %v1342
      %v1349 = vsel %vm437, %v1330, 0
      %v1352 = vsel %vm441, %v1344, 0
      %v1355 = vsel %vm441, %v1345, 0
      %v1358 = vsel %vm441, %v1346, 0
      %v1361 = vsel %vm441, %v1347, 0
      %1363 = vmatprep.subr.bf16.mxu0 %v1355
      %1364 = vmatpush1.bf16.msra.mxu0 %v1352
      %1365 = vmatprep.subr.bf16.mxu0 0
      %1366 = vmatpush1.bf16.msra.mxu0 0
      %1367 = vmatprep.subr.bf16.mxu0 0
      %1368 = vmatpush1.bf16.msra.mxu0 0
      %1369 = vmatprep.subr.bf16.mxu0 0
      %1370 = vmatpush1.bf16.msra.mxu0 0
      %1371 = vmatprep.subr.bf16.mxu0 0
      %1372 = vmatpush1.bf16.msra.mxu0 0
      %1373 = vmatprep.subr.bf16.mxu0 0
      %1374 = vmatpush1.bf16.msra.mxu0 0
      %1375 = vmatprep.subr.bf16.mxu0 0
      %1376 = vmatpush1.bf16.msra.mxu0 0
      %1377 = vmatprep.subr.bf16.mxu0 0
      %1378 = vmatpush1.bf16.msra.mxu0 0
      %1379 = vmatprep.subr.bf16.mxu0 0
      %1380 = vmatpush1.bf16.msra.mxu0 0
      %1381 = vmatprep.subr.bf16.mxu0 0
      %1382 = vmatpush1.bf16.msra.mxu0 0
      %1383 = vmatprep.subr.bf16.mxu0 0
      %1384 = vmatpush1.bf16.msra.mxu0 0
      %1385 = vmatprep.subr.bf16.mxu0 0
      %1386 = vmatpush1.bf16.msra.mxu0 0
      %1387 = vmatprep.subr.bf16.mxu0 0
      %1388 = vmatpush1.bf16.msra.mxu0 0
      %1389 = vmatprep.subr.bf16.mxu0 0
      %1390 = vmatpush1.bf16.msra.mxu0 0
      %1391 = vmatprep.subr.bf16.mxu0 0
      %1392 = vmatpush1.bf16.msra.mxu0 0
      %1393 = vmatprep.subr.bf16.mxu0 0
      %1394 = vmatpush1.bf16.msra.mxu0 0
      %1395 = vmatprep.mubr.bf16.mxu0 0
      %1396 = vmatmul.mubr.bf16.gmra.mrb[0].mxu0 %v1349
      %v1397 = vpop.f32.mrb[0].mxu0
      %v1398 = vadd.f32 0.0, %v1397
      %v1399 = vpop.f32.mrb[0].mxu0
      %v1400 = vadd.f32 0.0, %v1399
      %v1401 = vpop.f32.mrb[0].mxu0
      %v1402 = vpop.f32.mrb[0].mxu0
      %1403 = vdwg.mxu0
      %1404 = vmatprep.subr.bf16.mxu0 %v1361
      %1405 = vmatpush1.bf16.msra.mxu0 %v1358
      %1406 = vmatprep.subr.bf16.mxu0 0
      %1407 = vmatpush1.bf16.msra.mxu0 0
      %1408 = vmatprep.subr.bf16.mxu0 0
      %1409 = vmatpush1.bf16.msra.mxu0 0
      %1410 = vmatprep.subr.bf16.mxu0 0
      %1411 = vmatpush1.bf16.msra.mxu0 0
      %1412 = vmatprep.subr.bf16.mxu0 0
      %1413 = vmatpush1.bf16.msra.mxu0 0
      %1414 = vmatprep.subr.bf16.mxu0 0
      %1415 = vmatpush1.bf16.msra.mxu0 0
      %1416 = vmatprep.subr.bf16.mxu0 0
      %1417 = vmatpush1.bf16.msra.mxu0 0
      %1418 = vmatprep.subr.bf16.mxu0 0
      %1419 = vmatpush1.bf16.msra.mxu0 0
      %1420 = vmatprep.subr.bf16.mxu0 0
      %1421 = vmatpush1.bf16.msra.mxu0 0
      %1422 = vmatprep.subr.bf16.mxu0 0
      %1423 = vmatpush1.bf16.msra.mxu0 0
      %1424 = vmatprep.subr.bf16.mxu0 0
      %1425 = vmatpush1.bf16.msra.mxu0 0
      %1426 = vmatprep.subr.bf16.mxu0 0
      %1427 = vmatpush1.bf16.msra.mxu0 0
      %1428 = vmatprep.subr.bf16.mxu0 0
      %1429 = vmatpush1.bf16.msra.mxu0 0
      %1430 = vmatprep.subr.bf16.mxu0 0
      %1431 = vmatpush1.bf16.msra.mxu0 0
      %1432 = vmatprep.subr.bf16.mxu0 0
      %1433 = vmatpush1.bf16.msra.mxu0 0
      %1434 = vmatprep.subr.bf16.mxu0 0
      %1435 = vmatpush1.bf16.msra.mxu0 0
      %1436 = vmatprep.mubr.bf16.mxu0 0
      %1437 = vmatmul.mubr.bf16.gmra.mrb[0].mxu0 %v1349
      %v1438 = vpop.f32.mrb[0].mxu0
      %v1439 = vadd.f32 0.0, %v1438
      %v1440 = vpop.f32.mrb[0].mxu0
      %v1441 = vadd.f32 0.0, %v1440
      %v1442 = vpop.f32.mrb[0].mxu0
      %v1443 = vpop.f32.mrb[0].mxu0
      %1444 = vdwg.mxu0
      %v1445 = vadd.f32 %v1325, %v1398
      %v1446 = vadd.f32 %v1326, %v1400
      %v1447 = vadd.f32 %v1327, %v1439
      %v1448 = vadd.f32 %v1328, %v1441
      %s1449 = scalar_lea.vmem %s5, 28
      %v1450 = vld [vmem:[%s1449] sm:$0xf]
      %1451 = vrot.lane.b32.xlu0 %v647, 32
      %v1452 = vpop.permute.xlu0 %1451
      %1453 = vrot.lane.b32.xlu0 %v648, 32
      %v1454 = vpop.permute.xlu0 %1453
      %1455 = vrot.lane.b32.xlu0 %v649, 32
      %v1456 = vpop.permute.xlu0 %1455
      %1457 = vrot.lane.b32.xlu0 %v650, 32
      %v1458 = vpop.permute.xlu0 %1457
      %1459 = vrot.lane.b32.xlu0 %v1332, 32
      %v1460 = vpop.permute.xlu0 %1459
      %vm1461 = vcmask 261120
      %v1462 = vsel %vm1461, %v1452, %v1454
      %v1463 = vsel %vm1461, %v1454, %v1456
      %v1464 = vsel %vm1461, %v1456, %v1458
      %v1465 = vsel %vm1461, %v1458, %v1460
      %v1467 = vsel %vm437, %v1450, 0
      %v1470 = vsel %vm441, %v1462, 0
      %v1473 = vsel %vm441, %v1463, 0
      %v1476 = vsel %vm441, %v1464, 0
      %v1479 = vsel %vm441, %v1465, 0
      %1481 = vmatprep.subr.bf16.mxu0 %v1473
      %1482 = vmatpush1.bf16.msra.mxu0 %v1470
      %1483 = vmatprep.subr.bf16.mxu0 0
      %1484 = vmatpush1.bf16.msra.mxu0 0
      %1485 = vmatprep.subr.bf16.mxu0 0
      %1486 = vmatpush1.bf16.msra.mxu0 0
      %1487 = vmatprep.subr.bf16.mxu0 0
      %1488 = vmatpush1.bf16.msra.mxu0 0
      %1489 = vmatprep.subr.bf16.mxu0 0
      %1490 = vmatpush1.bf16.msra.mxu0 0
      %1491 = vmatprep.subr.bf16.mxu0 0
      %1492 = vmatpush1.bf16.msra.mxu0 0
      %1493 = vmatprep.subr.bf16.mxu0 0
      %1494 = vmatpush1.bf16.msra.mxu0 0
      %1495 = vmatprep.subr.bf16.mxu0 0
      %1496 = vmatpush1.bf16.msra.mxu0 0
      %1497 = vmatprep.subr.bf16.mxu0 0
      %1498 = vmatpush1.bf16.msra.mxu0 0
      %1499 = vmatprep.subr.bf16.mxu0 0
      %1500 = vmatpush1.bf16.msra.mxu0 0
      %1501 = vmatprep.subr.bf16.mxu0 0
      %1502 = vmatpush1.bf16.msra.mxu0 0
      %1503 = vmatprep.subr.bf16.mxu0 0
      %1504 = vmatpush1.bf16.msra.mxu0 0
      %1505 = vmatprep.subr.bf16.mxu0 0
      %1506 = vmatpush1.bf16.msra.mxu0 0
      %1507 = vmatprep.subr.bf16.mxu0 0
      %1508 = vmatpush1.bf16.msra.mxu0 0
      %1509 = vmatprep.subr.bf16.mxu0 0
      %1510 = vmatpush1.bf16.msra.mxu0 0
      %1511 = vmatprep.subr.bf16.mxu0 0
      %1512 = vmatpush1.bf16.msra.mxu0 0
      %1513 = vmatprep.mubr.bf16.mxu0 0
      %1514 = vmatmul.mubr.bf16.gmra.mrb[0].mxu0 %v1467
      %v1515 = vpop.f32.mrb[0].mxu0
      %v1516 = vadd.f32 0.0, %v1515
      %v1517 = vpop.f32.mrb[0].mxu0
      %v1518 = vadd.f32 0.0, %v1517
      %v1519 = vpop.f32.mrb[0].mxu0
      %v1520 = vpop.f32.mrb[0].mxu0
      %1521 = vdwg.mxu0
      %1522 = vmatprep.subr.bf16.mxu0 %v1479
      %1523 = vmatpush1.bf16.msra.mxu0 %v1476
      %1524 = vmatprep.subr.bf16.mxu0 0
      %1525 = vmatpush1.bf16.msra.mxu0 0
      %1526 = vmatprep.subr.bf16.mxu0 0
      %1527 = vmatpush1.bf16.msra.mxu0 0
      %1528 = vmatprep.subr.bf16.mxu0 0
      %1529 = vmatpush1.bf16.msra.mxu0 0
      %1530 = vmatprep.subr.bf16.mxu0 0
      %1531 = vmatpush1.bf16.msra.mxu0 0
      %1532 = vmatprep.subr.bf16.mxu0 0
      %1533 = vmatpush1.bf16.msra.mxu0 0
      %1534 = vmatprep.subr.bf16.mxu0 0
      %1535 = vmatpush1.bf16.msra.mxu0 0
      %1536 = vmatprep.subr.bf16.mxu0 0
      %1537 = vmatpush1.bf16.msra.mxu0 0
      %1538 = vmatprep.subr.bf16.mxu0 0
      %1539 = vmatpush1.bf16.msra.mxu0 0
      %1540 = vmatprep.subr.bf16.mxu0 0
      %1541 = vmatpush1.bf16.msra.mxu0 0
      %1542 = vmatprep.subr.bf16.mxu0 0
      %1543 = vmatpush1.bf16.msra.mxu0 0
      %1544 = vmatprep.subr.bf16.mxu0 0
      %1545 = vmatpush1.bf16.msra.mxu0 0
      %1546 = vmatprep.subr.bf16.mxu0 0
      %1547 = vmatpush1.bf16.msra.mxu0 0
      %1548 = vmatprep.subr.bf16.mxu0 0
      %1549 = vmatpush1.bf16.msra.mxu0 0
      %1550 = vmatprep.subr.bf16.mxu0 0
      %1551 = vmatpush1.bf16.msra.mxu0 0
      %1552 = vmatprep.subr.bf16.mxu0 0
      %1553 = vmatpush1.bf16.msra.mxu0 0
      %1554 = vmatprep.mubr.bf16.mxu0 0
      %1555 = vmatmul.mubr.bf16.gmra.mrb[0].mxu0 %v1467
      %v1556 = vpop.f32.mrb[0].mxu0
      %v1557 = vadd.f32 0.0, %v1556
      %v1558 = vpop.f32.mrb[0].mxu0
      %v1559 = vadd.f32 0.0, %v1558
      %v1560 = vpop.f32.mrb[0].mxu0
      %v1561 = vpop.f32.mrb[0].mxu0
      %1562 = vdwg.mxu0
      %v1563 = vadd.f32 %v1445, %v1516
      %v1564 = vadd.f32 %v1446, %v1518
      %v1565 = vadd.f32 %v1447, %v1557
      %v1566 = vadd.f32 %v1448, %v1559
      %s1567 = scalar_lea.vmem %s5, 32
      %v1568 = vld [vmem:[%s1567] sm:$0xf]
      %1569 = vrot.lane.b32.xlu0 %v647, 31
      %v1570 = vpop.permute.xlu0 %1569
      %1571 = vrot.lane.b32.xlu0 %v648, 31
      %v1572 = vpop.permute.xlu0 %1571
      %1573 = vrot.lane.b32.xlu0 %v649, 31
      %v1574 = vpop.permute.xlu0 %1573
      %1575 = vrot.lane.b32.xlu0 %v650, 31
      %v1576 = vpop.permute.xlu0 %1575
      %1577 = vrot.lane.b32.xlu0 %v1332, 31
      %v1578 = vpop.permute.xlu0 %1577
      %vm1579 = vcmask 252928
      %v1580 = vsel %vm1579, %v1570, %v1572
      %v1581 = vsel %vm1579, %v1572, %v1574
      %v1582 = vsel %vm1579, %v1574, %v1576
      %v1583 = vsel %vm1579, %v1576, %v1578
      %v1585 = vsel %vm437, %v1568, 0
      %v1588 = vsel %vm441, %v1580, 0
      %v1591 = vsel %vm441, %v1581, 0
      %v1594 = vsel %vm441, %v1582, 0
      %v1597 = vsel %vm441, %v1583, 0
      %1599 = vmatprep.subr.bf16.mxu0 %v1591
      %1600 = vmatpush1.bf16.msra.mxu0 %v1588
      %1601 = vmatprep.subr.bf16.mxu0 0
      %1602 = vmatpush1.bf16.msra.mxu0 0
      %1603 = vmatprep.subr.bf16.mxu0 0
      %1604 = vmatpush1.bf16.msra.mxu0 0
      %1605 = vmatprep.subr.bf16.mxu0 0
      %1606 = vmatpush1.bf16.msra.mxu0 0
      %1607 = vmatprep.subr.bf16.mxu0 0
      %1608 = vmatpush1.bf16.msra.mxu0 0
      %1609 = vmatprep.subr.bf16.mxu0 0
      %1610 = vmatpush1.bf16.msra.mxu0 0
      %1611 = vmatprep.subr.bf16.mxu0 0
      %1612 = vmatpush1.bf16.msra.mxu0 0
      %1613 = vmatprep.subr.bf16.mxu0 0
      %1614 = vmatpush1.bf16.msra.mxu0 0
      %1615 = vmatprep.subr.bf16.mxu0 0
      %1616 = vmatpush1.bf16.msra.mxu0 0
      %1617 = vmatprep.subr.bf16.mxu0 0
      %1618 = vmatpush1.bf16.msra.mxu0 0
      %1619 = vmatprep.subr.bf16.mxu0 0
      %1620 = vmatpush1.bf16.msra.mxu0 0
      %1621 = vmatprep.subr.bf16.mxu0 0
      %1622 = vmatpush1.bf16.msra.mxu0 0
      %1623 = vmatprep.subr.bf16.mxu0 0
      %1624 = vmatpush1.bf16.msra.mxu0 0
      %1625 = vmatprep.subr.bf16.mxu0 0
      %1626 = vmatpush1.bf16.msra.mxu0 0
      %1627 = vmatprep.subr.bf16.mxu0 0
      %1628 = vmatpush1.bf16.msra.mxu0 0
      %1629 = vmatprep.subr.bf16.mxu0 0
      %1630 = vmatpush1.bf16.msra.mxu0 0
      %1631 = vmatprep.mubr.bf16.mxu0 0
      %1632 = vmatmul.mubr.bf16.gmra.mrb[0].mxu0 %v1585
      %v1633 = vpop.f32.mrb[0].mxu0
      %v1634 = vadd.f32 0.0, %v1633
      %v1635 = vpop.f32.mrb[0].mxu0
      %v1636 = vadd.f32 0.0, %v1635
      %v1637 = vpop.f32.mrb[0].mxu0
      %v1638 = vpop.f32.mrb[0].mxu0
      %1639 = vdwg.mxu0
      %1640 = vmatprep.subr.bf16.mxu0 %v1597
      %1641 = vmatpush1.bf16.msra.mxu0 %v1594
      %1642 = vmatprep.subr.bf16.mxu0 0
      %1643 = vmatpush1.bf16.msra.mxu0 0
      %1644 = vmatprep.subr.bf16.mxu0 0
      %1645 = vmatpush1.bf16.msra.mxu0 0
      %1646 = vmatprep.subr.bf16.mxu0 0
      %1647 = vmatpush1.bf16.msra.mxu0 0
      %1648 = vmatprep.subr.bf16.mxu0 0
      %1649 = vmatpush1.bf16.msra.mxu0 0
      %1650 = vmatprep.subr.bf16.mxu0 0
      %1651 = vmatpush1.bf16.msra.mxu0 0
      %1652 = vmatprep.subr.bf16.mxu0 0
      %1653 = vmatpush1.bf16.msra.mxu0 0
      %1654 = vmatprep.subr.bf16.mxu0 0
      %1655 = vmatpush1.bf16.msra.mxu0 0
      %1656 = vmatprep.subr.bf16.mxu0 0
      %1657 = vmatpush1.bf16.msra.mxu0 0
      %1658 = vmatprep.subr.bf16.mxu0 0
      %1659 = vmatpush1.bf16.msra.mxu0 0
      %1660 = vmatprep.subr.bf16.mxu0 0
      %1661 = vmatpush1.bf16.msra.mxu0 0
      %1662 = vmatprep.subr.bf16.mxu0 0
      %1663 = vmatpush1.bf16.msra.mxu0 0
      %1664 = vmatprep.subr.bf16.mxu0 0
      %1665 = vmatpush1.bf16.msra.mxu0 0
      %1666 = vmatprep.subr.bf16.mxu0 0
      %1667 = vmatpush1.bf16.msra.mxu0 0
      %1668 = vmatprep.subr.bf16.mxu0 0
      %1669 = vmatpush1.bf16.msra.mxu0 0
      %1670 = vmatprep.subr.bf16.mxu0 0
      %1671 = vmatpush1.bf16.msra.mxu0 0
      %1672 = vmatprep.mubr.bf16.mxu0 0
      %1673 = vmatmul.mubr.bf16.gmra.mrb[0].mxu0 %v1585
      %v1674 = vpop.f32.mrb[0].mxu0
      %v1675 = vadd.f32 0.0, %v1674
      %v1676 = vpop.f32.mrb[0].mxu0
      %v1677 = vadd.f32 0.0, %v1676
      %v1678 = vpop.f32.mrb[0].mxu0
      %v1679 = vpop.f32.mrb[0].mxu0
      %1680 = vdwg.mxu0
      %v1681 = vadd.f32 %v1563, %v1634
      %v1682 = vadd.f32 %v1564, %v1636
      %v1683 = vadd.f32 %v1565, %v1675
      %v1684 = vadd.f32 %v1566, %v1677
      %v1685 = vld [vmem:[%s6] sm:$0xff]
      %1687 = vset.pattern.permute.xlu0 0
      %1688 = vperm.xlu0 %1687, %v1685
      %v1689 = vpop.permute.xlu0 %1688
      %v1691 = vadd.f32 %v1681, %v1689
      %v1692 = vadd.f32 %v1682, %v1689
      %v1693 = vadd.f32 %v1683, %v1689
      %v1694 = vadd.f32 %v1684, %v1689
      %v1695 = vmax.f32 %v1691, 0.0
      %v1696 = vmax.f32 %v1692, 0.0
      %v1697 = vmax.f32 %v1693, 0.0
      %v1698 = vmax.f32 %v1694, 0.0
      %v1699 = vld [vmem:[%s7] sm:$0xf]
      %s1700 = scalar_lea.vmem %s7, 4
      %v1701 = vld [vmem:[%s1700] sm:$0xf]
      %1706 = vrot.lane.b32.xlu0 %v635, 105
      %v1707 = vpop.permute.xlu0 %1706
      %1708 = vrot.lane.b32.xlu0 %v636, 105
      %v1709 = vpop.permute.xlu0 %1708
      %1710 = vrot.lane.b32.xlu0 %v637, 105
      %v1711 = vpop.permute.xlu0 %1710
      %1712 = vrot.lane.b32.xlu0 %v638, 105
      %v1713 = vpop.permute.xlu0 %1712
      %vm1714 = vcmask 859136
      %v1715 = vsel %vm1714, %v1707, %v1709
      %v1716 = vsel %vm1714, %v1709, %v1711
      %v1717 = vsel %vm1714, %v1711, %v1713
      %v1719 = vsel %vm437, %v1701, 0
      %v1722 = vsel %vm441, %v1715, 0
      %v1725 = vsel %vm441, %v1716, 0
      %v1728 = vsel %vm441, %v1717, 0
      %v1731 = vsel %vm441, %v1713, 0
      %1733 = vmatprep.subr.bf16.mxu0 %v1725
      %1734 = vmatpush1.bf16.msra.mxu0 %v1722
      %1735 = vmatprep.subr.bf16.mxu0 0
      %1736 = vmatpush1.bf16.msra.mxu0 0
      %1737 = vmatprep.subr.bf16.mxu0 0
      %1738 = vmatpush1.bf16.msra.mxu0 0
      %1739 = vmatprep.subr.bf16.mxu0 0
      %1740 = vmatpush1.bf16.msra.mxu0 0
      %1741 = vmatprep.subr.bf16.mxu0 0
      %1742 = vmatpush1.bf16.msra.mxu0 0
      %1743 = vmatprep.subr.bf16.mxu0 0
      %1744 = vmatpush1.bf16.msra.mxu0 0
      %1745 = vmatprep.subr.bf16.mxu0 0
      %1746 = vmatpush1.bf16.msra.mxu0 0
      %1747 = vmatprep.subr.bf16.mxu0 0
      %1748 = vmatpush1.bf16.msra.mxu0 0
      %1749 = vmatprep.subr.bf16.mxu0 0
      %1750 = vmatpush1.bf16.msra.mxu0 0
      %1751 = vmatprep.subr.bf16.mxu0 0
      %1752 = vmatpush1.bf16.msra.mxu0 0
      %1753 = vmatprep.subr.bf16.mxu0 0
      %1754 = vmatpush1.bf16.msra.mxu0 0
      %1755 = vmatprep.subr.bf16.mxu0 0
      %1756 = vmatpush1.bf16.msra.mxu0 0
      %1757 = vmatprep.subr.bf16.mxu0 0
      %1758 = vmatpush1.bf16.msra.mxu0 0
      %1759 = vmatprep.subr.bf16.mxu0 0
      %1760 = vmatpush1.bf16.msra.mxu0 0
      %1761 = vmatprep.subr.bf16.mxu0 0
      %1762 = vmatpush1.bf16.msra.mxu0 0
      %1763 = vmatprep.subr.bf16.mxu0 0
      %1764 = vmatpush1.bf16.msra.mxu0 0
      %1765 = vmatprep.mubr.bf16.mxu0 0
      %1766 = vmatmul.mubr.bf16.gmra.mrb[0].mxu0 %v1719
      %v1767 = vpop.f32.mrb[0].mxu0
      %v1768 = vadd.f32 0.0, %v1767
      %v1769 = vpop.f32.mrb[0].mxu0
      %v1770 = vadd.f32 0.0, %v1769
      %v1771 = vpop.f32.mrb[0].mxu0
      %v1772 = vpop.f32.mrb[0].mxu0
      %1773 = vdwg.mxu0
      %1774 = vmatprep.subr.bf16.mxu0 %v1731
      %1775 = vmatpush1.bf16.msra.mxu0 %v1728
      %1776 = vmatprep.subr.bf16.mxu0 0
      %1777 = vmatpush1.bf16.msra.mxu0 0
      %1778 = vmatprep.subr.bf16.mxu0 0
      %1779 = vmatpush1.bf16.msra.mxu0 0
      %1780 = vmatprep.subr.bf16.mxu0 0
      %1781 = vmatpush1.bf16.msra.mxu0 0
      %1782 = vmatprep.subr.bf16.mxu0 0
      %1783 = vmatpush1.bf16.msra.mxu0 0
      %1784 = vmatprep.subr.bf16.mxu0 0
      %1785 = vmatpush1.bf16.msra.mxu0 0
      %1786 = vmatprep.subr.bf16.mxu0 0
      %1787 = vmatpush1.bf16.msra.mxu0 0
      %1788 = vmatprep.subr.bf16.mxu0 0
      %1789 = vmatpush1.bf16.msra.mxu0 0
      %1790 = vmatprep.subr.bf16.mxu0 0
      %1791 = vmatpush1.bf16.msra.mxu0 0
      %1792 = vmatprep.subr.bf16.mxu0 0
      %1793 = vmatpush1.bf16.msra.mxu0 0
      %1794 = vmatprep.subr.bf16.mxu0 0
      %1795 = vmatpush1.bf16.msra.mxu0 0
      %1796 = vmatprep.subr.bf16.mxu0 0
      %1797 = vmatpush1.bf16.msra.mxu0 0
      %1798 = vmatprep.subr.bf16.mxu0 0
      %1799 = vmatpush1.bf16.msra.mxu0 0
      %1800 = vmatprep.subr.bf16.mxu0 0
      %1801 = vmatpush1.bf16.msra.mxu0 0
      %1802 = vmatprep.subr.bf16.mxu0 0
      %1803 = vmatpush1.bf16.msra.mxu0 0
      %1804 = vmatprep.subr.bf16.mxu0 0
      %1805 = vmatpush1.bf16.msra.mxu0 0
      %1806 = vmatprep.mubr.bf16.mxu0 0
      %1807 = vmatmul.mubr.bf16.gmra.mrb[0].mxu0 %v1719
      %v1808 = vpop.f32.mrb[0].mxu0
      %v1809 = vadd.f32 0.0, %v1808
      %v1810 = vpop.f32.mrb[0].mxu0
      %v1811 = vadd.f32 0.0, %v1810
      %v1812 = vpop.f32.mrb[0].mxu0
      %v1813 = vpop.f32.mrb[0].mxu0
      %1814 = vdwg.mxu0
      %1815 = vrot.lane.b32.xlu0 %v635, 106
      %v1816 = vpop.permute.xlu0 %1815
      %1817 = vrot.lane.b32.xlu0 %v636, 106
      %v1818 = vpop.permute.xlu0 %1817
      %1819 = vrot.lane.b32.xlu0 %v637, 106
      %v1820 = vpop.permute.xlu0 %1819
      %1821 = vrot.lane.b32.xlu0 %v638, 106
      %v1822 = vpop.permute.xlu0 %1821
      %vm1823 = vcmask 867328
      %v1824 = vsel %vm1823, %v1816, %v1818
      %v1825 = vsel %vm1823, %v1818, %v1820
      %v1826 = vsel %vm1823, %v1820, %v1822
      %v1828 = vsel %vm437, %v1699, 0
      %v1831 = vsel %vm441, %v1824, 0
      %v1834 = vsel %vm441, %v1825, 0
      %v1837 = vsel %vm441, %v1826, 0
      %v1840 = vsel %vm441, %v1822, 0
      %1842 = vmatprep.subr.bf16.mxu0 %v1834
      %1843 = vmatpush1.bf16.msra.mxu0 %v1831
      %1844 = vmatprep.subr.bf16.mxu0 0
      %1845 = vmatpush1.bf16.msra.mxu0 0
      %1846 = vmatprep.subr.bf16.mxu0 0
      %1847 = vmatpush1.bf16.msra.mxu0 0
      %1848 = vmatprep.subr.bf16.mxu0 0
      %1849 = vmatpush1.bf16.msra.mxu0 0
      %1850 = vmatprep.subr.bf16.mxu0 0
      %1851 = vmatpush1.bf16.msra.mxu0 0
      %1852 = vmatprep.subr.bf16.mxu0 0
      %1853 = vmatpush1.bf16.msra.mxu0 0
      %1854 = vmatprep.subr.bf16.mxu0 0
      %1855 = vmatpush1.bf16.msra.mxu0 0
      %1856 = vmatprep.subr.bf16.mxu0 0
      %1857 = vmatpush1.bf16.msra.mxu0 0
      %1858 = vmatprep.subr.bf16.mxu0 0
      %1859 = vmatpush1.bf16.msra.mxu0 0
      %1860 = vmatprep.subr.bf16.mxu0 0
      %1861 = vmatpush1.bf16.msra.mxu0 0
      %1862 = vmatprep.subr.bf16.mxu0 0
      %1863 = vmatpush1.bf16.msra.mxu0 0
      %1864 = vmatprep.subr.bf16.mxu0 0
      %1865 = vmatpush1.bf16.msra.mxu0 0
      %1866 = vmatprep.subr.bf16.mxu0 0
      %1867 = vmatpush1.bf16.msra.mxu0 0
      %1868 = vmatprep.subr.bf16.mxu0 0
      %1869 = vmatpush1.bf16.msra.mxu0 0
      %1870 = vmatprep.subr.bf16.mxu0 0
      %1871 = vmatpush1.bf16.msra.mxu0 0
      %1872 = vmatprep.subr.bf16.mxu0 0
      %1873 = vmatpush1.bf16.msra.mxu0 0
      %1874 = vmatprep.mubr.bf16.mxu0 0
      %1875 = vmatmul.mubr.bf16.gmra.mrb[0].mxu0 %v1828
      %v1876 = vpop.f32.mrb[0].mxu0
      %v1877 = vadd.f32 %v1768, %v1876
      %v1878 = vpop.f32.mrb[0].mxu0
      %v1879 = vadd.f32 %v1770, %v1878
      %v1880 = vpop.f32.mrb[0].mxu0
      %v1881 = vpop.f32.mrb[0].mxu0
      %1882 = vdwg.mxu0
      %1883 = vmatprep.subr.bf16.mxu0 %v1840
      %1884 = vmatpush1.bf16.msra.mxu0 %v1837
      %1885 = vmatprep.subr.bf16.mxu0 0
      %1886 = vmatpush1.bf16.msra.mxu0 0
      %1887 = vmatprep.subr.bf16.mxu0 0
      %1888 = vmatpush1.bf16.msra.mxu0 0
      %1889 = vmatprep.subr.bf16.mxu0 0
      %1890 = vmatpush1.bf16.msra.mxu0 0
      %1891 = vmatprep.subr.bf16.mxu0 0
      %1892 = vmatpush1.bf16.msra.mxu0 0
      %1893 = vmatprep.subr.bf16.mxu0 0
      %1894 = vmatpush1.bf16.msra.mxu0 0
      %1895 = vmatprep.subr.bf16.mxu0 0
      %1896 = vmatpush1.bf16.msra.mxu0 0
      %1897 = vmatprep.subr.bf16.mxu0 0
      %1898 = vmatpush1.bf16.msra.mxu0 0
      %1899 = vmatprep.subr.bf16.mxu0 0
      %1900 = vmatpush1.bf16.msra.mxu0 0
      %1901 = vmatprep.subr.bf16.mxu0 0
      %1902 = vmatpush1.bf16.msra.mxu0 0
      %1903 = vmatprep.subr.bf16.mxu0 0
      %1904 = vmatpush1.bf16.msra.mxu0 0
      %1905 = vmatprep.subr.bf16.mxu0 0
      %1906 = vmatpush1.bf16.msra.mxu0 0
      %1907 = vmatprep.subr.bf16.mxu0 0
      %1908 = vmatpush1.bf16.msra.mxu0 0
      %1909 = vmatprep.subr.bf16.mxu0 0
      %1910 = vmatpush1.bf16.msra.mxu0 0
      %1911 = vmatprep.subr.bf16.mxu0 0
      %1912 = vmatpush1.bf16.msra.mxu0 0
      %1913 = vmatprep.subr.bf16.mxu0 0
      %1914 = vmatpush1.bf16.msra.mxu0 0
      %1915 = vmatprep.mubr.bf16.mxu0 0
      %1916 = vmatmul.mubr.bf16.gmra.mrb[0].mxu0 %v1828
      %v1917 = vpop.f32.mrb[0].mxu0
      %v1918 = vadd.f32 %v1809, %v1917
      %v1919 = vpop.f32.mrb[0].mxu0
      %v1920 = vadd.f32 %v1811, %v1919
      %v1921 = vpop.f32.mrb[0].mxu0
      %v1922 = vpop.f32.mrb[0].mxu0
      %1923 = vdwg.mxu0
      %s1924 = scalar_lea.vmem %s7, 8
      %v1925 = vld [vmem:[%s1924] sm:$0xf]
      %1926 = vrot.lane.b32.xlu0 %v635, 104
      %v1927 = vpop.permute.xlu0 %1926
      %1928 = vrot.lane.b32.xlu0 %v636, 104
      %v1929 = vpop.permute.xlu0 %1928
      %1930 = vrot.lane.b32.xlu0 %v637, 104
      %v1931 = vpop.permute.xlu0 %1930
      %1932 = vrot.lane.b32.xlu0 %v638, 104
      %v1933 = vpop.permute.xlu0 %1932
      %vm1934 = vcmask 850944
      %v1935 = vsel %vm1934, %v1927, %v1929
      %v1936 = vsel %vm1934, %v1929, %v1931
      %v1937 = vsel %vm1934, %v1931, %v1933
      %v1939 = vsel %vm437, %v1925, 0
      %v1942 = vsel %vm441, %v1935, 0
      %v1945 = vsel %vm441, %v1936, 0
      %v1948 = vsel %vm441, %v1937, 0
      %v1951 = vsel %vm441, %v1933, 0
      %1953 = vmatprep.subr.bf16.mxu0 %v1945
      %1954 = vmatpush1.bf16.msra.mxu0 %v1942
      %1955 = vmatprep.subr.bf16.mxu0 0
      %1956 = vmatpush1.bf16.msra.mxu0 0
      %1957 = vmatprep.subr.bf16.mxu0 0
      %1958 = vmatpush1.bf16.msra.mxu0 0
      %1959 = vmatprep.subr.bf16.mxu0 0
      %1960 = vmatpush1.bf16.msra.mxu0 0
      %1961 = vmatprep.subr.bf16.mxu0 0
      %1962 = vmatpush1.bf16.msra.mxu0 0
      %1963 = vmatprep.subr.bf16.mxu0 0
      %1964 = vmatpush1.bf16.msra.mxu0 0
      %1965 = vmatprep.subr.bf16.mxu0 0
      %1966 = vmatpush1.bf16.msra.mxu0 0
      %1967 = vmatprep.subr.bf16.mxu0 0
      %1968 = vmatpush1.bf16.msra.mxu0 0
      %1969 = vmatprep.subr.bf16.mxu0 0
      %1970 = vmatpush1.bf16.msra.mxu0 0
      %1971 = vmatprep.subr.bf16.mxu0 0
      %1972 = vmatpush1.bf16.msra.mxu0 0
      %1973 = vmatprep.subr.bf16.mxu0 0
      %1974 = vmatpush1.bf16.msra.mxu0 0
      %1975 = vmatprep.subr.bf16.mxu0 0
      %1976 = vmatpush1.bf16.msra.mxu0 0
      %1977 = vmatprep.subr.bf16.mxu0 0
      %1978 = vmatpush1.bf16.msra.mxu0 0
      %1979 = vmatprep.subr.bf16.mxu0 0
      %1980 = vmatpush1.bf16.msra.mxu0 0
      %1981 = vmatprep.subr.bf16.mxu0 0
      %1982 = vmatpush1.bf16.msra.mxu0 0
      %1983 = vmatprep.subr.bf16.mxu0 0
      %1984 = vmatpush1.bf16.msra.mxu0 0
      %1985 = vmatprep.mubr.bf16.mxu0 0
      %1986 = vmatmul.mubr.bf16.gmra.mrb[0].mxu0 %v1939
      %v1987 = vpop.f32.mrb[0].mxu0
      %v1988 = vadd.f32 0.0, %v1987
      %v1989 = vpop.f32.mrb[0].mxu0
      %v1990 = vadd.f32 0.0, %v1989
      %v1991 = vpop.f32.mrb[0].mxu0
      %v1992 = vpop.f32.mrb[0].mxu0
      %1993 = vdwg.mxu0
      %1994 = vmatprep.subr.bf16.mxu0 %v1951
      %1995 = vmatpush1.bf16.msra.mxu0 %v1948
      %1996 = vmatprep.subr.bf16.mxu0 0
      %1997 = vmatpush1.bf16.msra.mxu0 0
      %1998 = vmatprep.subr.bf16.mxu0 0
      %1999 = vmatpush1.bf16.msra.mxu0 0
      %2000 = vmatprep.subr.bf16.mxu0 0
      %2001 = vmatpush1.bf16.msra.mxu0 0
      %2002 = vmatprep.subr.bf16.mxu0 0
      %2003 = vmatpush1.bf16.msra.mxu0 0
      %2004 = vmatprep.subr.bf16.mxu0 0
      %2005 = vmatpush1.bf16.msra.mxu0 0
      %2006 = vmatprep.subr.bf16.mxu0 0
      %2007 = vmatpush1.bf16.msra.mxu0 0
      %2008 = vmatprep.subr.bf16.mxu0 0
      %2009 = vmatpush1.bf16.msra.mxu0 0
      %2010 = vmatprep.subr.bf16.mxu0 0
      %2011 = vmatpush1.bf16.msra.mxu0 0
      %2012 = vmatprep.subr.bf16.mxu0 0
      %2013 = vmatpush1.bf16.msra.mxu0 0
      %2014 = vmatprep.subr.bf16.mxu0 0
      %2015 = vmatpush1.bf16.msra.mxu0 0
      %2016 = vmatprep.subr.bf16.mxu0 0
      %2017 = vmatpush1.bf16.msra.mxu0 0
      %2018 = vmatprep.subr.bf16.mxu0 0
      %2019 = vmatpush1.bf16.msra.mxu0 0
      %2020 = vmatprep.subr.bf16.mxu0 0
      %2021 = vmatpush1.bf16.msra.mxu0 0
      %2022 = vmatprep.subr.bf16.mxu0 0
      %2023 = vmatpush1.bf16.msra.mxu0 0
      %2024 = vmatprep.subr.bf16.mxu0 0
      %2025 = vmatpush1.bf16.msra.mxu0 0
      %2026 = vmatprep.mubr.bf16.mxu0 0
      %2027 = vmatmul.mubr.bf16.gmra.mrb[0].mxu0 %v1939
      %v2028 = vpop.f32.mrb[0].mxu0
      %v2029 = vadd.f32 0.0, %v2028
      %v2030 = vpop.f32.mrb[0].mxu0
      %v2031 = vadd.f32 0.0, %v2030
      %v2032 = vpop.f32.mrb[0].mxu0
      %v2033 = vpop.f32.mrb[0].mxu0
      %2034 = vdwg.mxu0
      %v2035 = vadd.f32 %v1877, %v1988
      %v2036 = vadd.f32 %v1879, %v1990
      %v2037 = vadd.f32 %v1918, %v2029
      %v2038 = vadd.f32 %v1920, %v2031
      %s2039 = scalar_lea.vmem %s7, 12
      %v2040 = vld [vmem:[%s2039] sm:$0xf]
      %2041 = vrot.lane.b32.xlu0 %v635, 103
      %v2042 = vpop.permute.xlu0 %2041
      %2043 = vrot.lane.b32.xlu0 %v636, 103
      %v2044 = vpop.permute.xlu0 %2043
      %2045 = vrot.lane.b32.xlu0 %v637, 103
      %v2046 = vpop.permute.xlu0 %2045
      %2047 = vrot.lane.b32.xlu0 %v638, 103
      %v2048 = vpop.permute.xlu0 %2047
      %vm2049 = vcmask 842752
      %v2050 = vsel %vm2049, %v2042, %v2044
      %v2051 = vsel %vm2049, %v2044, %v2046
      %v2052 = vsel %vm2049, %v2046, %v2048
      %v2054 = vsel %vm437, %v2040, 0
      %v2057 = vsel %vm441, %v2050, 0
      %v2060 = vsel %vm441, %v2051, 0
      %v2063 = vsel %vm441, %v2052, 0
      %v2066 = vsel %vm441, %v2048, 0
      %2068 = vmatprep.subr.bf16.mxu0 %v2060
      %2069 = vmatpush1.bf16.msra.mxu0 %v2057
      %2070 = vmatprep.subr.bf16.mxu0 0
      %2071 = vmatpush1.bf16.msra.mxu0 0
      %2072 = vmatprep.subr.bf16.mxu0 0
      %2073 = vmatpush1.bf16.msra.mxu0 0
      %2074 = vmatprep.subr.bf16.mxu0 0
      %2075 = vmatpush1.bf16.msra.mxu0 0
      %2076 = vmatprep.subr.bf16.mxu0 0
      %2077 = vmatpush1.bf16.msra.mxu0 0
      %2078 = vmatprep.subr.bf16.mxu0 0
      %2079 = vmatpush1.bf16.msra.mxu0 0
      %2080 = vmatprep.subr.bf16.mxu0 0
      %2081 = vmatpush1.bf16.msra.mxu0 0
      %2082 = vmatprep.subr.bf16.mxu0 0
      %2083 = vmatpush1.bf16.msra.mxu0 0
      %2084 = vmatprep.subr.bf16.mxu0 0
      %2085 = vmatpush1.bf16.msra.mxu0 0
      %2086 = vmatprep.subr.bf16.mxu0 0
      %2087 = vmatpush1.bf16.msra.mxu0 0
      %2088 = vmatprep.subr.bf16.mxu0 0
      %2089 = vmatpush1.bf16.msra.mxu0 0
      %2090 = vmatprep.subr.bf16.mxu0 0
      %2091 = vmatpush1.bf16.msra.mxu0 0
      %2092 = vmatprep.subr.bf16.mxu0 0
      %2093 = vmatpush1.bf16.msra.mxu0 0
      %2094 = vmatprep.subr.bf16.mxu0 0
      %2095 = vmatpush1.bf16.msra.mxu0 0
      %2096 = vmatprep.subr.bf16.mxu0 0
      %2097 = vmatpush1.bf16.msra.mxu0 0
      %2098 = vmatprep.subr.bf16.mxu0 0
      %2099 = vmatpush1.bf16.msra.mxu0 0
      %2100 = vmatprep.mubr.bf16.mxu0 0
      %2101 = vmatmul.mubr.bf16.gmra.mrb[0].mxu0 %v2054
      %v2102 = vpop.f32.mrb[0].mxu0
      %v2103 = vadd.f32 0.0, %v2102
      %v2104 = vpop.f32.mrb[0].mxu0
      %v2105 = vadd.f32 0.0, %v2104
      %v2106 = vpop.f32.mrb[0].mxu0
      %v2107 = vpop.f32.mrb[0].mxu0
      %2108 = vdwg.mxu0
      %2109 = vmatprep.subr.bf16.mxu0 %v2066
      %2110 = vmatpush1.bf16.msra.mxu0 %v2063
      %2111 = vmatprep.subr.bf16.mxu0 0
      %2112 = vmatpush1.bf16.msra.mxu0 0
      %2113 = vmatprep.subr.bf16.mxu0 0
      %2114 = vmatpush1.bf16.msra.mxu0 0
      %2115 = vmatprep.subr.bf16.mxu0 0
      %2116 = vmatpush1.bf16.msra.mxu0 0
      %2117 = vmatprep.subr.bf16.mxu0 0
      %2118 = vmatpush1.bf16.msra.mxu0 0
      %2119 = vmatprep.subr.bf16.mxu0 0
      %2120 = vmatpush1.bf16.msra.mxu0 0
      %2121 = vmatprep.subr.bf16.mxu0 0
      %2122 = vmatpush1.bf16.msra.mxu0 0
      %2123 = vmatprep.subr.bf16.mxu0 0
      %2124 = vmatpush1.bf16.msra.mxu0 0
      %2125 = vmatprep.subr.bf16.mxu0 0
      %2126 = vmatpush1.bf16.msra.mxu0 0
      %2127 = vmatprep.subr.bf16.mxu0 0
      %2128 = vmatpush1.bf16.msra.mxu0 0
      %2129 = vmatprep.subr.bf16.mxu0 0
      %2130 = vmatpush1.bf16.msra.mxu0 0
      %2131 = vmatprep.subr.bf16.mxu0 0
      %2132 = vmatpush1.bf16.msra.mxu0 0
      %2133 = vmatprep.subr.bf16.mxu0 0
      %2134 = vmatpush1.bf16.msra.mxu0 0
      %2135 = vmatprep.subr.bf16.mxu0 0
      %2136 = vmatpush1.bf16.msra.mxu0 0
      %2137 = vmatprep.subr.bf16.mxu0 0
      %2138 = vmatpush1.bf16.msra.mxu0 0
      %2139 = vmatprep.subr.bf16.mxu0 0
      %2140 = vmatpush1.bf16.msra.mxu0 0
      %2141 = vmatprep.mubr.bf16.mxu0 0
      %2142 = vmatmul.mubr.bf16.gmra.mrb[0].mxu0 %v2054
      %v2143 = vpop.f32.mrb[0].mxu0
      %v2144 = vadd.f32 0.0, %v2143
      %v2145 = vpop.f32.mrb[0].mxu0
      %v2146 = vadd.f32 0.0, %v2145
      %v2147 = vpop.f32.mrb[0].mxu0
      %v2148 = vpop.f32.mrb[0].mxu0
      %2149 = vdwg.mxu0
      %v2150 = vadd.f32 %v2035, %v2103
      %v2151 = vadd.f32 %v2036, %v2105
      %v2152 = vadd.f32 %v2037, %v2144
      %v2153 = vadd.f32 %v2038, %v2146
      %s2154 = scalar_lea.vmem %s7, 16
      %v2155 = vld [vmem:[%s2154] sm:$0xf]
      %2156 = vrot.lane.b32.xlu0 %v635, 102
      %v2157 = vpop.permute.xlu0 %2156
      %2158 = vrot.lane.b32.xlu0 %v636, 102
      %v2159 = vpop.permute.xlu0 %2158
      %2160 = vrot.lane.b32.xlu0 %v637, 102
      %v2161 = vpop.permute.xlu0 %2160
      %2162 = vrot.lane.b32.xlu0 %v638, 102
      %v2163 = vpop.permute.xlu0 %2162
      %vm2164 = vcmask 834560
      %v2165 = vsel %vm2164, %v2157, %v2159
      %v2166 = vsel %vm2164, %v2159, %v2161
      %v2167 = vsel %vm2164, %v2161, %v2163
      %v2169 = vsel %vm437, %v2155, 0
      %v2172 = vsel %vm441, %v2165, 0
      %v2175 = vsel %vm441, %v2166, 0
      %v2178 = vsel %vm441, %v2167, 0
      %v2181 = vsel %vm441, %v2163, 0
      %2183 = vmatprep.subr.bf16.mxu0 %v2175
      %2184 = vmatpush1.bf16.msra.mxu0 %v2172
      %2185 = vmatprep.subr.bf16.mxu0 0
      %2186 = vmatpush1.bf16.msra.mxu0 0
      %2187 = vmatprep.subr.bf16.mxu0 0
      %2188 = vmatpush1.bf16.msra.mxu0 0
      %2189 = vmatprep.subr.bf16.mxu0 0
      %2190 = vmatpush1.bf16.msra.mxu0 0
      %2191 = vmatprep.subr.bf16.mxu0 0
      %2192 = vmatpush1.bf16.msra.mxu0 0
      %2193 = vmatprep.subr.bf16.mxu0 0
      %2194 = vmatpush1.bf16.msra.mxu0 0
      %2195 = vmatprep.subr.bf16.mxu0 0
      %2196 = vmatpush1.bf16.msra.mxu0 0
      %2197 = vmatprep.subr.bf16.mxu0 0
      %2198 = vmatpush1.bf16.msra.mxu0 0
      %2199 = vmatprep.subr.bf16.mxu0 0
      %2200 = vmatpush1.bf16.msra.mxu0 0
      %2201 = vmatprep.subr.bf16.mxu0 0
      %2202 = vmatpush1.bf16.msra.mxu0 0
      %2203 = vmatprep.subr.bf16.mxu0 0
      %2204 = vmatpush1.bf16.msra.mxu0 0
      %2205 = vmatprep.subr.bf16.mxu0 0
      %2206 = vmatpush1.bf16.msra.mxu0 0
      %2207 = vmatprep.subr.bf16.mxu0 0
      %2208 = vmatpush1.bf16.msra.mxu0 0
      %2209 = vmatprep.subr.bf16.mxu0 0
      %2210 = vmatpush1.bf16.msra.mxu0 0
      %2211 = vmatprep.subr.bf16.mxu0 0
      %2212 = vmatpush1.bf16.msra.mxu0 0
      %2213 = vmatprep.subr.bf16.mxu0 0
      %2214 = vmatpush1.bf16.msra.mxu0 0
      %2215 = vmatprep.mubr.bf16.mxu0 0
      %2216 = vmatmul.mubr.bf16.gmra.mrb[0].mxu0 %v2169
      %v2217 = vpop.f32.mrb[0].mxu0
      %v2218 = vadd.f32 0.0, %v2217
      %v2219 = vpop.f32.mrb[0].mxu0
      %v2220 = vadd.f32 0.0, %v2219
      %v2221 = vpop.f32.mrb[0].mxu0
      %v2222 = vpop.f32.mrb[0].mxu0
      %2223 = vdwg.mxu0
      %2224 = vmatprep.subr.bf16.mxu0 %v2181
      %2225 = vmatpush1.bf16.msra.mxu0 %v2178
      %2226 = vmatprep.subr.bf16.mxu0 0
      %2227 = vmatpush1.bf16.msra.mxu0 0
      %2228 = vmatprep.subr.bf16.mxu0 0
      %2229 = vmatpush1.bf16.msra.mxu0 0
      %2230 = vmatprep.subr.bf16.mxu0 0
      %2231 = vmatpush1.bf16.msra.mxu0 0
      %2232 = vmatprep.subr.bf16.mxu0 0
      %2233 = vmatpush1.bf16.msra.mxu0 0
      %2234 = vmatprep.subr.bf16.mxu0 0
      %2235 = vmatpush1.bf16.msra.mxu0 0
      %2236 = vmatprep.subr.bf16.mxu0 0
      %2237 = vmatpush1.bf16.msra.mxu0 0
      %2238 = vmatprep.subr.bf16.mxu0 0
      %2239 = vmatpush1.bf16.msra.mxu0 0
      %2240 = vmatprep.subr.bf16.mxu0 0
      %2241 = vmatpush1.bf16.msra.mxu0 0
      %2242 = vmatprep.subr.bf16.mxu0 0
      %2243 = vmatpush1.bf16.msra.mxu0 0
      %2244 = vmatprep.subr.bf16.mxu0 0
      %2245 = vmatpush1.bf16.msra.mxu0 0
      %2246 = vmatprep.subr.bf16.mxu0 0
      %2247 = vmatpush1.bf16.msra.mxu0 0
      %2248 = vmatprep.subr.bf16.mxu0 0
      %2249 = vmatpush1.bf16.msra.mxu0 0
      %2250 = vmatprep.subr.bf16.mxu0 0
      %2251 = vmatpush1.bf16.msra.mxu0 0
      %2252 = vmatprep.subr.bf16.mxu0 0
      %2253 = vmatpush1.bf16.msra.mxu0 0
      %2254 = vmatprep.subr.bf16.mxu0 0
      %2255 = vmatpush1.bf16.msra.mxu0 0
      %2256 = vmatprep.mubr.bf16.mxu0 0
      %2257 = vmatmul.mubr.bf16.gmra.mrb[0].mxu0 %v2169
      %v2258 = vpop.f32.mrb[0].mxu0
      %v2259 = vadd.f32 0.0, %v2258
      %v2260 = vpop.f32.mrb[0].mxu0
      %v2261 = vadd.f32 0.0, %v2260
      %v2262 = vpop.f32.mrb[0].mxu0
      %v2263 = vpop.f32.mrb[0].mxu0
      %2264 = vdwg.mxu0
      %v2265 = vadd.f32 %v2150, %v2218
      %v2266 = vadd.f32 %v2151, %v2220
      %v2267 = vadd.f32 %v2152, %v2259
      %v2268 = vadd.f32 %v2153, %v2261
      %s2269 = scalar_lea.vmem %s7, 20
      %v2270 = vld [vmem:[%s2269] sm:$0xf]
      %2271 = vrot.lane.b32.xlu0 %v635, 82
      %v2272 = vpop.permute.xlu0 %2271
      %2273 = vrot.lane.b32.xlu0 %v636, 82
      %v2274 = vpop.permute.xlu0 %2273
      %2275 = vrot.lane.b32.xlu0 %v637, 82
      %v2276 = vpop.permute.xlu0 %2275
      %2277 = vrot.lane.b32.xlu0 %v638, 82
      %v2278 = vpop.permute.xlu0 %2277
      %vm2279 = vcmask 670720
      %v2280 = vsel %vm2279, %v2272, %v2274
      %v2281 = vsel %vm2279, %v2274, %v2276
      %v2282 = vsel %vm2279, %v2276, %v2278
      %v2284 = vsel %vm437, %v2270, 0
      %v2287 = vsel %vm441, %v2280, 0
      %v2290 = vsel %vm441, %v2281, 0
      %v2293 = vsel %vm441, %v2282, 0
      %v2296 = vsel %vm441, %v2278, 0
      %2298 = vmatprep.subr.bf16.mxu0 %v2290
      %2299 = vmatpush1.bf16.msra.mxu0 %v2287
      %2300 = vmatprep.subr.bf16.mxu0 0
      %2301 = vmatpush1.bf16.msra.mxu0 0
      %2302 = vmatprep.subr.bf16.mxu0 0
      %2303 = vmatpush1.bf16.msra.mxu0 0
      %2304 = vmatprep.subr.bf16.mxu0 0
      %2305 = vmatpush1.bf16.msra.mxu0 0
      %2306 = vmatprep.subr.bf16.mxu0 0
      %2307 = vmatpush1.bf16.msra.mxu0 0
      %2308 = vmatprep.subr.bf16.mxu0 0
      %2309 = vmatpush1.bf16.msra.mxu0 0
      %2310 = vmatprep.subr.bf16.mxu0 0
      %2311 = vmatpush1.bf16.msra.mxu0 0
      %2312 = vmatprep.subr.bf16.mxu0 0
      %2313 = vmatpush1.bf16.msra.mxu0 0
      %2314 = vmatprep.subr.bf16.mxu0 0
      %2315 = vmatpush1.bf16.msra.mxu0 0
      %2316 = vmatprep.subr.bf16.mxu0 0
      %2317 = vmatpush1.bf16.msra.mxu0 0
      %2318 = vmatprep.subr.bf16.mxu0 0
      %2319 = vmatpush1.bf16.msra.mxu0 0
      %2320 = vmatprep.subr.bf16.mxu0 0
      %2321 = vmatpush1.bf16.msra.mxu0 0
      %2322 = vmatprep.subr.bf16.mxu0 0
      %2323 = vmatpush1.bf16.msra.mxu0 0
      %2324 = vmatprep.subr.bf16.mxu0 0
      %2325 = vmatpush1.bf16.msra.mxu0 0
      %2326 = vmatprep.subr.bf16.mxu0 0
      %2327 = vmatpush1.bf16.msra.mxu0 0
      %2328 = vmatprep.subr.bf16.mxu0 0
      %2329 = vmatpush1.bf16.msra.mxu0 0
      %2330 = vmatprep.mubr.bf16.mxu0 0
      %2331 = vmatmul.mubr.bf16.gmra.mrb[0].mxu0 %v2284
      %v2332 = vpop.f32.mrb[0].mxu0
      %v2333 = vadd.f32 0.0, %v2332
      %v2334 = vpop.f32.mrb[0].mxu0
      %v2335 = vadd.f32 0.0, %v2334
      %v2336 = vpop.f32.mrb[0].mxu0
      %v2337 = vpop.f32.mrb[0].mxu0
      %2338 = vdwg.mxu0
      %2339 = vmatprep.subr.bf16.mxu0 %v2296
      %2340 = vmatpush1.bf16.msra.mxu0 %v2293
      %2341 = vmatprep.subr.bf16.mxu0 0
      %2342 = vmatpush1.bf16.msra.mxu0 0
      %2343 = vmatprep.subr.bf16.mxu0 0
      %2344 = vmatpush1.bf16.msra.mxu0 0
      %2345 = vmatprep.subr.bf16.mxu0 0
      %2346 = vmatpush1.bf16.msra.mxu0 0
      %2347 = vmatprep.subr.bf16.mxu0 0
      %2348 = vmatpush1.bf16.msra.mxu0 0
      %2349 = vmatprep.subr.bf16.mxu0 0
      %2350 = vmatpush1.bf16.msra.mxu0 0
      %2351 = vmatprep.subr.bf16.mxu0 0
      %2352 = vmatpush1.bf16.msra.mxu0 0
      %2353 = vmatprep.subr.bf16.mxu0 0
      %2354 = vmatpush1.bf16.msra.mxu0 0
      %2355 = vmatprep.subr.bf16.mxu0 0
      %2356 = vmatpush1.bf16.msra.mxu0 0
      %2357 = vmatprep.subr.bf16.mxu0 0
      %2358 = vmatpush1.bf16.msra.mxu0 0
      %2359 = vmatprep.subr.bf16.mxu0 0
      %2360 = vmatpush1.bf16.msra.mxu0 0
      %2361 = vmatprep.subr.bf16.mxu0 0
      %2362 = vmatpush1.bf16.msra.mxu0 0
      %2363 = vmatprep.subr.bf16.mxu0 0
      %2364 = vmatpush1.bf16.msra.mxu0 0
      %2365 = vmatprep.subr.bf16.mxu0 0
      %2366 = vmatpush1.bf16.msra.mxu0 0
      %2367 = vmatprep.subr.bf16.mxu0 0
      %2368 = vmatpush1.bf16.msra.mxu0 0
      %2369 = vmatprep.subr.bf16.mxu0 0
      %2370 = vmatpush1.bf16.msra.mxu0 0
      %2371 = vmatprep.mubr.bf16.mxu0 0
      %2372 = vmatmul.mubr.bf16.gmra.mrb[0].mxu0 %v2284
      %v2373 = vpop.f32.mrb[0].mxu0
      %v2374 = vadd.f32 0.0, %v2373
      %v2375 = vpop.f32.mrb[0].mxu0
      %v2376 = vadd.f32 0.0, %v2375
      %v2377 = vpop.f32.mrb[0].mxu0
      %v2378 = vpop.f32.mrb[0].mxu0
      %2379 = vdwg.mxu0
      %v2380 = vadd.f32 %v2265, %v2333
      %v2381 = vadd.f32 %v2266, %v2335
      %v2382 = vadd.f32 %v2267, %v2374
      %v2383 = vadd.f32 %v2268, %v2376
      %s2384 = scalar_lea.vmem %s7, 24
      %v2385 = vld [vmem:[%s2384] sm:$0xf]
      %2386 = vrot.lane.b32.xlu0 %v635, 81
      %v2387 = vpop.permute.xlu0 %2386
      %2388 = vrot.lane.b32.xlu0 %v636, 81
      %v2389 = vpop.permute.xlu0 %2388
      %2390 = vrot.lane.b32.xlu0 %v637, 81
      %v2391 = vpop.permute.xlu0 %2390
      %2392 = vrot.lane.b32.xlu0 %v638, 81
      %v2393 = vpop.permute.xlu0 %2392
      %v2394 = vsel %vm768, %v2387, %v2389
      %v2395 = vsel %vm768, %v2389, %v2391
      %v2396 = vsel %vm768, %v2391, %v2393
      %v2398 = vsel %vm437, %v2385, 0
      %v2401 = vsel %vm441, %v2394, 0
      %v2404 = vsel %vm441, %v2395, 0
      %v2407 = vsel %vm441, %v2396, 0
      %v2410 = vsel %vm441, %v2393, 0
      %2412 = vmatprep.subr.bf16.mxu0 %v2404
      %2413 = vmatpush1.bf16.msra.mxu0 %v2401
      %2414 = vmatprep.subr.bf16.mxu0 0
      %2415 = vmatpush1.bf16.msra.mxu0 0
      %2416 = vmatprep.subr.bf16.mxu0 0
      %2417 = vmatpush1.bf16.msra.mxu0 0
      %2418 = vmatprep.subr.bf16.mxu0 0
      %2419 = vmatpush1.bf16.msra.mxu0 0
      %2420 = vmatprep.subr.bf16.mxu0 0
      %2421 = vmatpush1.bf16.msra.mxu0 0
      %2422 = vmatprep.subr.bf16.mxu0 0
      %2423 = vmatpush1.bf16.msra.mxu0 0
      %2424 = vmatprep.subr.bf16.mxu0 0
      %2425 = vmatpush1.bf16.msra.mxu0 0
      %2426 = vmatprep.subr.bf16.mxu0 0
      %2427 = vmatpush1.bf16.msra.mxu0 0
      %2428 = vmatprep.subr.bf16.mxu0 0
      %2429 = vmatpush1.bf16.msra.mxu0 0
      %2430 = vmatprep.subr.bf16.mxu0 0
      %2431 = vmatpush1.bf16.msra.mxu0 0
      %2432 = vmatprep.subr.bf16.mxu0 0
      %2433 = vmatpush1.bf16.msra.mxu0 0
      %2434 = vmatprep.subr.bf16.mxu0 0
      %2435 = vmatpush1.bf16.msra.mxu0 0
      %2436 = vmatprep.subr.bf16.mxu0 0
      %2437 = vmatpush1.bf16.msra.mxu0 0
      %2438 = vmatprep.subr.bf16.mxu0 0
      %2439 = vmatpush1.bf16.msra.mxu0 0
      %2440 = vmatprep.subr.bf16.mxu0 0
      %2441 = vmatpush1.bf16.msra.mxu0 0
      %2442 = vmatprep.subr.bf16.mxu0 0
      %2443 = vmatpush1.bf16.msra.mxu0 0
      %2444 = vmatprep.mubr.bf16.mxu0 0
      %2445 = vmatmul.mubr.bf16.gmra.mrb[0].mxu0 %v2398
      %v2446 = vpop.f32.mrb[0].mxu0
      %v2447 = vadd.f32 0.0, %v2446
      %v2448 = vpop.f32.mrb[0].mxu0
      %v2449 = vadd.f32 0.0, %v2448
      %v2450 = vpop.f32.mrb[0].mxu0
      %v2451 = vpop.f32.mrb[0].mxu0
      %2452 = vdwg.mxu0
      %2453 = vmatprep.subr.bf16.mxu0 %v2410
      %2454 = vmatpush1.bf16.msra.mxu0 %v2407
      %2455 = vmatprep.subr.bf16.mxu0 0
      %2456 = vmatpush1.bf16.msra.mxu0 0
      %2457 = vmatprep.subr.bf16.mxu0 0
      %2458 = vmatpush1.bf16.msra.mxu0 0
      %2459 = vmatprep.subr.bf16.mxu0 0
      %2460 = vmatpush1.bf16.msra.mxu0 0
      %2461 = vmatprep.subr.bf16.mxu0 0
      %2462 = vmatpush1.bf16.msra.mxu0 0
      %2463 = vmatprep.subr.bf16.mxu0 0
      %2464 = vmatpush1.bf16.msra.mxu0 0
      %2465 = vmatprep.subr.bf16.mxu0 0
      %2466 = vmatpush1.bf16.msra.mxu0 0
      %2467 = vmatprep.subr.bf16.mxu0 0
      %2468 = vmatpush1.bf16.msra.mxu0 0
      %2469 = vmatprep.subr.bf16.mxu0 0
      %2470 = vmatpush1.bf16.msra.mxu0 0
      %2471 = vmatprep.subr.bf16.mxu0 0
      %2472 = vmatpush1.bf16.msra.mxu0 0
      %2473 = vmatprep.subr.bf16.mxu0 0
      %2474 = vmatpush1.bf16.msra.mxu0 0
      %2475 = vmatprep.subr.bf16.mxu0 0
      %2476 = vmatpush1.bf16.msra.mxu0 0
      %2477 = vmatprep.subr.bf16.mxu0 0
      %2478 = vmatpush1.bf16.msra.mxu0 0
      %2479 = vmatprep.subr.bf16.mxu0 0
      %2480 = vmatpush1.bf16.msra.mxu0 0
      %2481 = vmatprep.subr.bf16.mxu0 0
      %2482 = vmatpush1.bf16.msra.mxu0 0
      %2483 = vmatprep.subr.bf16.mxu0 0
      %2484 = vmatpush1.bf16.msra.mxu0 0
      %2485 = vmatprep.mubr.bf16.mxu0 0
      %2486 = vmatmul.mubr.bf16.gmra.mrb[0].mxu0 %v2398
      %v2487 = vpop.f32.mrb[0].mxu0
      %v2488 = vadd.f32 0.0, %v2487
      %v2489 = vpop.f32.mrb[0].mxu0
      %v2490 = vadd.f32 0.0, %v2489
      %v2491 = vpop.f32.mrb[0].mxu0
      %v2492 = vpop.f32.mrb[0].mxu0
      %2493 = vdwg.mxu0
      %v2494 = vadd.f32 %v2380, %v2447
      %v2495 = vadd.f32 %v2381, %v2449
      %v2496 = vadd.f32 %v2382, %v2488
      %v2497 = vadd.f32 %v2383, %v2490
      %s2498 = scalar_lea.vmem %s7, 28
      %v2499 = vld [vmem:[%s2498] sm:$0xf]
      %2500 = vrot.lane.b32.xlu0 %v635, 80
      %v2501 = vpop.permute.xlu0 %2500
      %2502 = vrot.lane.b32.xlu0 %v636, 80
      %v2503 = vpop.permute.xlu0 %2502
      %2504 = vrot.lane.b32.xlu0 %v637, 80
      %v2505 = vpop.permute.xlu0 %2504
      %2506 = vrot.lane.b32.xlu0 %v638, 80
      %v2507 = vpop.permute.xlu0 %2506
      %v2508 = vsel %vm659, %v2501, %v2503
      %v2509 = vsel %vm659, %v2503, %v2505
      %v2510 = vsel %vm659, %v2505, %v2507
      %v2512 = vsel %vm437, %v2499, 0
      %v2515 = vsel %vm441, %v2508, 0
      %v2518 = vsel %vm441, %v2509, 0
      %v2521 = vsel %vm441, %v2510, 0
      %v2524 = vsel %vm441, %v2507, 0
      %2526 = vmatprep.subr.bf16.mxu0 %v2518
      %2527 = vmatpush1.bf16.msra.mxu0 %v2515
      %2528 = vmatprep.subr.bf16.mxu0 0
      %2529 = vmatpush1.bf16.msra.mxu0 0
      %2530 = vmatprep.subr.bf16.mxu0 0
      %2531 = vmatpush1.bf16.msra.mxu0 0
      %2532 = vmatprep.subr.bf16.mxu0 0
      %2533 = vmatpush1.bf16.msra.mxu0 0
      %2534 = vmatprep.subr.bf16.mxu0 0
      %2535 = vmatpush1.bf16.msra.mxu0 0
      %2536 = vmatprep.subr.bf16.mxu0 0
      %2537 = vmatpush1.bf16.msra.mxu0 0
      %2538 = vmatprep.subr.bf16.mxu0 0
      %2539 = vmatpush1.bf16.msra.mxu0 0
      %2540 = vmatprep.subr.bf16.mxu0 0
      %2541 = vmatpush1.bf16.msra.mxu0 0
      %2542 = vmatprep.subr.bf16.mxu0 0
      %2543 = vmatpush1.bf16.msra.mxu0 0
      %2544 = vmatprep.subr.bf16.mxu0 0
      %2545 = vmatpush1.bf16.msra.mxu0 0
      %2546 = vmatprep.subr.bf16.mxu0 0
      %2547 = vmatpush1.bf16.msra.mxu0 0
      %2548 = vmatprep.subr.bf16.mxu0 0
      %2549 = vmatpush1.bf16.msra.mxu0 0
      %2550 = vmatprep.subr.bf16.mxu0 0
      %2551 = vmatpush1.bf16.msra.mxu0 0
      %2552 = vmatprep.subr.bf16.mxu0 0
      %2553 = vmatpush1.bf16.msra.mxu0 0
      %2554 = vmatprep.subr.bf16.mxu0 0
      %2555 = vmatpush1.bf16.msra.mxu0 0
      %2556 = vmatprep.subr.bf16.mxu0 0
      %2557 = vmatpush1.bf16.msra.mxu0 0
      %2558 = vmatprep.mubr.bf16.mxu0 0
      %2559 = vmatmul.mubr.bf16.gmra.mrb[0].mxu0 %v2512
      %v2560 = vpop.f32.mrb[0].mxu0
      %v2561 = vadd.f32 0.0, %v2560
      %v2562 = vpop.f32.mrb[0].mxu0
      %v2563 = vadd.f32 0.0, %v2562
      %v2564 = vpop.f32.mrb[0].mxu0
      %v2565 = vpop.f32.mrb[0].mxu0
      %2566 = vdwg.mxu0
      %2567 = vmatprep.subr.bf16.mxu0 %v2524
      %2568 = vmatpush1.bf16.msra.mxu0 %v2521
      %2569 = vmatprep.subr.bf16.mxu0 0
      %2570 = vmatpush1.bf16.msra.mxu0 0
      %2571 = vmatprep.subr.bf16.mxu0 0
      %2572 = vmatpush1.bf16.msra.mxu0 0
      %2573 = vmatprep.subr.bf16.mxu0 0
      %2574 = vmatpush1.bf16.msra.mxu0 0
      %2575 = vmatprep.subr.bf16.mxu0 0
      %2576 = vmatpush1.bf16.msra.mxu0 0
      %2577 = vmatprep.subr.bf16.mxu0 0
      %2578 = vmatpush1.bf16.msra.mxu0 0
      %2579 = vmatprep.subr.bf16.mxu0 0
      %2580 = vmatpush1.bf16.msra.mxu0 0
      %2581 = vmatprep.subr.bf16.mxu0 0
      %2582 = vmatpush1.bf16.msra.mxu0 0
      %2583 = vmatprep.subr.bf16.mxu0 0
      %2584 = vmatpush1.bf16.msra.mxu0 0
      %2585 = vmatprep.subr.bf16.mxu0 0
      %2586 = vmatpush1.bf16.msra.mxu0 0
      %2587 = vmatprep.subr.bf16.mxu0 0
      %2588 = vmatpush1.bf16.msra.mxu0 0
      %2589 = vmatprep.subr.bf16.mxu0 0
      %2590 = vmatpush1.bf16.msra.mxu0 0
      %2591 = vmatprep.subr.bf16.mxu0 0
      %2592 = vmatpush1.bf16.msra.mxu0 0
      %2593 = vmatprep.subr.bf16.mxu0 0
      %2594 = vmatpush1.bf16.msra.mxu0 0
      %2595 = vmatprep.subr.bf16.mxu0 0
      %2596 = vmatpush1.bf16.msra.mxu0 0
      %2597 = vmatprep.subr.bf16.mxu0 0
      %2598 = vmatpush1.bf16.msra.mxu0 0
      %2599 = vmatprep.mubr.bf16.mxu0 0
      %2600 = vmatmul.mubr.bf16.gmra.mrb[0].mxu0 %v2512
      %v2601 = vpop.f32.mrb[0].mxu0
      %v2602 = vadd.f32 0.0, %v2601
      %v2603 = vpop.f32.mrb[0].mxu0
      %v2604 = vadd.f32 0.0, %v2603
      %v2605 = vpop.f32.mrb[0].mxu0
      %v2606 = vpop.f32.mrb[0].mxu0
      %2607 = vdwg.mxu0
      %v2608 = vadd.f32 %v2494, %v2561
      %v2609 = vadd.f32 %v2495, %v2563
      %v2610 = vadd.f32 %v2496, %v2602
      %v2611 = vadd.f32 %v2497, %v2604
      %s2612 = scalar_lea.vmem %s7, 32
      %v2613 = vld [vmem:[%s2612] sm:$0xf]
      %2614 = vrot.lane.b32.xlu0 %v635, 79
      %v2615 = vpop.permute.xlu0 %2614
      %2616 = vrot.lane.b32.xlu0 %v636, 79
      %v2617 = vpop.permute.xlu0 %2616
      %2618 = vrot.lane.b32.xlu0 %v637, 79
      %v2619 = vpop.permute.xlu0 %2618
      %2620 = vrot.lane.b32.xlu0 %v638, 79
      %v2621 = vpop.permute.xlu0 %2620
      %v2622 = vsel %vm879, %v2615, %v2617
      %v2623 = vsel %vm879, %v2617, %v2619
      %v2624 = vsel %vm879, %v2619, %v2621
      %v2626 = vsel %vm437, %v2613, 0
      %v2629 = vsel %vm441, %v2622, 0
      %v2632 = vsel %vm441, %v2623, 0
      %v2635 = vsel %vm441, %v2624, 0
      %v2638 = vsel %vm441, %v2621, 0
      %2640 = vmatprep.subr.bf16.mxu0 %v2632
      %2641 = vmatpush1.bf16.msra.mxu0 %v2629
      %2642 = vmatprep.subr.bf16.mxu0 0
      %2643 = vmatpush1.bf16.msra.mxu0 0
      %2644 = vmatprep.subr.bf16.mxu0 0
      %2645 = vmatpush1.bf16.msra.mxu0 0
      %2646 = vmatprep.subr.bf16.mxu0 0
      %2647 = vmatpush1.bf16.msra.mxu0 0
      %2648 = vmatprep.subr.bf16.mxu0 0
      %2649 = vmatpush1.bf16.msra.mxu0 0
      %2650 = vmatprep.subr.bf16.mxu0 0
      %2651 = vmatpush1.bf16.msra.mxu0 0
      %2652 = vmatprep.subr.bf16.mxu0 0
      %2653 = vmatpush1.bf16.msra.mxu0 0
      %2654 = vmatprep.subr.bf16.mxu0 0
      %2655 = vmatpush1.bf16.msra.mxu0 0
      %2656 = vmatprep.subr.bf16.mxu0 0
      %2657 = vmatpush1.bf16.msra.mxu0 0
      %2658 = vmatprep.subr.bf16.mxu0 0
      %2659 = vmatpush1.bf16.msra.mxu0 0
      %2660 = vmatprep.subr.bf16.mxu0 0
      %2661 = vmatpush1.bf16.msra.mxu0 0
      %2662 = vmatprep.subr.bf16.mxu0 0
      %2663 = vmatpush1.bf16.msra.mxu0 0
      %2664 = vmatprep.subr.bf16.mxu0 0
      %2665 = vmatpush1.bf16.msra.mxu0 0
      %2666 = vmatprep.subr.bf16.mxu0 0
      %2667 = vmatpush1.bf16.msra.mxu0 0
      %2668 = vmatprep.subr.bf16.mxu0 0
      %2669 = vmatpush1.bf16.msra.mxu0 0
      %2670 = vmatprep.subr.bf16.mxu0 0
      %2671 = vmatpush1.bf16.msra.mxu0 0
      %2672 = vmatprep.mubr.bf16.mxu0 0
      %2673 = vmatmul.mubr.bf16.gmra.mrb[0].mxu0 %v2626
      %v2674 = vpop.f32.mrb[0].mxu0
      %v2675 = vadd.f32 0.0, %v2674
      %v2676 = vpop.f32.mrb[0].mxu0
      %v2677 = vadd.f32 0.0, %v2676
      %v2678 = vpop.f32.mrb[0].mxu0
      %v2679 = vpop.f32.mrb[0].mxu0
      %2680 = vdwg.mxu0
      %2681 = vmatprep.subr.bf16.mxu0 %v2638
      %2682 = vmatpush1.bf16.msra.mxu0 %v2635
      %2683 = vmatprep.subr.bf16.mxu0 0
      %2684 = vmatpush1.bf16.msra.mxu0 0
      %2685 = vmatprep.subr.bf16.mxu0 0
      %2686 = vmatpush1.bf16.msra.mxu0 0
      %2687 = vmatprep.subr.bf16.mxu0 0
      %2688 = vmatpush1.bf16.msra.mxu0 0
      %2689 = vmatprep.subr.bf16.mxu0 0
      %2690 = vmatpush1.bf16.msra.mxu0 0
      %2691 = vmatprep.subr.bf16.mxu0 0
      %2692 = vmatpush1.bf16.msra.mxu0 0
      %2693 = vmatprep.subr.bf16.mxu0 0
      %2694 = vmatpush1.bf16.msra.mxu0 0
      %2695 = vmatprep.subr.bf16.mxu0 0
      %2696 = vmatpush1.bf16.msra.mxu0 0
      %2697 = vmatprep.subr.bf16.mxu0 0
      %2698 = vmatpush1.bf16.msra.mxu0 0
      %2699 = vmatprep.subr.bf16.mxu0 0
      %2700 = vmatpush1.bf16.msra.mxu0 0
      %2701 = vmatprep.subr.bf16.mxu0 0
      %2702 = vmatpush1.bf16.msra.mxu0 0
      %2703 = vmatprep.subr.bf16.mxu0 0
      %2704 = vmatpush1.bf16.msra.mxu0 0
      %2705 = vmatprep.subr.bf16.mxu0 0
      %2706 = vmatpush1.bf16.msra.mxu0 0
      %2707 = vmatprep.subr.bf16.mxu0 0
      %2708 = vmatpush1.bf16.msra.mxu0 0
      %2709 = vmatprep.subr.bf16.mxu0 0
      %2710 = vmatpush1.bf16.msra.mxu0 0
      %2711 = vmatprep.subr.bf16.mxu0 0
      %2712 = vmatpush1.bf16.msra.mxu0 0
      %2713 = vmatprep.mubr.bf16.mxu0 0
      %2714 = vmatmul.mubr.bf16.gmra.mrb[0].mxu0 %v2626
      %v2715 = vpop.f32.mrb[0].mxu0
      %v2716 = vadd.f32 0.0, %v2715
      %v2717 = vpop.f32.mrb[0].mxu0
      %v2718 = vadd.f32 0.0, %v2717
      %v2719 = vpop.f32.mrb[0].mxu0
      %v2720 = vpop.f32.mrb[0].mxu0
      %2721 = vdwg.mxu0
      %v2722 = vadd.f32 %v2608, %v2675
      %v2723 = vadd.f32 %v2609, %v2677
      %v2724 = vadd.f32 %v2610, %v2716
      %v2725 = vadd.f32 %v2611, %v2718
      %s2726 = scalar_lea.vmem %s7, 36
      %v2727 = vld [vmem:[%s2726] sm:$0xf]
      %2728 = vrot.lane.b32.xlu0 %v635, 78
      %v2729 = vpop.permute.xlu0 %2728
      %2730 = vrot.lane.b32.xlu0 %v636, 78
      %v2731 = vpop.permute.xlu0 %2730
      %2732 = vrot.lane.b32.xlu0 %v637, 78
      %v2733 = vpop.permute.xlu0 %2732
      %2734 = vrot.lane.b32.xlu0 %v638, 78
      %v2735 = vpop.permute.xlu0 %2734
      %vm2736 = vcmask 637952
      %v2737 = vsel %vm2736, %v2729, %v2731
      %v2738 = vsel %vm2736, %v2731, %v2733
      %v2739 = vsel %vm2736, %v2733, %v2735
      %v2741 = vsel %vm437, %v2727, 0
      %v2744 = vsel %vm441, %v2737, 0
      %v2747 = vsel %vm441, %v2738, 0
      %v2750 = vsel %vm441, %v2739, 0
      %v2753 = vsel %vm441, %v2735, 0
      %2755 = vmatprep.subr.bf16.mxu0 %v2747
      %2756 = vmatpush1.bf16.msra.mxu0 %v2744
      %2757 = vmatprep.subr.bf16.mxu0 0
      %2758 = vmatpush1.bf16.msra.mxu0 0
      %2759 = vmatprep.subr.bf16.mxu0 0
      %2760 = vmatpush1.bf16.msra.mxu0 0
      %2761 = vmatprep.subr.bf16.mxu0 0
      %2762 = vmatpush1.bf16.msra.mxu0 0
      %2763 = vmatprep.subr.bf16.mxu0 0
      %2764 = vmatpush1.bf16.msra.mxu0 0
      %2765 = vmatprep.subr.bf16.mxu0 0
      %2766 = vmatpush1.bf16.msra.mxu0 0
      %2767 = vmatprep.subr.bf16.mxu0 0
      %2768 = vmatpush1.bf16.msra.mxu0 0
      %2769 = vmatprep.subr.bf16.mxu0 0
      %2770 = vmatpush1.bf16.msra.mxu0 0
      %2771 = vmatprep.subr.bf16.mxu0 0
      %2772 = vmatpush1.bf16.msra.mxu0 0
      %2773 = vmatprep.subr.bf16.mxu0 0
      %2774 = vmatpush1.bf16.msra.mxu0 0
      %2775 = vmatprep.subr.bf16.mxu0 0
      %2776 = vmatpush1.bf16.msra.mxu0 0
      %2777 = vmatprep.subr.bf16.mxu0 0
      %2778 = vmatpush1.bf16.msra.mxu0 0
      %2779 = vmatprep.subr.bf16.mxu0 0
      %2780 = vmatpush1.bf16.msra.mxu0 0
      %2781 = vmatprep.subr.bf16.mxu0 0
      %2782 = vmatpush1.bf16.msra.mxu0 0
      %2783 = vmatprep.subr.bf16.mxu0 0
      %2784 = vmatpush1.bf16.msra.mxu0 0
      %2785 = vmatprep.subr.bf16.mxu0 0
      %2786 = vmatpush1.bf16.msra.mxu0 0
      %2787 = vmatprep.mubr.bf16.mxu0 0
      %2788 = vmatmul.mubr.bf16.gmra.mrb[0].mxu0 %v2741
      %v2789 = vpop.f32.mrb[0].mxu0
      %v2790 = vadd.f32 0.0, %v2789
      %v2791 = vpop.f32.mrb[0].mxu0
      %v2792 = vadd.f32 0.0, %v2791
      %v2793 = vpop.f32.mrb[0].mxu0
      %v2794 = vpop.f32.mrb[0].mxu0
      %2795 = vdwg.mxu0
      %2796 = vmatprep.subr.bf16.mxu0 %v2753
      %2797 = vmatpush1.bf16.msra.mxu0 %v2750
      %2798 = vmatprep.subr.bf16.mxu0 0
      %2799 = vmatpush1.bf16.msra.mxu0 0
      %2800 = vmatprep.subr.bf16.mxu0 0
      %2801 = vmatpush1.bf16.msra.mxu0 0
      %2802 = vmatprep.subr.bf16.mxu0 0
      %2803 = vmatpush1.bf16.msra.mxu0 0
      %2804 = vmatprep.subr.bf16.mxu0 0
      %2805 = vmatpush1.bf16.msra.mxu0 0
      %2806 = vmatprep.subr.bf16.mxu0 0
      %2807 = vmatpush1.bf16.msra.mxu0 0
      %2808 = vmatprep.subr.bf16.mxu0 0
      %2809 = vmatpush1.bf16.msra.mxu0 0
      %2810 = vmatprep.subr.bf16.mxu0 0
      %2811 = vmatpush1.bf16.msra.mxu0 0
      %2812 = vmatprep.subr.bf16.mxu0 0
      %2813 = vmatpush1.bf16.msra.mxu0 0
      %2814 = vmatprep.subr.bf16.mxu0 0
      %2815 = vmatpush1.bf16.msra.mxu0 0
      %2816 = vmatprep.subr.bf16.mxu0 0
      %2817 = vmatpush1.bf16.msra.mxu0 0
      %2818 = vmatprep.subr.bf16.mxu0 0
      %2819 = vmatpush1.bf16.msra.mxu0 0
      %2820 = vmatprep.subr.bf16.mxu0 0
      %2821 = vmatpush1.bf16.msra.mxu0 0
      %2822 = vmatprep.subr.bf16.mxu0 0
      %2823 = vmatpush1.bf16.msra.mxu0 0
      %2824 = vmatprep.subr.bf16.mxu0 0
      %2825 = vmatpush1.bf16.msra.mxu0 0
      %2826 = vmatprep.subr.bf16.mxu0 0
      %2827 = vmatpush1.bf16.msra.mxu0 0
      %2828 = vmatprep.mubr.bf16.mxu0 0
      %2829 = vmatmul.mubr.bf16.gmra.mrb[0].mxu0 %v2741
      %v2830 = vpop.f32.mrb[0].mxu0
      %v2831 = vadd.f32 0.0, %v2830
      %v2832 = vpop.f32.mrb[0].mxu0
      %v2833 = vadd.f32 0.0, %v2832
      %v2834 = vpop.f32.mrb[0].mxu0
      %v2835 = vpop.f32.mrb[0].mxu0
      %2836 = vdwg.mxu0
      %v2837 = vadd.f32 %v2722, %v2790
      %v2838 = vadd.f32 %v2723, %v2792
      %v2839 = vadd.f32 %v2724, %v2831
      %v2840 = vadd.f32 %v2725, %v2833
      %s2841 = scalar_lea.vmem %s7, 40
      %v2842 = vld [vmem:[%s2841] sm:$0xf]
      %2843 = vrot.lane.b32.xlu0 %v635, 58
      %v2844 = vpop.permute.xlu0 %2843
      %2845 = vrot.lane.b32.xlu0 %v636, 58
      %v2846 = vpop.permute.xlu0 %2845
      %2847 = vrot.lane.b32.xlu0 %v637, 58
      %v2848 = vpop.permute.xlu0 %2847
      %2849 = vrot.lane.b32.xlu0 %v638, 58
      %v2850 = vpop.permute.xlu0 %2849
      %vm2851 = vcmask 474112
      %v2852 = vsel %vm2851, %v2844, %v2846
      %v2853 = vsel %vm2851, %v2846, %v2848
      %v2854 = vsel %vm2851, %v2848, %v2850
      %v2856 = vsel %vm437, %v2842, 0
      %v2859 = vsel %vm441, %v2852, 0
      %v2862 = vsel %vm441, %v2853, 0
      %v2865 = vsel %vm441, %v2854, 0
      %v2868 = vsel %vm441, %v2850, 0
      %2870 = vmatprep.subr.bf16.mxu0 %v2862
      %2871 = vmatpush1.bf16.msra.mxu0 %v2859
      %2872 = vmatprep.subr.bf16.mxu0 0
      %2873 = vmatpush1.bf16.msra.mxu0 0
      %2874 = vmatprep.subr.bf16.mxu0 0
      %2875 = vmatpush1.bf16.msra.mxu0 0
      %2876 = vmatprep.subr.bf16.mxu0 0
      %2877 = vmatpush1.bf16.msra.mxu0 0
      %2878 = vmatprep.subr.bf16.mxu0 0
      %2879 = vmatpush1.bf16.msra.mxu0 0
      %2880 = vmatprep.subr.bf16.mxu0 0
      %2881 = vmatpush1.bf16.msra.mxu0 0
      %2882 = vmatprep.subr.bf16.mxu0 0
      %2883 = vmatpush1.bf16.msra.mxu0 0
      %2884 = vmatprep.subr.bf16.mxu0 0
      %2885 = vmatpush1.bf16.msra.mxu0 0
      %2886 = vmatprep.subr.bf16.mxu0 0
      %2887 = vmatpush1.bf16.msra.mxu0 0
      %2888 = vmatprep.subr.bf16.mxu0 0
      %2889 = vmatpush1.bf16.msra.mxu0 0
      %2890 = vmatprep.subr.bf16.mxu0 0
      %2891 = vmatpush1.bf16.msra.mxu0 0
      %2892 = vmatprep.subr.bf16.mxu0 0
      %2893 = vmatpush1.bf16.msra.mxu0 0
      %2894 = vmatprep.subr.bf16.mxu0 0
      %2895 = vmatpush1.bf16.msra.mxu0 0
      %2896 = vmatprep.subr.bf16.mxu0 0
      %2897 = vmatpush1.bf16.msra.mxu0 0
      %2898 = vmatprep.subr.bf16.mxu0 0
      %2899 = vmatpush1.bf16.msra.mxu0 0
      %2900 = vmatprep.subr.bf16.mxu0 0
      %2901 = vmatpush1.bf16.msra.mxu0 0
      %2902 = vmatprep.mubr.bf16.mxu0 0
      %2903 = vmatmul.mubr.bf16.gmra.mrb[0].mxu0 %v2856
      %v2904 = vpop.f32.mrb[0].mxu0
      %v2905 = vadd.f32 0.0, %v2904
      %v2906 = vpop.f32.mrb[0].mxu0
      %v2907 = vadd.f32 0.0, %v2906
      %v2908 = vpop.f32.mrb[0].mxu0
      %v2909 = vpop.f32.mrb[0].mxu0
      %2910 = vdwg.mxu0
      %2911 = vmatprep.subr.bf16.mxu0 %v2868
      %2912 = vmatpush1.bf16.msra.mxu0 %v2865
      %2913 = vmatprep.subr.bf16.mxu0 0
      %2914 = vmatpush1.bf16.msra.mxu0 0
      %2915 = vmatprep.subr.bf16.mxu0 0
      %2916 = vmatpush1.bf16.msra.mxu0 0
      %2917 = vmatprep.subr.bf16.mxu0 0
      %2918 = vmatpush1.bf16.msra.mxu0 0
      %2919 = vmatprep.subr.bf16.mxu0 0
      %2920 = vmatpush1.bf16.msra.mxu0 0
      %2921 = vmatprep.subr.bf16.mxu0 0
      %2922 = vmatpush1.bf16.msra.mxu0 0
      %2923 = vmatprep.subr.bf16.mxu0 0
      %2924 = vmatpush1.bf16.msra.mxu0 0
      %2925 = vmatprep.subr.bf16.mxu0 0
      %2926 = vmatpush1.bf16.msra.mxu0 0
      %2927 = vmatprep.subr.bf16.mxu0 0
      %2928 = vmatpush1.bf16.msra.mxu0 0
      %2929 = vmatprep.subr.bf16.mxu0 0
      %2930 = vmatpush1.bf16.msra.mxu0 0
      %2931 = vmatprep.subr.bf16.mxu0 0
      %2932 = vmatpush1.bf16.msra.mxu0 0
      %2933 = vmatprep.subr.bf16.mxu0 0
      %2934 = vmatpush1.bf16.msra.mxu0 0
      %2935 = vmatprep.subr.bf16.mxu0 0
      %2936 = vmatpush1.bf16.msra.mxu0 0
      %2937 = vmatprep.subr.bf16.mxu0 0
      %2938 = vmatpush1.bf16.msra.mxu0 0
      %2939 = vmatprep.subr.bf16.mxu0 0
      %2940 = vmatpush1.bf16.msra.mxu0 0
      %2941 = vmatprep.subr.bf16.mxu0 0
      %2942 = vmatpush1.bf16.msra.mxu0 0
      %2943 = vmatprep.mubr.bf16.mxu0 0
      %2944 = vmatmul.mubr.bf16.gmra.mrb[0].mxu0 %v2856
      %v2945 = vpop.f32.mrb[0].mxu0
      %v2946 = vadd.f32 0.0, %v2945
      %v2947 = vpop.f32.mrb[0].mxu0
      %v2948 = vadd.f32 0.0, %v2947
      %v2949 = vpop.f32.mrb[0].mxu0
      %v2950 = vpop.f32.mrb[0].mxu0
      %2951 = vdwg.mxu0
      %v2952 = vadd.f32 %v2837, %v2905
      %v2953 = vadd.f32 %v2838, %v2907
      %v2954 = vadd.f32 %v2839, %v2946
      %v2955 = vadd.f32 %v2840, %v2948
      %s2956 = scalar_lea.vmem %s7, 44
      %v2957 = vld [vmem:[%s2956] sm:$0xf]
      %2958 = vrot.lane.b32.xlu0 %v635, 57
      %v2959 = vpop.permute.xlu0 %2958
      %2960 = vrot.lane.b32.xlu0 %v636, 57
      %v2961 = vpop.permute.xlu0 %2960
      %2962 = vrot.lane.b32.xlu0 %v637, 57
      %v2963 = vpop.permute.xlu0 %2962
      %2964 = vrot.lane.b32.xlu0 %v638, 57
      %v2965 = vpop.permute.xlu0 %2964
      %v2966 = vsel %vm994, %v2959, %v2961
      %v2967 = vsel %vm994, %v2961, %v2963
      %v2968 = vsel %vm994, %v2963, %v2965
      %v2970 = vsel %vm437, %v2957, 0
      %v2973 = vsel %vm441, %v2966, 0
      %v2976 = vsel %vm441, %v2967, 0
      %v2979 = vsel %vm441, %v2968, 0
      %v2982 = vsel %vm441, %v2965, 0
      %2984 = vmatprep.subr.bf16.mxu0 %v2976
      %2985 = vmatpush1.bf16.msra.mxu0 %v2973
      %2986 = vmatprep.subr.bf16.mxu0 0
      %2987 = vmatpush1.bf16.msra.mxu0 0
      %2988 = vmatprep.subr.bf16.mxu0 0
      %2989 = vmatpush1.bf16.msra.mxu0 0
      %2990 = vmatprep.subr.bf16.mxu0 0
      %2991 = vmatpush1.bf16.msra.mxu0 0
      %2992 = vmatprep.subr.bf16.mxu0 0
      %2993 = vmatpush1.bf16.msra.mxu0 0
      %2994 = vmatprep.subr.bf16.mxu0 0
      %2995 = vmatpush1.bf16.msra.mxu0 0
      %2996 = vmatprep.subr.bf16.mxu0 0
      %2997 = vmatpush1.bf16.msra.mxu0 0
      %2998 = vmatprep.subr.bf16.mxu0 0
      %2999 = vmatpush1.bf16.msra.mxu0 0
      %3000 = vmatprep.subr.bf16.mxu0 0
      %3001 = vmatpush1.bf16.msra.mxu0 0
      %3002 = vmatprep.subr.bf16.mxu0 0
      %3003 = vmatpush1.bf16.msra.mxu0 0
      %3004 = vmatprep.subr.bf16.mxu0 0
      %3005 = vmatpush1.bf16.msra.mxu0 0
      %3006 = vmatprep.subr.bf16.mxu0 0
      %3007 = vmatpush1.bf16.msra.mxu0 0
      %3008 = vmatprep.subr.bf16.mxu0 0
      %3009 = vmatpush1.bf16.msra.mxu0 0
      %3010 = vmatprep.subr.bf16.mxu0 0
      %3011 = vmatpush1.bf16.msra.mxu0 0
      %3012 = vmatprep.subr.bf16.mxu0 0
      %3013 = vmatpush1.bf16.msra.mxu0 0
      %3014 = vmatprep.subr.bf16.mxu0 0
      %3015 = vmatpush1.bf16.msra.mxu0 0
      %3016 = vmatprep.mubr.bf16.mxu0 0
      %3017 = vmatmul.mubr.bf16.gmra.mrb[0].mxu0 %v2970
      %v3018 = vpop.f32.mrb[0].mxu0
      %v3019 = vadd.f32 0.0, %v3018
      %v3020 = vpop.f32.mrb[0].mxu0
      %v3021 = vadd.f32 0.0, %v3020
      %v3022 = vpop.f32.mrb[0].mxu0
      %v3023 = vpop.f32.mrb[0].mxu0
      %3024 = vdwg.mxu0
      %3025 = vmatprep.subr.bf16.mxu0 %v2982
      %3026 = vmatpush1.bf16.msra.mxu0 %v2979
      %3027 = vmatprep.subr.bf16.mxu0 0
      %3028 = vmatpush1.bf16.msra.mxu0 0
      %3029 = vmatprep.subr.bf16.mxu0 0
      %3030 = vmatpush1.bf16.msra.mxu0 0
      %3031 = vmatprep.subr.bf16.mxu0 0
      %3032 = vmatpush1.bf16.msra.mxu0 0
      %3033 = vmatprep.subr.bf16.mxu0 0
      %3034 = vmatpush1.bf16.msra.mxu0 0
      %3035 = vmatprep.subr.bf16.mxu0 0
      %3036 = vmatpush1.bf16.msra.mxu0 0
      %3037 = vmatprep.subr.bf16.mxu0 0
      %3038 = vmatpush1.bf16.msra.mxu0 0
      %3039 = vmatprep.subr.bf16.mxu0 0
      %3040 = vmatpush1.bf16.msra.mxu0 0
      %3041 = vmatprep.subr.bf16.mxu0 0
      %3042 = vmatpush1.bf16.msra.mxu0 0
      %3043 = vmatprep.subr.bf16.mxu0 0
      %3044 = vmatpush1.bf16.msra.mxu0 0
      %3045 = vmatprep.subr.bf16.mxu0 0
      %3046 = vmatpush1.bf16.msra.mxu0 0
      %3047 = vmatprep.subr.bf16.mxu0 0
      %3048 = vmatpush1.bf16.msra.mxu0 0
      %3049 = vmatprep.subr.bf16.mxu0 0
      %3050 = vmatpush1.bf16.msra.mxu0 0
      %3051 = vmatprep.subr.bf16.mxu0 0
      %3052 = vmatpush1.bf16.msra.mxu0 0
      %3053 = vmatprep.subr.bf16.mxu0 0
      %3054 = vmatpush1.bf16.msra.mxu0 0
      %3055 = vmatprep.subr.bf16.mxu0 0
      %3056 = vmatpush1.bf16.msra.mxu0 0
      %3057 = vmatprep.mubr.bf16.mxu0 0
      %3058 = vmatmul.mubr.bf16.gmra.mrb[0].mxu0 %v2970
      %v3059 = vpop.f32.mrb[0].mxu0
      %v3060 = vadd.f32 0.0, %v3059
      %v3061 = vpop.f32.mrb[0].mxu0
      %v3062 = vadd.f32 0.0, %v3061
      %v3063 = vpop.f32.mrb[0].mxu0
      %v3064 = vpop.f32.mrb[0].mxu0
      %3065 = vdwg.mxu0
      %v3066 = vadd.f32 %v2952, %v3019
      %v3067 = vadd.f32 %v2953, %v3021
      %v3068 = vadd.f32 %v2954, %v3060
      %v3069 = vadd.f32 %v2955, %v3062
      %s3070 = scalar_lea.vmem %s7, 48
      %v3071 = vld [vmem:[%s3070] sm:$0xf]
      %3072 = vrot.lane.b32.xlu0 %v635, 56
      %v3073 = vpop.permute.xlu0 %3072
      %3074 = vrot.lane.b32.xlu0 %v636, 56
      %v3075 = vpop.permute.xlu0 %3074
      %3076 = vrot.lane.b32.xlu0 %v637, 56
      %v3077 = vpop.permute.xlu0 %3076
      %3078 = vrot.lane.b32.xlu0 %v638, 56
      %v3079 = vpop.permute.xlu0 %3078
      %v3080 = vsel %vm1109, %v3073, %v3075
      %v3081 = vsel %vm1109, %v3075, %v3077
      %v3082 = vsel %vm1109, %v3077, %v3079
      %v3084 = vsel %vm437, %v3071, 0
      %v3087 = vsel %vm441, %v3080, 0
      %v3090 = vsel %vm441, %v3081, 0
      %v3093 = vsel %vm441, %v3082, 0
      %v3096 = vsel %vm441, %v3079, 0
      %3098 = vmatprep.subr.bf16.mxu0 %v3090
      %3099 = vmatpush1.bf16.msra.mxu0 %v3087
      %3100 = vmatprep.subr.bf16.mxu0 0
      %3101 = vmatpush1.bf16.msra.mxu0 0
      %3102 = vmatprep.subr.bf16.mxu0 0
      %3103 = vmatpush1.bf16.msra.mxu0 0
      %3104 = vmatprep.subr.bf16.mxu0 0
      %3105 = vmatpush1.bf16.msra.mxu0 0
      %3106 = vmatprep.subr.bf16.mxu0 0
      %3107 = vmatpush1.bf16.msra.mxu0 0
      %3108 = vmatprep.subr.bf16.mxu0 0
      %3109 = vmatpush1.bf16.msra.mxu0 0
      %3110 = vmatprep.subr.bf16.mxu0 0
      %3111 = vmatpush1.bf16.msra.mxu0 0
      %3112 = vmatprep.subr.bf16.mxu0 0
      %3113 = vmatpush1.bf16.msra.mxu0 0
      %3114 = vmatprep.subr.bf16.mxu0 0
      %3115 = vmatpush1.bf16.msra.mxu0 0
      %3116 = vmatprep.subr.bf16.mxu0 0
      %3117 = vmatpush1.bf16.msra.mxu0 0
      %3118 = vmatprep.subr.bf16.mxu0 0
      %3119 = vmatpush1.bf16.msra.mxu0 0
      %3120 = vmatprep.subr.bf16.mxu0 0
      %3121 = vmatpush1.bf16.msra.mxu0 0
      %3122 = vmatprep.subr.bf16.mxu0 0
      %3123 = vmatpush1.bf16.msra.mxu0 0
      %3124 = vmatprep.subr.bf16.mxu0 0
      %3125 = vmatpush1.bf16.msra.mxu0 0
      %3126 = vmatprep.subr.bf16.mxu0 0
      %3127 = vmatpush1.bf16.msra.mxu0 0
      %3128 = vmatprep.subr.bf16.mxu0 0
      %3129 = vmatpush1.bf16.msra.mxu0 0
      %3130 = vmatprep.mubr.bf16.mxu0 0
      %3131 = vmatmul.mubr.bf16.gmra.mrb[0].mxu0 %v3084
      %v3132 = vpop.f32.mrb[0].mxu0
      %v3133 = vadd.f32 0.0, %v3132
      %v3134 = vpop.f32.mrb[0].mxu0
      %v3135 = vadd.f32 0.0, %v3134
      %v3136 = vpop.f32.mrb[0].mxu0
      %v3137 = vpop.f32.mrb[0].mxu0
      %3138 = vdwg.mxu0
      %3139 = vmatprep.subr.bf16.mxu0 %v3096
      %3140 = vmatpush1.bf16.msra.mxu0 %v3093
      %3141 = vmatprep.subr.bf16.mxu0 0
      %3142 = vmatpush1.bf16.msra.mxu0 0
      %3143 = vmatprep.subr.bf16.mxu0 0
      %3144 = vmatpush1.bf16.msra.mxu0 0
      %3145 = vmatprep.subr.bf16.mxu0 0
      %3146 = vmatpush1.bf16.msra.mxu0 0
      %3147 = vmatprep.subr.bf16.mxu0 0
      %3148 = vmatpush1.bf16.msra.mxu0 0
      %3149 = vmatprep.subr.bf16.mxu0 0
      %3150 = vmatpush1.bf16.msra.mxu0 0
      %3151 = vmatprep.subr.bf16.mxu0 0
      %3152 = vmatpush1.bf16.msra.mxu0 0
      %3153 = vmatprep.subr.bf16.mxu0 0
      %3154 = vmatpush1.bf16.msra.mxu0 0
      %3155 = vmatprep.subr.bf16.mxu0 0
      %3156 = vmatpush1.bf16.msra.mxu0 0
      %3157 = vmatprep.subr.bf16.mxu0 0
      %3158 = vmatpush1.bf16.msra.mxu0 0
      %3159 = vmatprep.subr.bf16.mxu0 0
      %3160 = vmatpush1.bf16.msra.mxu0 0
      %3161 = vmatprep.subr.bf16.mxu0 0
      %3162 = vmatpush1.bf16.msra.mxu0 0
      %3163 = vmatprep.subr.bf16.mxu0 0
      %3164 = vmatpush1.bf16.msra.mxu0 0
      %3165 = vmatprep.subr.bf16.mxu0 0
      %3166 = vmatpush1.bf16.msra.mxu0 0
      %3167 = vmatprep.subr.bf16.mxu0 0
      %3168 = vmatpush1.bf16.msra.mxu0 0
      %3169 = vmatprep.subr.bf16.mxu0 0
      %3170 = vmatpush1.bf16.msra.mxu0 0
      %3171 = vmatprep.mubr.bf16.mxu0 0
      %3172 = vmatmul.mubr.bf16.gmra.mrb[0].mxu0 %v3084
      %v3173 = vpop.f32.mrb[0].mxu0
      %v3174 = vadd.f32 0.0, %v3173
      %v3175 = vpop.f32.mrb[0].mxu0
      %v3176 = vadd.f32 0.0, %v3175
      %v3177 = vpop.f32.mrb[0].mxu0
      %v3178 = vpop.f32.mrb[0].mxu0
      %3179 = vdwg.mxu0
      %v3180 = vadd.f32 %v3066, %v3133
      %v3181 = vadd.f32 %v3067, %v3135
      %v3182 = vadd.f32 %v3068, %v3174
      %v3183 = vadd.f32 %v3069, %v3176
      %s3184 = scalar_lea.vmem %s7, 52
      %v3185 = vld [vmem:[%s3184] sm:$0xf]
      %3186 = vrot.lane.b32.xlu0 %v635, 55
      %v3187 = vpop.permute.xlu0 %3186
      %3188 = vrot.lane.b32.xlu0 %v636, 55
      %v3189 = vpop.permute.xlu0 %3188
      %3190 = vrot.lane.b32.xlu0 %v637, 55
      %v3191 = vpop.permute.xlu0 %3190
      %3192 = vrot.lane.b32.xlu0 %v638, 55
      %v3193 = vpop.permute.xlu0 %3192
      %v3194 = vsel %vm1224, %v3187, %v3189
      %v3195 = vsel %vm1224, %v3189, %v3191
      %v3196 = vsel %vm1224, %v3191, %v3193
      %v3198 = vsel %vm437, %v3185, 0
      %v3201 = vsel %vm441, %v3194, 0
      %v3204 = vsel %vm441, %v3195, 0
      %v3207 = vsel %vm441, %v3196, 0
      %v3210 = vsel %vm441, %v3193, 0
      %3212 = vmatprep.subr.bf16.mxu0 %v3204
      %3213 = vmatpush1.bf16.msra.mxu0 %v3201
      %3214 = vmatprep.subr.bf16.mxu0 0
      %3215 = vmatpush1.bf16.msra.mxu0 0
      %3216 = vmatprep.subr.bf16.mxu0 0
      %3217 = vmatpush1.bf16.msra.mxu0 0
      %3218 = vmatprep.subr.bf16.mxu0 0
      %3219 = vmatpush1.bf16.msra.mxu0 0
      %3220 = vmatprep.subr.bf16.mxu0 0
      %3221 = vmatpush1.bf16.msra.mxu0 0
      %3222 = vmatprep.subr.bf16.mxu0 0
      %3223 = vmatpush1.bf16.msra.mxu0 0
      %3224 = vmatprep.subr.bf16.mxu0 0
      %3225 = vmatpush1.bf16.msra.mxu0 0
      %3226 = vmatprep.subr.bf16.mxu0 0
      %3227 = vmatpush1.bf16.msra.mxu0 0
      %3228 = vmatprep.subr.bf16.mxu0 0
      %3229 = vmatpush1.bf16.msra.mxu0 0
      %3230 = vmatprep.subr.bf16.mxu0 0
      %3231 = vmatpush1.bf16.msra.mxu0 0
      %3232 = vmatprep.subr.bf16.mxu0 0
      %3233 = vmatpush1.bf16.msra.mxu0 0
      %3234 = vmatprep.subr.bf16.mxu0 0
      %3235 = vmatpush1.bf16.msra.mxu0 0
      %3236 = vmatprep.subr.bf16.mxu0 0
      %3237 = vmatpush1.bf16.msra.mxu0 0
      %3238 = vmatprep.subr.bf16.mxu0 0
      %3239 = vmatpush1.bf16.msra.mxu0 0
      %3240 = vmatprep.subr.bf16.mxu0 0
      %3241 = vmatpush1.bf16.msra.mxu0 0
      %3242 = vmatprep.subr.bf16.mxu0 0
      %3243 = vmatpush1.bf16.msra.mxu0 0
      %3244 = vmatprep.mubr.bf16.mxu0 0
      %3245 = vmatmul.mubr.bf16.gmra.mrb[0].mxu0 %v3198
      %v3246 = vpop.f32.mrb[0].mxu0
      %v3247 = vadd.f32 0.0, %v3246
      %v3248 = vpop.f32.mrb[0].mxu0
      %v3249 = vadd.f32 0.0, %v3248
      %v3250 = vpop.f32.mrb[0].mxu0
      %v3251 = vpop.f32.mrb[0].mxu0
      %3252 = vdwg.mxu0
      %3253 = vmatprep.subr.bf16.mxu0 %v3210
      %3254 = vmatpush1.bf16.msra.mxu0 %v3207
      %3255 = vmatprep.subr.bf16.mxu0 0
      %3256 = vmatpush1.bf16.msra.mxu0 0
      %3257 = vmatprep.subr.bf16.mxu0 0
      %3258 = vmatpush1.bf16.msra.mxu0 0
      %3259 = vmatprep.subr.bf16.mxu0 0
      %3260 = vmatpush1.bf16.msra.mxu0 0
      %3261 = vmatprep.subr.bf16.mxu0 0
      %3262 = vmatpush1.bf16.msra.mxu0 0
      %3263 = vmatprep.subr.bf16.mxu0 0
      %3264 = vmatpush1.bf16.msra.mxu0 0
      %3265 = vmatprep.subr.bf16.mxu0 0
      %3266 = vmatpush1.bf16.msra.mxu0 0
      %3267 = vmatprep.subr.bf16.mxu0 0
      %3268 = vmatpush1.bf16.msra.mxu0 0
      %3269 = vmatprep.subr.bf16.mxu0 0
      %3270 = vmatpush1.bf16.msra.mxu0 0
      %3271 = vmatprep.subr.bf16.mxu0 0
      %3272 = vmatpush1.bf16.msra.mxu0 0
      %3273 = vmatprep.subr.bf16.mxu0 0
      %3274 = vmatpush1.bf16.msra.mxu0 0
      %3275 = vmatprep.subr.bf16.mxu0 0
      %3276 = vmatpush1.bf16.msra.mxu0 0
      %3277 = vmatprep.subr.bf16.mxu0 0
      %3278 = vmatpush1.bf16.msra.mxu0 0
      %3279 = vmatprep.subr.bf16.mxu0 0
      %3280 = vmatpush1.bf16.msra.mxu0 0
      %3281 = vmatprep.subr.bf16.mxu0 0
      %3282 = vmatpush1.bf16.msra.mxu0 0
      %3283 = vmatprep.subr.bf16.mxu0 0
      %3284 = vmatpush1.bf16.msra.mxu0 0
      %3285 = vmatprep.mubr.bf16.mxu0 0
      %3286 = vmatmul.mubr.bf16.gmra.mrb[0].mxu0 %v3198
      %v3287 = vpop.f32.mrb[0].mxu0
      %v3288 = vadd.f32 0.0, %v3287
      %v3289 = vpop.f32.mrb[0].mxu0
      %v3290 = vadd.f32 0.0, %v3289
      %v3291 = vpop.f32.mrb[0].mxu0
      %v3292 = vpop.f32.mrb[0].mxu0
      %3293 = vdwg.mxu0
      %v3294 = vadd.f32 %v3180, %v3247
      %v3295 = vadd.f32 %v3181, %v3249
      %v3296 = vadd.f32 %v3182, %v3288
      %v3297 = vadd.f32 %v3183, %v3290
      %s3298 = scalar_lea.vmem %s7, 56
      %v3299 = vld [vmem:[%s3298] sm:$0xf]
      %3300 = vrot.lane.b32.xlu0 %v635, 54
      %v3301 = vpop.permute.xlu0 %3300
      %3302 = vrot.lane.b32.xlu0 %v636, 54
      %v3303 = vpop.permute.xlu0 %3302
      %3304 = vrot.lane.b32.xlu0 %v637, 54
      %v3305 = vpop.permute.xlu0 %3304
      %3306 = vrot.lane.b32.xlu0 %v638, 54
      %v3307 = vpop.permute.xlu0 %3306
      %vm3308 = vcmask 441344
      %v3309 = vsel %vm3308, %v3301, %v3303
      %v3310 = vsel %vm3308, %v3303, %v3305
      %v3311 = vsel %vm3308, %v3305, %v3307
      %v3313 = vsel %vm437, %v3299, 0
      %v3316 = vsel %vm441, %v3309, 0
      %v3319 = vsel %vm441, %v3310, 0
      %v3322 = vsel %vm441, %v3311, 0
      %v3325 = vsel %vm441, %v3307, 0
      %3327 = vmatprep.subr.bf16.mxu0 %v3319
      %3328 = vmatpush1.bf16.msra.mxu0 %v3316
      %3329 = vmatprep.subr.bf16.mxu0 0
      %3330 = vmatpush1.bf16.msra.mxu0 0
      %3331 = vmatprep.subr.bf16.mxu0 0
      %3332 = vmatpush1.bf16.msra.mxu0 0
      %3333 = vmatprep.subr.bf16.mxu0 0
      %3334 = vmatpush1.bf16.msra.mxu0 0
      %3335 = vmatprep.subr.bf16.mxu0 0
      %3336 = vmatpush1.bf16.msra.mxu0 0
      %3337 = vmatprep.subr.bf16.mxu0 0
      %3338 = vmatpush1.bf16.msra.mxu0 0
      %3339 = vmatprep.subr.bf16.mxu0 0
      %3340 = vmatpush1.bf16.msra.mxu0 0
      %3341 = vmatprep.subr.bf16.mxu0 0
      %3342 = vmatpush1.bf16.msra.mxu0 0
      %3343 = vmatprep.subr.bf16.mxu0 0
      %3344 = vmatpush1.bf16.msra.mxu0 0
      %3345 = vmatprep.subr.bf16.mxu0 0
      %3346 = vmatpush1.bf16.msra.mxu0 0
      %3347 = vmatprep.subr.bf16.mxu0 0
      %3348 = vmatpush1.bf16.msra.mxu0 0
      %3349 = vmatprep.subr.bf16.mxu0 0
      %3350 = vmatpush1.bf16.msra.mxu0 0
      %3351 = vmatprep.subr.bf16.mxu0 0
      %3352 = vmatpush1.bf16.msra.mxu0 0
      %3353 = vmatprep.subr.bf16.mxu0 0
      %3354 = vmatpush1.bf16.msra.mxu0 0
      %3355 = vmatprep.subr.bf16.mxu0 0
      %3356 = vmatpush1.bf16.msra.mxu0 0
      %3357 = vmatprep.subr.bf16.mxu0 0
      %3358 = vmatpush1.bf16.msra.mxu0 0
      %3359 = vmatprep.mubr.bf16.mxu0 0
      %3360 = vmatmul.mubr.bf16.gmra.mrb[0].mxu0 %v3313
      %v3361 = vpop.f32.mrb[0].mxu0
      %v3362 = vadd.f32 0.0, %v3361
      %v3363 = vpop.f32.mrb[0].mxu0
      %v3364 = vadd.f32 0.0, %v3363
      %v3365 = vpop.f32.mrb[0].mxu0
      %v3366 = vpop.f32.mrb[0].mxu0
      %3367 = vdwg.mxu0
      %3368 = vmatprep.subr.bf16.mxu0 %v3325
      %3369 = vmatpush1.bf16.msra.mxu0 %v3322
      %3370 = vmatprep.subr.bf16.mxu0 0
      %3371 = vmatpush1.bf16.msra.mxu0 0
      %3372 = vmatprep.subr.bf16.mxu0 0
      %3373 = vmatpush1.bf16.msra.mxu0 0
      %3374 = vmatprep.subr.bf16.mxu0 0
      %3375 = vmatpush1.bf16.msra.mxu0 0
      %3376 = vmatprep.subr.bf16.mxu0 0
      %3377 = vmatpush1.bf16.msra.mxu0 0
      %3378 = vmatprep.subr.bf16.mxu0 0
      %3379 = vmatpush1.bf16.msra.mxu0 0
      %3380 = vmatprep.subr.bf16.mxu0 0
      %3381 = vmatpush1.bf16.msra.mxu0 0
      %3382 = vmatprep.subr.bf16.mxu0 0
      %3383 = vmatpush1.bf16.msra.mxu0 0
      %3384 = vmatprep.subr.bf16.mxu0 0
      %3385 = vmatpush1.bf16.msra.mxu0 0
      %3386 = vmatprep.subr.bf16.mxu0 0
      %3387 = vmatpush1.bf16.msra.mxu0 0
      %3388 = vmatprep.subr.bf16.mxu0 0
      %3389 = vmatpush1.bf16.msra.mxu0 0
      %3390 = vmatprep.subr.bf16.mxu0 0
      %3391 = vmatpush1.bf16.msra.mxu0 0
      %3392 = vmatprep.subr.bf16.mxu0 0
      %3393 = vmatpush1.bf16.msra.mxu0 0
      %3394 = vmatprep.subr.bf16.mxu0 0
      %3395 = vmatpush1.bf16.msra.mxu0 0
      %3396 = vmatprep.subr.bf16.mxu0 0
      %3397 = vmatpush1.bf16.msra.mxu0 0
      %3398 = vmatprep.subr.bf16.mxu0 0
      %3399 = vmatpush1.bf16.msra.mxu0 0
      %3400 = vmatprep.mubr.bf16.mxu0 0
      %3401 = vmatmul.mubr.bf16.gmra.mrb[0].mxu0 %v3313
      %v3402 = vpop.f32.mrb[0].mxu0
      %v3403 = vadd.f32 0.0, %v3402
      %v3404 = vpop.f32.mrb[0].mxu0
      %v3405 = vadd.f32 0.0, %v3404
      %v3406 = vpop.f32.mrb[0].mxu0
      %v3407 = vpop.f32.mrb[0].mxu0
      %3408 = vdwg.mxu0
      %v3409 = vadd.f32 %v3294, %v3362
      %v3410 = vadd.f32 %v3295, %v3364
      %v3411 = vadd.f32 %v3296, %v3403
      %v3412 = vadd.f32 %v3297, %v3405
      %s3413 = scalar_lea.vmem %s7, 60
      %v3414 = vld [vmem:[%s3413] sm:$0xf]
      %3416 = vrot.lane.b32.xlu0 %v635, 34
      %v3417 = vpop.permute.xlu0 %3416
      %3418 = vrot.lane.b32.xlu0 %v636, 34
      %v3419 = vpop.permute.xlu0 %3418
      %3420 = vrot.lane.b32.xlu0 %v637, 34
      %v3421 = vpop.permute.xlu0 %3420
      %3422 = vrot.lane.b32.xlu0 %v638, 34
      %v3423 = vpop.permute.xlu0 %3422
      %3424 = vrot.lane.b32.xlu0 %v639, 34
      %v3425 = vpop.permute.xlu0 %3424
      %vm3426 = vcmask 277504
      %v3427 = vsel %vm3426, %v3417, %v3419
      %v3428 = vsel %vm3426, %v3419, %v3421
      %v3429 = vsel %vm3426, %v3421, %v3423
      %v3430 = vsel %vm3426, %v3423, %v3425
      %v3432 = vsel %vm437, %v3414, 0
      %v3435 = vsel %vm441, %v3427, 0
      %v3438 = vsel %vm441, %v3428, 0
      %v3441 = vsel %vm441, %v3429, 0
      %v3444 = vsel %vm441, %v3430, 0
      %3446 = vmatprep.subr.bf16.mxu0 %v3438
      %3447 = vmatpush1.bf16.msra.mxu0 %v3435
      %3448 = vmatprep.subr.bf16.mxu0 0
      %3449 = vmatpush1.bf16.msra.mxu0 0
      %3450 = vmatprep.subr.bf16.mxu0 0
      %3451 = vmatpush1.bf16.msra.mxu0 0
      %3452 = vmatprep.subr.bf16.mxu0 0
      %3453 = vmatpush1.bf16.msra.mxu0 0
      %3454 = vmatprep.subr.bf16.mxu0 0
      %3455 = vmatpush1.bf16.msra.mxu0 0
      %3456 = vmatprep.subr.bf16.mxu0 0
      %3457 = vmatpush1.bf16.msra.mxu0 0
      %3458 = vmatprep.subr.bf16.mxu0 0
      %3459 = vmatpush1.bf16.msra.mxu0 0
      %3460 = vmatprep.subr.bf16.mxu0 0
      %3461 = vmatpush1.bf16.msra.mxu0 0
      %3462 = vmatprep.subr.bf16.mxu0 0
      %3463 = vmatpush1.bf16.msra.mxu0 0
      %3464 = vmatprep.subr.bf16.mxu0 0
      %3465 = vmatpush1.bf16.msra.mxu0 0
      %3466 = vmatprep.subr.bf16.mxu0 0
      %3467 = vmatpush1.bf16.msra.mxu0 0
      %3468 = vmatprep.subr.bf16.mxu0 0
      %3469 = vmatpush1.bf16.msra.mxu0 0
      %3470 = vmatprep.subr.bf16.mxu0 0
      %3471 = vmatpush1.bf16.msra.mxu0 0
      %3472 = vmatprep.subr.bf16.mxu0 0
      %3473 = vmatpush1.bf16.msra.mxu0 0
      %3474 = vmatprep.subr.bf16.mxu0 0
      %3475 = vmatpush1.bf16.msra.mxu0 0
      %3476 = vmatprep.subr.bf16.mxu0 0
      %3477 = vmatpush1.bf16.msra.mxu0 0
      %3478 = vmatprep.mubr.bf16.mxu0 0
      %3479 = vmatmul.mubr.bf16.gmra.mrb[0].mxu0 %v3432
      %v3480 = vpop.f32.mrb[0].mxu0
      %v3481 = vadd.f32 0.0, %v3480
      %v3482 = vpop.f32.mrb[0].mxu0
      %v3483 = vadd.f32 0.0, %v3482
      %v3484 = vpop.f32.mrb[0].mxu0
      %v3485 = vpop.f32.mrb[0].mxu0
      %3486 = vdwg.mxu0
      %3487 = vmatprep.subr.bf16.mxu0 %v3444
      %3488 = vmatpush1.bf16.msra.mxu0 %v3441
      %3489 = vmatprep.subr.bf16.mxu0 0
      %3490 = vmatpush1.bf16.msra.mxu0 0
      %3491 = vmatprep.subr.bf16.mxu0 0
      %3492 = vmatpush1.bf16.msra.mxu0 0
      %3493 = vmatprep.subr.bf16.mxu0 0
      %3494 = vmatpush1.bf16.msra.mxu0 0
      %3495 = vmatprep.subr.bf16.mxu0 0
      %3496 = vmatpush1.bf16.msra.mxu0 0
      %3497 = vmatprep.subr.bf16.mxu0 0
      %3498 = vmatpush1.bf16.msra.mxu0 0
      %3499 = vmatprep.subr.bf16.mxu0 0
      %3500 = vmatpush1.bf16.msra.mxu0 0
      %3501 = vmatprep.subr.bf16.mxu0 0
      %3502 = vmatpush1.bf16.msra.mxu0 0
      %3503 = vmatprep.subr.bf16.mxu0 0
      %3504 = vmatpush1.bf16.msra.mxu0 0
      %3505 = vmatprep.subr.bf16.mxu0 0
      %3506 = vmatpush1.bf16.msra.mxu0 0
      %3507 = vmatprep.subr.bf16.mxu0 0
      %3508 = vmatpush1.bf16.msra.mxu0 0
      %3509 = vmatprep.subr.bf16.mxu0 0
      %3510 = vmatpush1.bf16.msra.mxu0 0
      %3511 = vmatprep.subr.bf16.mxu0 0
      %3512 = vmatpush1.bf16.msra.mxu0 0
      %3513 = vmatprep.subr.bf16.mxu0 0
      %3514 = vmatpush1.bf16.msra.mxu0 0
      %3515 = vmatprep.subr.bf16.mxu0 0
      %3516 = vmatpush1.bf16.msra.mxu0 0
      %3517 = vmatprep.subr.bf16.mxu0 0
      %3518 = vmatpush1.bf16.msra.mxu0 0
      %3519 = vmatprep.mubr.bf16.mxu0 0
      %3520 = vmatmul.mubr.bf16.gmra.mrb[0].mxu0 %v3432
      %v3521 = vpop.f32.mrb[0].mxu0
      %v3522 = vadd.f32 0.0, %v3521
      %v3523 = vpop.f32.mrb[0].mxu0
      %v3524 = vadd.f32 0.0, %v3523
      %v3525 = vpop.f32.mrb[0].mxu0
      %v3526 = vpop.f32.mrb[0].mxu0
      %3527 = vdwg.mxu0
      %v3528 = vadd.f32 %v3409, %v3481
      %v3529 = vadd.f32 %v3410, %v3483
      %v3530 = vadd.f32 %v3411, %v3522
      %v3531 = vadd.f32 %v3412, %v3524
      %s3532 = scalar_lea.vmem %s7, 64
      %v3533 = vld [vmem:[%s3532] sm:$0xf]
      %3534 = vrot.lane.b32.xlu0 %v635, 33
      %v3535 = vpop.permute.xlu0 %3534
      %3536 = vrot.lane.b32.xlu0 %v636, 33
      %v3537 = vpop.permute.xlu0 %3536
      %3538 = vrot.lane.b32.xlu0 %v637, 33
      %v3539 = vpop.permute.xlu0 %3538
      %3540 = vrot.lane.b32.xlu0 %v638, 33
      %v3541 = vpop.permute.xlu0 %3540
      %3542 = vrot.lane.b32.xlu0 %v639, 33
      %v3543 = vpop.permute.xlu0 %3542
      %v3544 = vsel %vm1343, %v3535, %v3537
      %v3545 = vsel %vm1343, %v3537, %v3539
      %v3546 = vsel %vm1343, %v3539, %v3541
      %v3547 = vsel %vm1343, %v3541, %v3543
      %v3549 = vsel %vm437, %v3533, 0
      %v3552 = vsel %vm441, %v3544, 0
      %v3555 = vsel %vm441, %v3545, 0
      %v3558 = vsel %vm441, %v3546, 0
      %v3561 = vsel %vm441, %v3547, 0
      %3563 = vmatprep.subr.bf16.mxu0 %v3555
      %3564 = vmatpush1.bf16.msra.mxu0 %v3552
      %3565 = vmatprep.subr.bf16.mxu0 0
      %3566 = vmatpush1.bf16.msra.mxu0 0
      %3567 = vmatprep.subr.bf16.mxu0 0
      %3568 = vmatpush1.bf16.msra.mxu0 0
      %3569 = vmatprep.subr.bf16.mxu0 0
      %3570 = vmatpush1.bf16.msra.mxu0 0
      %3571 = vmatprep.subr.bf16.mxu0 0
      %3572 = vmatpush1.bf16.msra.mxu0 0
      %3573 = vmatprep.subr.bf16.mxu0 0
      %3574 = vmatpush1.bf16.msra.mxu0 0
      %3575 = vmatprep.subr.bf16.mxu0 0
      %3576 = vmatpush1.bf16.msra.mxu0 0
      %3577 = vmatprep.subr.bf16.mxu0 0
      %3578 = vmatpush1.bf16.msra.mxu0 0
      %3579 = vmatprep.subr.bf16.mxu0 0
      %3580 = vmatpush1.bf16.msra.mxu0 0
      %3581 = vmatprep.subr.bf16.mxu0 0
      %3582 = vmatpush1.bf16.msra.mxu0 0
      %3583 = vmatprep.subr.bf16.mxu0 0
      %3584 = vmatpush1.bf16.msra.mxu0 0
      %3585 = vmatprep.subr.bf16.mxu0 0
      %3586 = vmatpush1.bf16.msra.mxu0 0
      %3587 = vmatprep.subr.bf16.mxu0 0
      %3588 = vmatpush1.bf16.msra.mxu0 0
      %3589 = vmatprep.subr.bf16.mxu0 0
      %3590 = vmatpush1.bf16.msra.mxu0 0
      %3591 = vmatprep.subr.bf16.mxu0 0
      %3592 = vmatpush1.bf16.msra.mxu0 0
      %3593 = vmatprep.subr.bf16.mxu0 0
      %3594 = vmatpush1.bf16.msra.mxu0 0
      %3595 = vmatprep.mubr.bf16.mxu0 0
      %3596 = vmatmul.mubr.bf16.gmra.mrb[0].mxu0 %v3549
      %v3597 = vpop.f32.mrb[0].mxu0
      %v3598 = vadd.f32 0.0, %v3597
      %v3599 = vpop.f32.mrb[0].mxu0
      %v3600 = vadd.f32 0.0, %v3599
      %v3601 = vpop.f32.mrb[0].mxu0
      %v3602 = vpop.f32.mrb[0].mxu0
      %3603 = vdwg.mxu0
      %3604 = vmatprep.subr.bf16.mxu0 %v3561
      %3605 = vmatpush1.bf16.msra.mxu0 %v3558
      %3606 = vmatprep.subr.bf16.mxu0 0
      %3607 = vmatpush1.bf16.msra.mxu0 0
      %3608 = vmatprep.subr.bf16.mxu0 0
      %3609 = vmatpush1.bf16.msra.mxu0 0
      %3610 = vmatprep.subr.bf16.mxu0 0
      %3611 = vmatpush1.bf16.msra.mxu0 0
      %3612 = vmatprep.subr.bf16.mxu0 0
      %3613 = vmatpush1.bf16.msra.mxu0 0
      %3614 = vmatprep.subr.bf16.mxu0 0
      %3615 = vmatpush1.bf16.msra.mxu0 0
      %3616 = vmatprep.subr.bf16.mxu0 0
      %3617 = vmatpush1.bf16.msra.mxu0 0
      %3618 = vmatprep.subr.bf16.mxu0 0
      %3619 = vmatpush1.bf16.msra.mxu0 0
      %3620 = vmatprep.subr.bf16.mxu0 0
      %3621 = vmatpush1.bf16.msra.mxu0 0
      %3622 = vmatprep.subr.bf16.mxu0 0
      %3623 = vmatpush1.bf16.msra.mxu0 0
      %3624 = vmatprep.subr.bf16.mxu0 0
      %3625 = vmatpush1.bf16.msra.mxu0 0
      %3626 = vmatprep.subr.bf16.mxu0 0
      %3627 = vmatpush1.bf16.msra.mxu0 0
      %3628 = vmatprep.subr.bf16.mxu0 0
      %3629 = vmatpush1.bf16.msra.mxu0 0
      %3630 = vmatprep.subr.bf16.mxu0 0
      %3631 = vmatpush1.bf16.msra.mxu0 0
      %3632 = vmatprep.subr.bf16.mxu0 0
      %3633 = vmatpush1.bf16.msra.mxu0 0
      %3634 = vmatprep.subr.bf16.mxu0 0
      %3635 = vmatpush1.bf16.msra.mxu0 0
      %3636 = vmatprep.mubr.bf16.mxu0 0
      %3637 = vmatmul.mubr.bf16.gmra.mrb[0].mxu0 %v3549
      %v3638 = vpop.f32.mrb[0].mxu0
      %v3639 = vadd.f32 0.0, %v3638
      %v3640 = vpop.f32.mrb[0].mxu0
      %v3641 = vadd.f32 0.0, %v3640
      %v3642 = vpop.f32.mrb[0].mxu0
      %v3643 = vpop.f32.mrb[0].mxu0
      %3644 = vdwg.mxu0
      %v3645 = vadd.f32 %v3528, %v3598
      %v3646 = vadd.f32 %v3529, %v3600
      %v3647 = vadd.f32 %v3530, %v3639
      %v3648 = vadd.f32 %v3531, %v3641
      %s3649 = scalar_lea.vmem %s7, 68
      %v3650 = vld [vmem:[%s3649] sm:$0xf]
      %3651 = vrot.lane.b32.xlu0 %v635, 32
      %v3652 = vpop.permute.xlu0 %3651
      %3653 = vrot.lane.b32.xlu0 %v636, 32
      %v3654 = vpop.permute.xlu0 %3653
      %3655 = vrot.lane.b32.xlu0 %v637, 32
      %v3656 = vpop.permute.xlu0 %3655
      %3657 = vrot.lane.b32.xlu0 %v638, 32
      %v3658 = vpop.permute.xlu0 %3657
      %3659 = vrot.lane.b32.xlu0 %v639, 32
      %v3660 = vpop.permute.xlu0 %3659
      %v3661 = vsel %vm1461, %v3652, %v3654
      %v3662 = vsel %vm1461, %v3654, %v3656
      %v3663 = vsel %vm1461, %v3656, %v3658
      %v3664 = vsel %vm1461, %v3658, %v3660
      %v3666 = vsel %vm437, %v3650, 0
      %v3669 = vsel %vm441, %v3661, 0
      %v3672 = vsel %vm441, %v3662, 0
      %v3675 = vsel %vm441, %v3663, 0
      %v3678 = vsel %vm441, %v3664, 0
      %3680 = vmatprep.subr.bf16.mxu0 %v3672
      %3681 = vmatpush1.bf16.msra.mxu0 %v3669
      %3682 = vmatprep.subr.bf16.mxu0 0
      %3683 = vmatpush1.bf16.msra.mxu0 0
      %3684 = vmatprep.subr.bf16.mxu0 0
      %3685 = vmatpush1.bf16.msra.mxu0 0
      %3686 = vmatprep.subr.bf16.mxu0 0
      %3687 = vmatpush1.bf16.msra.mxu0 0
      %3688 = vmatprep.subr.bf16.mxu0 0
      %3689 = vmatpush1.bf16.msra.mxu0 0
      %3690 = vmatprep.subr.bf16.mxu0 0
      %3691 = vmatpush1.bf16.msra.mxu0 0
      %3692 = vmatprep.subr.bf16.mxu0 0
      %3693 = vmatpush1.bf16.msra.mxu0 0
      %3694 = vmatprep.subr.bf16.mxu0 0
      %3695 = vmatpush1.bf16.msra.mxu0 0
      %3696 = vmatprep.subr.bf16.mxu0 0
      %3697 = vmatpush1.bf16.msra.mxu0 0
      %3698 = vmatprep.subr.bf16.mxu0 0
      %3699 = vmatpush1.bf16.msra.mxu0 0
      %3700 = vmatprep.subr.bf16.mxu0 0
      %3701 = vmatpush1.bf16.msra.mxu0 0
      %3702 = vmatprep.subr.bf16.mxu0 0
      %3703 = vmatpush1.bf16.msra.mxu0 0
      %3704 = vmatprep.subr.bf16.mxu0 0
      %3705 = vmatpush1.bf16.msra.mxu0 0
      %3706 = vmatprep.subr.bf16.mxu0 0
      %3707 = vmatpush1.bf16.msra.mxu0 0
      %3708 = vmatprep.subr.bf16.mxu0 0
      %3709 = vmatpush1.bf16.msra.mxu0 0
      %3710 = vmatprep.subr.bf16.mxu0 0
      %3711 = vmatpush1.bf16.msra.mxu0 0
      %3712 = vmatprep.mubr.bf16.mxu0 0
      %3713 = vmatmul.mubr.bf16.gmra.mrb[0].mxu0 %v3666
      %v3714 = vpop.f32.mrb[0].mxu0
      %v3715 = vadd.f32 0.0, %v3714
      %v3716 = vpop.f32.mrb[0].mxu0
      %v3717 = vadd.f32 0.0, %v3716
      %v3718 = vpop.f32.mrb[0].mxu0
      %v3719 = vpop.f32.mrb[0].mxu0
      %3720 = vdwg.mxu0
      %3721 = vmatprep.subr.bf16.mxu0 %v3678
      %3722 = vmatpush1.bf16.msra.mxu0 %v3675
      %3723 = vmatprep.subr.bf16.mxu0 0
      %3724 = vmatpush1.bf16.msra.mxu0 0
      %3725 = vmatprep.subr.bf16.mxu0 0
      %3726 = vmatpush1.bf16.msra.mxu0 0
      %3727 = vmatprep.subr.bf16.mxu0 0
      %3728 = vmatpush1.bf16.msra.mxu0 0
      %3729 = vmatprep.subr.bf16.mxu0 0
      %3730 = vmatpush1.bf16.msra.mxu0 0
      %3731 = vmatprep.subr.bf16.mxu0 0
      %3732 = vmatpush1.bf16.msra.mxu0 0
      %3733 = vmatprep.subr.bf16.mxu0 0
      %3734 = vmatpush1.bf16.msra.mxu0 0
      %3735 = vmatprep.subr.bf16.mxu0 0
      %3736 = vmatpush1.bf16.msra.mxu0 0
      %3737 = vmatprep.subr.bf16.mxu0 0
      %3738 = vmatpush1.bf16.msra.mxu0 0
      %3739 = vmatprep.subr.bf16.mxu0 0
      %3740 = vmatpush1.bf16.msra.mxu0 0
      %3741 = vmatprep.subr.bf16.mxu0 0
      %3742 = vmatpush1.bf16.msra.mxu0 0
      %3743 = vmatprep.subr.bf16.mxu0 0
      %3744 = vmatpush1.bf16.msra.mxu0 0
      %3745 = vmatprep.subr.bf16.mxu0 0
      %3746 = vmatpush1.bf16.msra.mxu0 0
      %3747 = vmatprep.subr.bf16.mxu0 0
      %3748 = vmatpush1.bf16.msra.mxu0 0
      %3749 = vmatprep.subr.bf16.mxu0 0
      %3750 = vmatpush1.bf16.msra.mxu0 0
      %3751 = vmatprep.subr.bf16.mxu0 0
      %3752 = vmatpush1.bf16.msra.mxu0 0
      %3753 = vmatprep.mubr.bf16.mxu0 0
      %3754 = vmatmul.mubr.bf16.gmra.mrb[0].mxu0 %v3666
      %v3755 = vpop.f32.mrb[0].mxu0
      %v3756 = vadd.f32 0.0, %v3755
      %v3757 = vpop.f32.mrb[0].mxu0
      %v3758 = vadd.f32 0.0, %v3757
      %v3759 = vpop.f32.mrb[0].mxu0
      %v3760 = vpop.f32.mrb[0].mxu0
      %3761 = vdwg.mxu0
      %v3762 = vadd.f32 %v3645, %v3715
      %v3763 = vadd.f32 %v3646, %v3717
      %v3764 = vadd.f32 %v3647, %v3756
      %v3765 = vadd.f32 %v3648, %v3758
      %s3766 = scalar_lea.vmem %s7, 72
      %v3767 = vld [vmem:[%s3766] sm:$0xf]
      %3768 = vrot.lane.b32.xlu0 %v635, 31
      %v3769 = vpop.permute.xlu0 %3768
      %3770 = vrot.lane.b32.xlu0 %v636, 31
      %v3771 = vpop.permute.xlu0 %3770
      %3772 = vrot.lane.b32.xlu0 %v637, 31
      %v3773 = vpop.permute.xlu0 %3772
      %3774 = vrot.lane.b32.xlu0 %v638, 31
      %v3775 = vpop.permute.xlu0 %3774
      %3776 = vrot.lane.b32.xlu0 %v639, 31
      %v3777 = vpop.permute.xlu0 %3776
      %v3778 = vsel %vm1579, %v3769, %v3771
      %v3779 = vsel %vm1579, %v3771, %v3773
      %v3780 = vsel %vm1579, %v3773, %v3775
      %v3781 = vsel %vm1579, %v3775, %v3777
      %v3783 = vsel %vm437, %v3767, 0
      %v3786 = vsel %vm441, %v3778, 0
      %v3789 = vsel %vm441, %v3779, 0
      %v3792 = vsel %vm441, %v3780, 0
      %v3795 = vsel %vm441, %v3781, 0
      %3797 = vmatprep.subr.bf16.mxu0 %v3789
      %3798 = vmatpush1.bf16.msra.mxu0 %v3786
      %3799 = vmatprep.subr.bf16.mxu0 0
      %3800 = vmatpush1.bf16.msra.mxu0 0
      %3801 = vmatprep.subr.bf16.mxu0 0
      %3802 = vmatpush1.bf16.msra.mxu0 0
      %3803 = vmatprep.subr.bf16.mxu0 0
      %3804 = vmatpush1.bf16.msra.mxu0 0
      %3805 = vmatprep.subr.bf16.mxu0 0
      %3806 = vmatpush1.bf16.msra.mxu0 0
      %3807 = vmatprep.subr.bf16.mxu0 0
      %3808 = vmatpush1.bf16.msra.mxu0 0
      %3809 = vmatprep.subr.bf16.mxu0 0
      %3810 = vmatpush1.bf16.msra.mxu0 0
      %3811 = vmatprep.subr.bf16.mxu0 0
      %3812 = vmatpush1.bf16.msra.mxu0 0
      %3813 = vmatprep.subr.bf16.mxu0 0
      %3814 = vmatpush1.bf16.msra.mxu0 0
      %3815 = vmatprep.subr.bf16.mxu0 0
      %3816 = vmatpush1.bf16.msra.mxu0 0
      %3817 = vmatprep.subr.bf16.mxu0 0
      %3818 = vmatpush1.bf16.msra.mxu0 0
      %3819 = vmatprep.subr.bf16.mxu0 0
      %3820 = vmatpush1.bf16.msra.mxu0 0
      %3821 = vmatprep.subr.bf16.mxu0 0
      %3822 = vmatpush1.bf16.msra.mxu0 0
      %3823 = vmatprep.subr.bf16.mxu0 0
      %3824 = vmatpush1.bf16.msra.mxu0 0
      %3825 = vmatprep.subr.bf16.mxu0 0
      %3826 = vmatpush1.bf16.msra.mxu0 0
      %3827 = vmatprep.subr.bf16.mxu0 0
      %3828 = vmatpush1.bf16.msra.mxu0 0
      %3829 = vmatprep.mubr.bf16.mxu0 0
      %3830 = vmatmul.mubr.bf16.gmra.mrb[0].mxu0 %v3783
      %v3831 = vpop.f32.mrb[0].mxu0
      %v3832 = vadd.f32 0.0, %v3831
      %v3833 = vpop.f32.mrb[0].mxu0
      %v3834 = vadd.f32 0.0, %v3833
      %v3835 = vpop.f32.mrb[0].mxu0
      %v3836 = vpop.f32.mrb[0].mxu0
      %3837 = vdwg.mxu0
      %3838 = vmatprep.subr.bf16.mxu0 %v3795
      %3839 = vmatpush1.bf16.msra.mxu0 %v3792
      %3840 = vmatprep.subr.bf16.mxu0 0
      %3841 = vmatpush1.bf16.msra.mxu0 0
      %3842 = vmatprep.subr.bf16.mxu0 0
      %3843 = vmatpush1.bf16.msra.mxu0 0
      %3844 = vmatprep.subr.bf16.mxu0 0
      %3845 = vmatpush1.bf16.msra.mxu0 0
      %3846 = vmatprep.subr.bf16.mxu0 0
      %3847 = vmatpush1.bf16.msra.mxu0 0
      %3848 = vmatprep.subr.bf16.mxu0 0
      %3849 = vmatpush1.bf16.msra.mxu0 0
      %3850 = vmatprep.subr.bf16.mxu0 0
      %3851 = vmatpush1.bf16.msra.mxu0 0
      %3852 = vmatprep.subr.bf16.mxu0 0
      %3853 = vmatpush1.bf16.msra.mxu0 0
      %3854 = vmatprep.subr.bf16.mxu0 0
      %3855 = vmatpush1.bf16.msra.mxu0 0
      %3856 = vmatprep.subr.bf16.mxu0 0
      %3857 = vmatpush1.bf16.msra.mxu0 0
      %3858 = vmatprep.subr.bf16.mxu0 0
      %3859 = vmatpush1.bf16.msra.mxu0 0
      %3860 = vmatprep.subr.bf16.mxu0 0
      %3861 = vmatpush1.bf16.msra.mxu0 0
      %3862 = vmatprep.subr.bf16.mxu0 0
      %3863 = vmatpush1.bf16.msra.mxu0 0
      %3864 = vmatprep.subr.bf16.mxu0 0
      %3865 = vmatpush1.bf16.msra.mxu0 0
      %3866 = vmatprep.subr.bf16.mxu0 0
      %3867 = vmatpush1.bf16.msra.mxu0 0
      %3868 = vmatprep.subr.bf16.mxu0 0
      %3869 = vmatpush1.bf16.msra.mxu0 0
      %3870 = vmatprep.mubr.bf16.mxu0 0
      %3871 = vmatmul.mubr.bf16.gmra.mrb[0].mxu0 %v3783
      %v3872 = vpop.f32.mrb[0].mxu0
      %v3873 = vadd.f32 0.0, %v3872
      %v3874 = vpop.f32.mrb[0].mxu0
      %v3875 = vadd.f32 0.0, %v3874
      %v3876 = vpop.f32.mrb[0].mxu0
      %v3877 = vpop.f32.mrb[0].mxu0
      %3878 = vdwg.mxu0
      %v3879 = vadd.f32 %v3762, %v3832
      %v3880 = vadd.f32 %v3763, %v3834
      %v3881 = vadd.f32 %v3764, %v3873
      %v3882 = vadd.f32 %v3765, %v3875
      %s3883 = scalar_lea.vmem %s7, 76
      %v3884 = vld [vmem:[%s3883] sm:$0xf]
      %3885 = vrot.lane.b32.xlu0 %v635, 30
      %v3886 = vpop.permute.xlu0 %3885
      %3887 = vrot.lane.b32.xlu0 %v636, 30
      %v3888 = vpop.permute.xlu0 %3887
      %3889 = vrot.lane.b32.xlu0 %v637, 30
      %v3890 = vpop.permute.xlu0 %3889
      %3891 = vrot.lane.b32.xlu0 %v638, 30
      %v3892 = vpop.permute.xlu0 %3891
      %3893 = vrot.lane.b32.xlu0 %v639, 30
      %v3894 = vpop.permute.xlu0 %3893
      %vm3895 = vcmask 244736
      %v3896 = vsel %vm3895, %v3886, %v3888
      %v3897 = vsel %vm3895, %v3888, %v3890
      %v3898 = vsel %vm3895, %v3890, %v3892
      %v3899 = vsel %vm3895, %v3892, %v3894
      %v3901 = vsel %vm437, %v3884, 0
      %v3904 = vsel %vm441, %v3896, 0
      %v3907 = vsel %vm441, %v3897, 0
      %v3910 = vsel %vm441, %v3898, 0
      %v3913 = vsel %vm441, %v3899, 0
      %3915 = vmatprep.subr.bf16.mxu0 %v3907
      %3916 = vmatpush1.bf16.msra.mxu0 %v3904
      %3917 = vmatprep.subr.bf16.mxu0 0
      %3918 = vmatpush1.bf16.msra.mxu0 0
      %3919 = vmatprep.subr.bf16.mxu0 0
      %3920 = vmatpush1.bf16.msra.mxu0 0
      %3921 = vmatprep.subr.bf16.mxu0 0
      %3922 = vmatpush1.bf16.msra.mxu0 0
      %3923 = vmatprep.subr.bf16.mxu0 0
      %3924 = vmatpush1.bf16.msra.mxu0 0
      %3925 = vmatprep.subr.bf16.mxu0 0
      %3926 = vmatpush1.bf16.msra.mxu0 0
      %3927 = vmatprep.subr.bf16.mxu0 0
      %3928 = vmatpush1.bf16.msra.mxu0 0
      %3929 = vmatprep.subr.bf16.mxu0 0
      %3930 = vmatpush1.bf16.msra.mxu0 0
      %3931 = vmatprep.subr.bf16.mxu0 0
      %3932 = vmatpush1.bf16.msra.mxu0 0
      %3933 = vmatprep.subr.bf16.mxu0 0
      %3934 = vmatpush1.bf16.msra.mxu0 0
      %3935 = vmatprep.subr.bf16.mxu0 0
      %3936 = vmatpush1.bf16.msra.mxu0 0
      %3937 = vmatprep.subr.bf16.mxu0 0
      %3938 = vmatpush1.bf16.msra.mxu0 0
      %3939 = vmatprep.subr.bf16.mxu0 0
      %3940 = vmatpush1.bf16.msra.mxu0 0
      %3941 = vmatprep.subr.bf16.mxu0 0
      %3942 = vmatpush1.bf16.msra.mxu0 0
      %3943 = vmatprep.subr.bf16.mxu0 0
      %3944 = vmatpush1.bf16.msra.mxu0 0
      %3945 = vmatprep.subr.bf16.mxu0 0
      %3946 = vmatpush1.bf16.msra.mxu0 0
      %3947 = vmatprep.mubr.bf16.mxu0 0
      %3948 = vmatmul.mubr.bf16.gmra.mrb[0].mxu0 %v3901
      %v3949 = vpop.f32.mrb[0].mxu0
      %v3950 = vadd.f32 0.0, %v3949
      %v3951 = vpop.f32.mrb[0].mxu0
      %v3952 = vadd.f32 0.0, %v3951
      %v3953 = vpop.f32.mrb[0].mxu0
      %v3954 = vpop.f32.mrb[0].mxu0
      %3955 = vdwg.mxu0
      %3956 = vmatprep.subr.bf16.mxu0 %v3913
      %3957 = vmatpush1.bf16.msra.mxu0 %v3910
      %3958 = vmatprep.subr.bf16.mxu0 0
      %3959 = vmatpush1.bf16.msra.mxu0 0
      %3960 = vmatprep.subr.bf16.mxu0 0
      %3961 = vmatpush1.bf16.msra.mxu0 0
      %3962 = vmatprep.subr.bf16.mxu0 0
      %3963 = vmatpush1.bf16.msra.mxu0 0
      %3964 = vmatprep.subr.bf16.mxu0 0
      %3965 = vmatpush1.bf16.msra.mxu0 0
      %3966 = vmatprep.subr.bf16.mxu0 0
      %3967 = vmatpush1.bf16.msra.mxu0 0
      %3968 = vmatprep.subr.bf16.mxu0 0
      %3969 = vmatpush1.bf16.msra.mxu0 0
      %3970 = vmatprep.subr.bf16.mxu0 0
      %3971 = vmatpush1.bf16.msra.mxu0 0
      %3972 = vmatprep.subr.bf16.mxu0 0
      %3973 = vmatpush1.bf16.msra.mxu0 0
      %3974 = vmatprep.subr.bf16.mxu0 0
      %3975 = vmatpush1.bf16.msra.mxu0 0
      %3976 = vmatprep.subr.bf16.mxu0 0
      %3977 = vmatpush1.bf16.msra.mxu0 0
      %3978 = vmatprep.subr.bf16.mxu0 0
      %3979 = vmatpush1.bf16.msra.mxu0 0
      %3980 = vmatprep.subr.bf16.mxu0 0
      %3981 = vmatpush1.bf16.msra.mxu0 0
      %3982 = vmatprep.subr.bf16.mxu0 0
      %3983 = vmatpush1.bf16.msra.mxu0 0
      %3984 = vmatprep.subr.bf16.mxu0 0
      %3985 = vmatpush1.bf16.msra.mxu0 0
      %3986 = vmatprep.subr.bf16.mxu0 0
      %3987 = vmatpush1.bf16.msra.mxu0 0
      %3988 = vmatprep.mubr.bf16.mxu0 0
      %3989 = vmatmul.mubr.bf16.gmra.mrb[0].mxu0 %v3901
      %v3990 = vpop.f32.mrb[0].mxu0
      %v3991 = vadd.f32 0.0, %v3990
      %v3992 = vpop.f32.mrb[0].mxu0
      %v3993 = vadd.f32 0.0, %v3992
      %v3994 = vpop.f32.mrb[0].mxu0
      %v3995 = vpop.f32.mrb[0].mxu0
      %3996 = vdwg.mxu0
      %v3997 = vadd.f32 %v3879, %v3950
      %v3998 = vadd.f32 %v3880, %v3952
      %v3999 = vadd.f32 %v3881, %v3991
      %v4000 = vadd.f32 %v3882, %v3993
      %s4001 = scalar_lea.vmem %s7, 80
      %v4002 = vld [vmem:[%s4001] sm:$0xf]
      %4003 = vrot.lane.b32.xlu0 %v635, 10
      %v4004 = vpop.permute.xlu0 %4003
      %4005 = vrot.lane.b32.xlu0 %v636, 10
      %v4006 = vpop.permute.xlu0 %4005
      %4007 = vrot.lane.b32.xlu0 %v637, 10
      %v4008 = vpop.permute.xlu0 %4007
      %4009 = vrot.lane.b32.xlu0 %v638, 10
      %v4010 = vpop.permute.xlu0 %4009
      %4011 = vrot.lane.b32.xlu0 %v639, 10
      %v4012 = vpop.permute.xlu0 %4011
      %vm4013 = vcmask 80896
      %v4014 = vsel %vm4013, %v4004, %v4006
      %v4015 = vsel %vm4013, %v4006, %v4008
      %v4016 = vsel %vm4013, %v4008, %v4010
      %v4017 = vsel %vm4013, %v4010, %v4012
      %v4019 = vsel %vm437, %v4002, 0
      %v4022 = vsel %vm441, %v4014, 0
      %v4025 = vsel %vm441, %v4015, 0
      %v4028 = vsel %vm441, %v4016, 0
      %v4031 = vsel %vm441, %v4017, 0
      %4033 = vmatprep.subr.bf16.mxu0 %v4025
      %4034 = vmatpush1.bf16.msra.mxu0 %v4022
      %4035 = vmatprep.subr.bf16.mxu0 0
      %4036 = vmatpush1.bf16.msra.mxu0 0
      %4037 = vmatprep.subr.bf16.mxu0 0
      %4038 = vmatpush1.bf16.msra.mxu0 0
      %4039 = vmatprep.subr.bf16.mxu0 0
      %4040 = vmatpush1.bf16.msra.mxu0 0
      %4041 = vmatprep.subr.bf16.mxu0 0
      %4042 = vmatpush1.bf16.msra.mxu0 0
      %4043 = vmatprep.subr.bf16.mxu0 0
      %4044 = vmatpush1.bf16.msra.mxu0 0
      %4045 = vmatprep.subr.bf16.mxu0 0
      %4046 = vmatpush1.bf16.msra.mxu0 0
      %4047 = vmatprep.subr.bf16.mxu0 0
      %4048 = vmatpush1.bf16.msra.mxu0 0
      %4049 = vmatprep.subr.bf16.mxu0 0
      %4050 = vmatpush1.bf16.msra.mxu0 0
      %4051 = vmatprep.subr.bf16.mxu0 0
      %4052 = vmatpush1.bf16.msra.mxu0 0
      %4053 = vmatprep.subr.bf16.mxu0 0
      %4054 = vmatpush1.bf16.msra.mxu0 0
      %4055 = vmatprep.subr.bf16.mxu0 0
      %4056 = vmatpush1.bf16.msra.mxu0 0
      %4057 = vmatprep.subr.bf16.mxu0 0
      %4058 = vmatpush1.bf16.msra.mxu0 0
      %4059 = vmatprep.subr.bf16.mxu0 0
      %4060 = vmatpush1.bf16.msra.mxu0 0
      %4061 = vmatprep.subr.bf16.mxu0 0
      %4062 = vmatpush1.bf16.msra.mxu0 0
      %4063 = vmatprep.subr.bf16.mxu0 0
      %4064 = vmatpush1.bf16.msra.mxu0 0
      %4065 = vmatprep.mubr.bf16.mxu0 0
      %4066 = vmatmul.mubr.bf16.gmra.mrb[0].mxu0 %v4019
      %v4067 = vpop.f32.mrb[0].mxu0
      %v4068 = vadd.f32 0.0, %v4067
      %v4069 = vpop.f32.mrb[0].mxu0
      %v4070 = vadd.f32 0.0, %v4069
      %v4071 = vpop.f32.mrb[0].mxu0
      %v4072 = vpop.f32.mrb[0].mxu0
      %4073 = vdwg.mxu0
      %4074 = vmatprep.subr.bf16.mxu0 %v4031
      %4075 = vmatpush1.bf16.msra.mxu0 %v4028
      %4076 = vmatprep.subr.bf16.mxu0 0
      %4077 = vmatpush1.bf16.msra.mxu0 0
      %4078 = vmatprep.subr.bf16.mxu0 0
      %4079 = vmatpush1.bf16.msra.mxu0 0
      %4080 = vmatprep.subr.bf16.mxu0 0
      %4081 = vmatpush1.bf16.msra.mxu0 0
      %4082 = vmatprep.subr.bf16.mxu0 0
      %4083 = vmatpush1.bf16.msra.mxu0 0
      %4084 = vmatprep.subr.bf16.mxu0 0
      %4085 = vmatpush1.bf16.msra.mxu0 0
      %4086 = vmatprep.subr.bf16.mxu0 0
      %4087 = vmatpush1.bf16.msra.mxu0 0
      %4088 = vmatprep.subr.bf16.mxu0 0
      %4089 = vmatpush1.bf16.msra.mxu0 0
      %4090 = vmatprep.subr.bf16.mxu0 0
      %4091 = vmatpush1.bf16.msra.mxu0 0
      %4092 = vmatprep.subr.bf16.mxu0 0
      %4093 = vmatpush1.bf16.msra.mxu0 0
      %4094 = vmatprep.subr.bf16.mxu0 0
      %4095 = vmatpush1.bf16.msra.mxu0 0
      %4096 = vmatprep.subr.bf16.mxu0 0
      %4097 = vmatpush1.bf16.msra.mxu0 0
      %4098 = vmatprep.subr.bf16.mxu0 0
      %4099 = vmatpush1.bf16.msra.mxu0 0
      %4100 = vmatprep.subr.bf16.mxu0 0
      %4101 = vmatpush1.bf16.msra.mxu0 0
      %4102 = vmatprep.subr.bf16.mxu0 0
      %4103 = vmatpush1.bf16.msra.mxu0 0
      %4104 = vmatprep.subr.bf16.mxu0 0
      %4105 = vmatpush1.bf16.msra.mxu0 0
      %4106 = vmatprep.mubr.bf16.mxu0 0
      %4107 = vmatmul.mubr.bf16.gmra.mrb[0].mxu0 %v4019
      %v4108 = vpop.f32.mrb[0].mxu0
      %v4109 = vadd.f32 0.0, %v4108
      %v4110 = vpop.f32.mrb[0].mxu0
      %v4111 = vadd.f32 0.0, %v4110
      %v4112 = vpop.f32.mrb[0].mxu0
      %v4113 = vpop.f32.mrb[0].mxu0
      %4114 = vdwg.mxu0
      %v4115 = vadd.f32 %v3997, %v4068
      %v4116 = vadd.f32 %v3998, %v4070
      %v4117 = vadd.f32 %v3999, %v4109
      %v4118 = vadd.f32 %v4000, %v4111
      %s4119 = scalar_lea.vmem %s7, 84
      %v4120 = vld [vmem:[%s4119] sm:$0xf]
      %4121 = vrot.lane.b32.xlu0 %v635, 9
      %v4122 = vpop.permute.xlu0 %4121
      %4123 = vrot.lane.b32.xlu0 %v636, 9
      %v4124 = vpop.permute.xlu0 %4123
      %4125 = vrot.lane.b32.xlu0 %v637, 9
      %v4126 = vpop.permute.xlu0 %4125
      %4127 = vrot.lane.b32.xlu0 %v638, 9
      %v4128 = vpop.permute.xlu0 %4127
      %4129 = vrot.lane.b32.xlu0 %v639, 9
      %v4130 = vpop.permute.xlu0 %4129
      %vm4131 = vcmask 72704
      %v4132 = vsel %vm4131, %v4122, %v4124
      %v4133 = vsel %vm4131, %v4124, %v4126
      %v4134 = vsel %vm4131, %v4126, %v4128
      %v4135 = vsel %vm4131, %v4128, %v4130
      %v4137 = vsel %vm437, %v4120, 0
      %v4140 = vsel %vm441, %v4132, 0
      %v4143 = vsel %vm441, %v4133, 0
      %v4146 = vsel %vm441, %v4134, 0
      %v4149 = vsel %vm441, %v4135, 0
      %4151 = vmatprep.subr.bf16.mxu0 %v4143
      %4152 = vmatpush1.bf16.msra.mxu0 %v4140
      %4153 = vmatprep.subr.bf16.mxu0 0
      %4154 = vmatpush1.bf16.msra.mxu0 0
      %4155 = vmatprep.subr.bf16.mxu0 0
      %4156 = vmatpush1.bf16.msra.mxu0 0
      %4157 = vmatprep.subr.bf16.mxu0 0
      %4158 = vmatpush1.bf16.msra.mxu0 0
      %4159 = vmatprep.subr.bf16.mxu0 0
      %4160 = vmatpush1.bf16.msra.mxu0 0
      %4161 = vmatprep.subr.bf16.mxu0 0
      %4162 = vmatpush1.bf16.msra.mxu0 0
      %4163 = vmatprep.subr.bf16.mxu0 0
      %4164 = vmatpush1.bf16.msra.mxu0 0
      %4165 = vmatprep.subr.bf16.mxu0 0
      %4166 = vmatpush1.bf16.msra.mxu0 0
      %4167 = vmatprep.subr.bf16.mxu0 0
      %4168 = vmatpush1.bf16.msra.mxu0 0
      %4169 = vmatprep.subr.bf16.mxu0 0
      %4170 = vmatpush1.bf16.msra.mxu0 0
      %4171 = vmatprep.subr.bf16.mxu0 0
      %4172 = vmatpush1.bf16.msra.mxu0 0
      %4173 = vmatprep.subr.bf16.mxu0 0
      %4174 = vmatpush1.bf16.msra.mxu0 0
      %4175 = vmatprep.subr.bf16.mxu0 0
      %4176 = vmatpush1.bf16.msra.mxu0 0
      %4177 = vmatprep.subr.bf16.mxu0 0
      %4178 = vmatpush1.bf16.msra.mxu0 0
      %4179 = vmatprep.subr.bf16.mxu0 0
      %4180 = vmatpush1.bf16.msra.mxu0 0
      %4181 = vmatprep.subr.bf16.mxu0 0
      %4182 = vmatpush1.bf16.msra.mxu0 0
      %4183 = vmatprep.mubr.bf16.mxu0 0
      %4184 = vmatmul.mubr.bf16.gmra.mrb[0].mxu0 %v4137
      %v4185 = vpop.f32.mrb[0].mxu0
      %v4186 = vadd.f32 0.0, %v4185
      %v4187 = vpop.f32.mrb[0].mxu0
      %v4188 = vadd.f32 0.0, %v4187
      %v4189 = vpop.f32.mrb[0].mxu0
      %v4190 = vpop.f32.mrb[0].mxu0
      %4191 = vdwg.mxu0
      %4192 = vmatprep.subr.bf16.mxu0 %v4149
      %4193 = vmatpush1.bf16.msra.mxu0 %v4146
      %4194 = vmatprep.subr.bf16.mxu0 0
      %4195 = vmatpush1.bf16.msra.mxu0 0
      %4196 = vmatprep.subr.bf16.mxu0 0
      %4197 = vmatpush1.bf16.msra.mxu0 0
      %4198 = vmatprep.subr.bf16.mxu0 0
      %4199 = vmatpush1.bf16.msra.mxu0 0
      %4200 = vmatprep.subr.bf16.mxu0 0
      %4201 = vmatpush1.bf16.msra.mxu0 0
      %4202 = vmatprep.subr.bf16.mxu0 0
      %4203 = vmatpush1.bf16.msra.mxu0 0
      %4204 = vmatprep.subr.bf16.mxu0 0
      %4205 = vmatpush1.bf16.msra.mxu0 0
      %4206 = vmatprep.subr.bf16.mxu0 0
      %4207 = vmatpush1.bf16.msra.mxu0 0
      %4208 = vmatprep.subr.bf16.mxu0 0
      %4209 = vmatpush1.bf16.msra.mxu0 0
      %4210 = vmatprep.subr.bf16.mxu0 0
      %4211 = vmatpush1.bf16.msra.mxu0 0
      %4212 = vmatprep.subr.bf16.mxu0 0
      %4213 = vmatpush1.bf16.msra.mxu0 0
      %4214 = vmatprep.subr.bf16.mxu0 0
      %4215 = vmatpush1.bf16.msra.mxu0 0
      %4216 = vmatprep.subr.bf16.mxu0 0
      %4217 = vmatpush1.bf16.msra.mxu0 0
      %4218 = vmatprep.subr.bf16.mxu0 0
      %4219 = vmatpush1.bf16.msra.mxu0 0
      %4220 = vmatprep.subr.bf16.mxu0 0
      %4221 = vmatpush1.bf16.msra.mxu0 0
      %4222 = vmatprep.subr.bf16.mxu0 0
      %4223 = vmatpush1.bf16.msra.mxu0 0
      %4224 = vmatprep.mubr.bf16.mxu0 0
      %4225 = vmatmul.mubr.bf16.gmra.mrb[0].mxu0 %v4137
      %v4226 = vpop.f32.mrb[0].mxu0
      %v4227 = vadd.f32 0.0, %v4226
      %v4228 = vpop.f32.mrb[0].mxu0
      %v4229 = vadd.f32 0.0, %v4228
      %v4230 = vpop.f32.mrb[0].mxu0
      %v4231 = vpop.f32.mrb[0].mxu0
      %4232 = vdwg.mxu0
      %v4233 = vadd.f32 %v4115, %v4186
      %v4234 = vadd.f32 %v4116, %v4188
      %v4235 = vadd.f32 %v4117, %v4227
      %v4236 = vadd.f32 %v4118, %v4229
      %s4237 = scalar_lea.vmem %s7, 88
      %v4238 = vld [vmem:[%s4237] sm:$0xf]
      %4239 = vrot.lane.b32.xlu0 %v635, 8
      %v4240 = vpop.permute.xlu0 %4239
      %4241 = vrot.lane.b32.xlu0 %v636, 8
      %v4242 = vpop.permute.xlu0 %4241
      %4243 = vrot.lane.b32.xlu0 %v637, 8
      %v4244 = vpop.permute.xlu0 %4243
      %4245 = vrot.lane.b32.xlu0 %v638, 8
      %v4246 = vpop.permute.xlu0 %4245
      %4247 = vrot.lane.b32.xlu0 %v639, 8
      %v4248 = vpop.permute.xlu0 %4247
      %vm4249 = vcmask 64512
      %v4250 = vsel %vm4249, %v4240, %v4242
      %v4251 = vsel %vm4249, %v4242, %v4244
      %v4252 = vsel %vm4249, %v4244, %v4246
      %v4253 = vsel %vm4249, %v4246, %v4248
      %v4255 = vsel %vm437, %v4238, 0
      %v4258 = vsel %vm441, %v4250, 0
      %v4261 = vsel %vm441, %v4251, 0
      %v4264 = vsel %vm441, %v4252, 0
      %v4267 = vsel %vm441, %v4253, 0
      %4269 = vmatprep.subr.bf16.mxu0 %v4261
      %4270 = vmatpush1.bf16.msra.mxu0 %v4258
      %4271 = vmatprep.subr.bf16.mxu0 0
      %4272 = vmatpush1.bf16.msra.mxu0 0
      %4273 = vmatprep.subr.bf16.mxu0 0
      %4274 = vmatpush1.bf16.msra.mxu0 0
      %4275 = vmatprep.subr.bf16.mxu0 0
      %4276 = vmatpush1.bf16.msra.mxu0 0
      %4277 = vmatprep.subr.bf16.mxu0 0
      %4278 = vmatpush1.bf16.msra.mxu0 0
      %4279 = vmatprep.subr.bf16.mxu0 0
      %4280 = vmatpush1.bf16.msra.mxu0 0
      %4281 = vmatprep.subr.bf16.mxu0 0
      %4282 = vmatpush1.bf16.msra.mxu0 0
      %4283 = vmatprep.subr.bf16.mxu0 0
      %4284 = vmatpush1.bf16.msra.mxu0 0
      %4285 = vmatprep.subr.bf16.mxu0 0
      %4286 = vmatpush1.bf16.msra.mxu0 0
      %4287 = vmatprep.subr.bf16.mxu0 0
      %4288 = vmatpush1.bf16.msra.mxu0 0
      %4289 = vmatprep.subr.bf16.mxu0 0
      %4290 = vmatpush1.bf16.msra.mxu0 0
      %4291 = vmatprep.subr.bf16.mxu0 0
      %4292 = vmatpush1.bf16.msra.mxu0 0
      %4293 = vmatprep.subr.bf16.mxu0 0
      %4294 = vmatpush1.bf16.msra.mxu0 0
      %4295 = vmatprep.subr.bf16.mxu0 0
      %4296 = vmatpush1.bf16.msra.mxu0 0
      %4297 = vmatprep.subr.bf16.mxu0 0
      %4298 = vmatpush1.bf16.msra.mxu0 0
      %4299 = vmatprep.subr.bf16.mxu0 0
      %4300 = vmatpush1.bf16.msra.mxu0 0
      %4301 = vmatprep.mubr.bf16.mxu0 0
      %4302 = vmatmul.mubr.bf16.gmra.mrb[0].mxu0 %v4255
      %v4303 = vpop.f32.mrb[0].mxu0
      %v4304 = vadd.f32 0.0, %v4303
      %v4305 = vpop.f32.mrb[0].mxu0
      %v4306 = vadd.f32 0.0, %v4305
      %v4307 = vpop.f32.mrb[0].mxu0
      %v4308 = vpop.f32.mrb[0].mxu0
      %4309 = vdwg.mxu0
      %4310 = vmatprep.subr.bf16.mxu0 %v4267
      %4311 = vmatpush1.bf16.msra.mxu0 %v4264
      %4312 = vmatprep.subr.bf16.mxu0 0
      %4313 = vmatpush1.bf16.msra.mxu0 0
      %4314 = vmatprep.subr.bf16.mxu0 0
      %4315 = vmatpush1.bf16.msra.mxu0 0
      %4316 = vmatprep.subr.bf16.mxu0 0
      %4317 = vmatpush1.bf16.msra.mxu0 0
      %4318 = vmatprep.subr.bf16.mxu0 0
      %4319 = vmatpush1.bf16.msra.mxu0 0
      %4320 = vmatprep.subr.bf16.mxu0 0
      %4321 = vmatpush1.bf16.msra.mxu0 0
      %4322 = vmatprep.subr.bf16.mxu0 0
      %4323 = vmatpush1.bf16.msra.mxu0 0
      %4324 = vmatprep.subr.bf16.mxu0 0
      %4325 = vmatpush1.bf16.msra.mxu0 0
      %4326 = vmatprep.subr.bf16.mxu0 0
      %4327 = vmatpush1.bf16.msra.mxu0 0
      %4328 = vmatprep.subr.bf16.mxu0 0
      %4329 = vmatpush1.bf16.msra.mxu0 0
      %4330 = vmatprep.subr.bf16.mxu0 0
      %4331 = vmatpush1.bf16.msra.mxu0 0
      %4332 = vmatprep.subr.bf16.mxu0 0
      %4333 = vmatpush1.bf16.msra.mxu0 0
      %4334 = vmatprep.subr.bf16.mxu0 0
      %4335 = vmatpush1.bf16.msra.mxu0 0
      %4336 = vmatprep.subr.bf16.mxu0 0
      %4337 = vmatpush1.bf16.msra.mxu0 0
      %4338 = vmatprep.subr.bf16.mxu0 0
      %4339 = vmatpush1.bf16.msra.mxu0 0
      %4340 = vmatprep.subr.bf16.mxu0 0
      %4341 = vmatpush1.bf16.msra.mxu0 0
      %4342 = vmatprep.mubr.bf16.mxu0 0
      %4343 = vmatmul.mubr.bf16.gmra.mrb[0].mxu0 %v4255
      %v4344 = vpop.f32.mrb[0].mxu0
      %v4345 = vadd.f32 0.0, %v4344
      %v4346 = vpop.f32.mrb[0].mxu0
      %v4347 = vadd.f32 0.0, %v4346
      %v4348 = vpop.f32.mrb[0].mxu0
      %v4349 = vpop.f32.mrb[0].mxu0
      %4350 = vdwg.mxu0
      %v4351 = vadd.f32 %v4233, %v4304
      %v4352 = vadd.f32 %v4234, %v4306
      %v4353 = vadd.f32 %v4235, %v4345
      %v4354 = vadd.f32 %v4236, %v4347
      %s4355 = scalar_lea.vmem %s7, 92
      %v4356 = vld [vmem:[%s4355] sm:$0xf]
      %4357 = vrot.lane.b32.xlu0 %v635, 7
      %v4358 = vpop.permute.xlu0 %4357
      %4359 = vrot.lane.b32.xlu0 %v636, 7
      %v4360 = vpop.permute.xlu0 %4359
      %4361 = vrot.lane.b32.xlu0 %v637, 7
      %v4362 = vpop.permute.xlu0 %4361
      %4363 = vrot.lane.b32.xlu0 %v638, 7
      %v4364 = vpop.permute.xlu0 %4363
      %4365 = vrot.lane.b32.xlu0 %v639, 7
      %v4366 = vpop.permute.xlu0 %4365
      %vm4367 = vcmask 56320
      %v4368 = vsel %vm4367, %v4358, %v4360
      %v4369 = vsel %vm4367, %v4360, %v4362
      %v4370 = vsel %vm4367, %v4362, %v4364
      %v4371 = vsel %vm4367, %v4364, %v4366
      %v4373 = vsel %vm437, %v4356, 0
      %v4376 = vsel %vm441, %v4368, 0
      %v4379 = vsel %vm441, %v4369, 0
      %v4382 = vsel %vm441, %v4370, 0
      %v4385 = vsel %vm441, %v4371, 0
      %4387 = vmatprep.subr.bf16.mxu0 %v4379
      %4388 = vmatpush1.bf16.msra.mxu0 %v4376
      %4389 = vmatprep.subr.bf16.mxu0 0
      %4390 = vmatpush1.bf16.msra.mxu0 0
      %4391 = vmatprep.subr.bf16.mxu0 0
      %4392 = vmatpush1.bf16.msra.mxu0 0
      %4393 = vmatprep.subr.bf16.mxu0 0
      %4394 = vmatpush1.bf16.msra.mxu0 0
      %4395 = vmatprep.subr.bf16.mxu0 0
      %4396 = vmatpush1.bf16.msra.mxu0 0
      %4397 = vmatprep.subr.bf16.mxu0 0
      %4398 = vmatpush1.bf16.msra.mxu0 0
      %4399 = vmatprep.subr.bf16.mxu0 0
      %4400 = vmatpush1.bf16.msra.mxu0 0
      %4401 = vmatprep.subr.bf16.mxu0 0
      %4402 = vmatpush1.bf16.msra.mxu0 0
      %4403 = vmatprep.subr.bf16.mxu0 0
      %4404 = vmatpush1.bf16.msra.mxu0 0
      %4405 = vmatprep.subr.bf16.mxu0 0
      %4406 = vmatpush1.bf16.msra.mxu0 0
      %4407 = vmatprep.subr.bf16.mxu0 0
      %4408 = vmatpush1.bf16.msra.mxu0 0
      %4409 = vmatprep.subr.bf16.mxu0 0
      %4410 = vmatpush1.bf16.msra.mxu0 0
      %4411 = vmatprep.subr.bf16.mxu0 0
      %4412 = vmatpush1.bf16.msra.mxu0 0
      %4413 = vmatprep.subr.bf16.mxu0 0
      %4414 = vmatpush1.bf16.msra.mxu0 0
      %4415 = vmatprep.subr.bf16.mxu0 0
      %4416 = vmatpush1.bf16.msra.mxu0 0
      %4417 = vmatprep.subr.bf16.mxu0 0
      %4418 = vmatpush1.bf16.msra.mxu0 0
      %4419 = vmatprep.mubr.bf16.mxu0 0
      %4420 = vmatmul.mubr.bf16.gmra.mrb[0].mxu0 %v4373
      %v4421 = vpop.f32.mrb[0].mxu0
      %v4422 = vadd.f32 0.0, %v4421
      %v4423 = vpop.f32.mrb[0].mxu0
      %v4424 = vadd.f32 0.0, %v4423
      %v4425 = vpop.f32.mrb[0].mxu0
      %v4426 = vpop.f32.mrb[0].mxu0
      %4427 = vdwg.mxu0
      %4428 = vmatprep.subr.bf16.mxu0 %v4385
      %4429 = vmatpush1.bf16.msra.mxu0 %v4382
      %4430 = vmatprep.subr.bf16.mxu0 0
      %4431 = vmatpush1.bf16.msra.mxu0 0
      %4432 = vmatprep.subr.bf16.mxu0 0
      %4433 = vmatpush1.bf16.msra.mxu0 0
      %4434 = vmatprep.subr.bf16.mxu0 0
      %4435 = vmatpush1.bf16.msra.mxu0 0
      %4436 = vmatprep.subr.bf16.mxu0 0
      %4437 = vmatpush1.bf16.msra.mxu0 0
      %4438 = vmatprep.subr.bf16.mxu0 0
      %4439 = vmatpush1.bf16.msra.mxu0 0
      %4440 = vmatprep.subr.bf16.mxu0 0
      %4441 = vmatpush1.bf16.msra.mxu0 0
      %4442 = vmatprep.subr.bf16.mxu0 0
      %4443 = vmatpush1.bf16.msra.mxu0 0
      %4444 = vmatprep.subr.bf16.mxu0 0
      %4445 = vmatpush1.bf16.msra.mxu0 0
      %4446 = vmatprep.subr.bf16.mxu0 0
      %4447 = vmatpush1.bf16.msra.mxu0 0
      %4448 = vmatprep.subr.bf16.mxu0 0
      %4449 = vmatpush1.bf16.msra.mxu0 0
      %4450 = vmatprep.subr.bf16.mxu0 0
      %4451 = vmatpush1.bf16.msra.mxu0 0
      %4452 = vmatprep.subr.bf16.mxu0 0
      %4453 = vmatpush1.bf16.msra.mxu0 0
      %4454 = vmatprep.subr.bf16.mxu0 0
      %4455 = vmatpush1.bf16.msra.mxu0 0
      %4456 = vmatprep.subr.bf16.mxu0 0
      %4457 = vmatpush1.bf16.msra.mxu0 0
      %4458 = vmatprep.subr.bf16.mxu0 0
      %4459 = vmatpush1.bf16.msra.mxu0 0
      %4460 = vmatprep.mubr.bf16.mxu0 0
      %4461 = vmatmul.mubr.bf16.gmra.mrb[0].mxu0 %v4373
      %v4462 = vpop.f32.mrb[0].mxu0
      %v4463 = vadd.f32 0.0, %v4462
      %v4464 = vpop.f32.mrb[0].mxu0
      %v4465 = vadd.f32 0.0, %v4464
      %v4466 = vpop.f32.mrb[0].mxu0
      %v4467 = vpop.f32.mrb[0].mxu0
      %4468 = vdwg.mxu0
      %v4469 = vadd.f32 %v4351, %v4422
      %v4470 = vadd.f32 %v4352, %v4424
      %v4471 = vadd.f32 %v4353, %v4463
      %v4472 = vadd.f32 %v4354, %v4465
      %s4473 = scalar_lea.vmem %s7, 96
      %v4474 = vld [vmem:[%s4473] sm:$0xf]
      %4475 = vrot.lane.b32.xlu0 %v635, 6
      %v4476 = vpop.permute.xlu0 %4475
      %4477 = vrot.lane.b32.xlu0 %v636, 6
      %v4478 = vpop.permute.xlu0 %4477
      %4479 = vrot.lane.b32.xlu0 %v637, 6
      %v4480 = vpop.permute.xlu0 %4479
      %4481 = vrot.lane.b32.xlu0 %v638, 6
      %v4482 = vpop.permute.xlu0 %4481
      %4483 = vrot.lane.b32.xlu0 %v639, 6
      %v4484 = vpop.permute.xlu0 %4483
      %vm4485 = vcmask 48128
      %v4486 = vsel %vm4485, %v4476, %v4478
      %v4487 = vsel %vm4485, %v4478, %v4480
      %v4488 = vsel %vm4485, %v4480, %v4482
      %v4489 = vsel %vm4485, %v4482, %v4484
      %v4491 = vsel %vm437, %v4474, 0
      %v4494 = vsel %vm441, %v4486, 0
      %v4497 = vsel %vm441, %v4487, 0
      %v4500 = vsel %vm441, %v4488, 0
      %v4503 = vsel %vm441, %v4489, 0
      %4505 = vmatprep.subr.bf16.mxu0 %v4497
      %4506 = vmatpush1.bf16.msra.mxu0 %v4494
      %4507 = vmatprep.subr.bf16.mxu0 0
      %4508 = vmatpush1.bf16.msra.mxu0 0
      %4509 = vmatprep.subr.bf16.mxu0 0
      %4510 = vmatpush1.bf16.msra.mxu0 0
      %4511 = vmatprep.subr.bf16.mxu0 0
      %4512 = vmatpush1.bf16.msra.mxu0 0
      %4513 = vmatprep.subr.bf16.mxu0 0
      %4514 = vmatpush1.bf16.msra.mxu0 0
      %4515 = vmatprep.subr.bf16.mxu0 0
      %4516 = vmatpush1.bf16.msra.mxu0 0
      %4517 = vmatprep.subr.bf16.mxu0 0
      %4518 = vmatpush1.bf16.msra.mxu0 0
      %4519 = vmatprep.subr.bf16.mxu0 0
      %4520 = vmatpush1.bf16.msra.mxu0 0
      %4521 = vmatprep.subr.bf16.mxu0 0
      %4522 = vmatpush1.bf16.msra.mxu0 0
      %4523 = vmatprep.subr.bf16.mxu0 0
      %4524 = vmatpush1.bf16.msra.mxu0 0
      %4525 = vmatprep.subr.bf16.mxu0 0
      %4526 = vmatpush1.bf16.msra.mxu0 0
      %4527 = vmatprep.subr.bf16.mxu0 0
      %4528 = vmatpush1.bf16.msra.mxu0 0
      %4529 = vmatprep.subr.bf16.mxu0 0
      %4530 = vmatpush1.bf16.msra.mxu0 0
      %4531 = vmatprep.subr.bf16.mxu0 0
      %4532 = vmatpush1.bf16.msra.mxu0 0
      %4533 = vmatprep.subr.bf16.mxu0 0
      %4534 = vmatpush1.bf16.msra.mxu0 0
      %4535 = vmatprep.subr.bf16.mxu0 0
      %4536 = vmatpush1.bf16.msra.mxu0 0
      %4537 = vmatprep.mubr.bf16.mxu0 0
      %4538 = vmatmul.mubr.bf16.gmra.mrb[0].mxu0 %v4491
      %v4539 = vpop.f32.mrb[0].mxu0
      %v4540 = vadd.f32 0.0, %v4539
      %v4541 = vpop.f32.mrb[0].mxu0
      %v4542 = vadd.f32 0.0, %v4541
      %v4543 = vpop.f32.mrb[0].mxu0
      %v4544 = vpop.f32.mrb[0].mxu0
      %4545 = vdwg.mxu0
      %4546 = vmatprep.subr.bf16.mxu0 %v4503
      %4547 = vmatpush1.bf16.msra.mxu0 %v4500
      %4548 = vmatprep.subr.bf16.mxu0 0
      %4549 = vmatpush1.bf16.msra.mxu0 0
      %4550 = vmatprep.subr.bf16.mxu0 0
      %4551 = vmatpush1.bf16.msra.mxu0 0
      %4552 = vmatprep.subr.bf16.mxu0 0
      %4553 = vmatpush1.bf16.msra.mxu0 0
      %4554 = vmatprep.subr.bf16.mxu0 0
      %4555 = vmatpush1.bf16.msra.mxu0 0
      %4556 = vmatprep.subr.bf16.mxu0 0
      %4557 = vmatpush1.bf16.msra.mxu0 0
      %4558 = vmatprep.subr.bf16.mxu0 0
      %4559 = vmatpush1.bf16.msra.mxu0 0
      %4560 = vmatprep.subr.bf16.mxu0 0
      %4561 = vmatpush1.bf16.msra.mxu0 0
      %4562 = vmatprep.subr.bf16.mxu0 0
      %4563 = vmatpush1.bf16.msra.mxu0 0
      %4564 = vmatprep.subr.bf16.mxu0 0
      %4565 = vmatpush1.bf16.msra.mxu0 0
      %4566 = vmatprep.subr.bf16.mxu0 0
      %4567 = vmatpush1.bf16.msra.mxu0 0
      %4568 = vmatprep.subr.bf16.mxu0 0
      %4569 = vmatpush1.bf16.msra.mxu0 0
      %4570 = vmatprep.subr.bf16.mxu0 0
      %4571 = vmatpush1.bf16.msra.mxu0 0
      %4572 = vmatprep.subr.bf16.mxu0 0
      %4573 = vmatpush1.bf16.msra.mxu0 0
      %4574 = vmatprep.subr.bf16.mxu0 0
      %4575 = vmatpush1.bf16.msra.mxu0 0
      %4576 = vmatprep.subr.bf16.mxu0 0
      %4577 = vmatpush1.bf16.msra.mxu0 0
      %4578 = vmatprep.mubr.bf16.mxu0 0
      %4579 = vmatmul.mubr.bf16.gmra.mrb[0].mxu0 %v4491
      %v4580 = vpop.f32.mrb[0].mxu0
      %v4581 = vadd.f32 0.0, %v4580
      %v4582 = vpop.f32.mrb[0].mxu0
      %v4583 = vadd.f32 0.0, %v4582
      %v4584 = vpop.f32.mrb[0].mxu0
      %v4585 = vpop.f32.mrb[0].mxu0
      %4586 = vdwg.mxu0
      %v4587 = vadd.f32 %v4469, %v4540
      %v4588 = vadd.f32 %v4470, %v4542
      %v4589 = vadd.f32 %v4471, %v4581
      %v4590 = vadd.f32 %v4472, %v4583
      %v4591 = vld [vmem:[%s8] sm:$0xff]
      %4593 = vset.pattern.permute.xlu0 0
      %4594 = vperm.xlu0 %4593, %v4591
      %v4595 = vpop.permute.xlu0 %4594
      %v4597 = vadd.f32 %v4587, %v4595
      %v4598 = vadd.f32 %v4588, %v4595
      %v4599 = vadd.f32 %v4589, %v4595
      %v4600 = vadd.f32 %v4590, %v4595
      %v4601 = vmax.f32 %v4597, 0.0
      %v4602 = vmax.f32 %v4598, 0.0
      %v4603 = vmax.f32 %v4599, 0.0
      %v4604 = vmax.f32 %v4600, 0.0
      %v4605 = vunpack.c.l.bf16 %v388
      %v4606 = vunpack.c.h.bf16 %v388
      %v4607 = vunpack.c.l.bf16 %v389
      %vm4608 = vcmp.gt.f32.partialorder %v391, 0.0
      %v4609 = vsel %vm4608, 1, 0
      %v4610 = vlaneseq
      %v4611 = vshrl.u32 %v4610, 7
      %v4612 = vsub.s32 0, %v4611
      %v4613 = vrot.slane %v4609, %v4612
      %v4614 = vlaneseq
      %v4615 = vshrl.u32 %v4614, 7
      %v4616 = vsub.s32 1, %v4615
      %v4617 = vrot.slane %v4609, %v4616
      %v4618 = vlaneseq
      %v4619 = vshrl.u32 %v4618, 7
      %v4620 = vsub.s32 2, %v4619
      %v4621 = vrot.slane %v4609, %v4620
      %v4622 = vlaneseq
      %v4623 = vshrl.u32 %v4622, 7
      %v4624 = vsub.s32 3, %v4623
      %v4625 = vrot.slane %v4609, %v4624
      %v4626 = vlaneseq
      %v4627 = vshrl.u32 %v4626, 7
      %v4628 = vsub.s32 4, %v4627
      %v4629 = vrot.slane %v4609, %v4628
      %vm4630 = vcmp.eq.s32.totalorder %v4613, 1
      %vm4631 = vcmp.eq.s32.totalorder %v4617, 1
      %vm4632 = vcmp.eq.s32.totalorder %v4621, 1
      %vm4633 = vcmp.eq.s32.totalorder %v4625, 1
      %vm4634 = vcmp.eq.s32.totalorder %v4629, 1
      %v4637 = vcombine.high %v4605, %v4605
      %v4638 = vcombine.high %v4606, %v4606
      %v4641 = vsel %vm4630, %v4605, -inf
      %v4642 = vsel %vm4631, %v4637, -inf
      %v4643 = vsel %vm4632, %v4606, -inf
      %v4644 = vsel %vm4633, %v4638, -inf
      %v4645 = vsel %vm4634, %v4607, -inf
      %4650 = vrot.lane.b32.xlu0 %v4641, 127
      %v4651 = vpop.permute.xlu0 %4650
      %4652 = vrot.lane.b32.xlu0 %v4642, 127
      %v4653 = vpop.permute.xlu0 %4652
      %4654 = vrot.lane.b32.xlu0 %v4643, 127
      %v4655 = vpop.permute.xlu0 %4654
      %4656 = vrot.lane.b32.xlu0 %v4644, 127
      %v4657 = vpop.permute.xlu0 %4656
      %vm4658 = vcmask 1039360
      %v4659 = vsel %vm4658, %v4651, %v4653
      %v4660 = vsel %vm4658, %v4653, %v4655
      %v4661 = vsel %vm4658, %v4655, %v4657
      %v4666 = vmax.f32 %v4641, %v4659
      %v4667 = vmax.f32 %v4642, %v4660
      %v4668 = vmax.f32 %v4643, %v4661
      %v4669 = vmax.f32 %v4644, %v4657
      %4670 = vrot.lane.b32.xlu0 %v4641, 126
      %v4671 = vpop.permute.xlu0 %4670
      %4672 = vrot.lane.b32.xlu0 %v4642, 126
      %v4673 = vpop.permute.xlu0 %4672
      %4674 = vrot.lane.b32.xlu0 %v4643, 126
      %v4675 = vpop.permute.xlu0 %4674
      %4676 = vrot.lane.b32.xlu0 %v4644, 126
      %v4677 = vpop.permute.xlu0 %4676
      %vm4678 = vcmask 1031168
      %v4679 = vsel %vm4678, %v4671, %v4673
      %v4680 = vsel %vm4678, %v4673, %v4675
      %v4681 = vsel %vm4678, %v4675, %v4677
      %v4686 = vmax.f32 %v4666, %v4679
      %v4687 = vmax.f32 %v4667, %v4680
      %v4688 = vmax.f32 %v4668, %v4681
      %v4689 = vmax.f32 %v4669, %v4677
      %4690 = vrot.lane.b32.xlu0 %v4641, 104
      %v4691 = vpop.permute.xlu0 %4690
      %4692 = vrot.lane.b32.xlu0 %v4642, 104
      %v4693 = vpop.permute.xlu0 %4692
      %4694 = vrot.lane.b32.xlu0 %v4643, 104
      %v4695 = vpop.permute.xlu0 %4694
      %4696 = vrot.lane.b32.xlu0 %v4644, 104
      %v4697 = vpop.permute.xlu0 %4696
      %vm4698 = vcmask 850944
      %v4699 = vsel %vm4698, %v4691, %v4693
      %v4700 = vsel %vm4698, %v4693, %v4695
      %v4701 = vsel %vm4698, %v4695, %v4697
      %v4706 = vmax.f32 %v4686, %v4699
      %v4707 = vmax.f32 %v4687, %v4700
      %v4708 = vmax.f32 %v4688, %v4701
      %v4709 = vmax.f32 %v4689, %v4697
      %4710 = vrot.lane.b32.xlu0 %v4641, 103
      %v4711 = vpop.permute.xlu0 %4710
      %4712 = vrot.lane.b32.xlu0 %v4642, 103
      %v4713 = vpop.permute.xlu0 %4712
      %4714 = vrot.lane.b32.xlu0 %v4643, 103
      %v4715 = vpop.permute.xlu0 %4714
      %4716 = vrot.lane.b32.xlu0 %v4644, 103
      %v4717 = vpop.permute.xlu0 %4716
      %vm4718 = vcmask 842752
      %v4719 = vsel %vm4718, %v4711, %v4713
      %v4720 = vsel %vm4718, %v4713, %v4715
      %v4721 = vsel %vm4718, %v4715, %v4717
      %v4726 = vmax.f32 %v4706, %v4719
      %v4727 = vmax.f32 %v4707, %v4720
      %v4728 = vmax.f32 %v4708, %v4721
      %v4729 = vmax.f32 %v4709, %v4717
      %4730 = vrot.lane.b32.xlu0 %v4641, 102
      %v4731 = vpop.permute.xlu0 %4730
      %4732 = vrot.lane.b32.xlu0 %v4642, 102
      %v4733 = vpop.permute.xlu0 %4732
      %4734 = vrot.lane.b32.xlu0 %v4643, 102
      %v4735 = vpop.permute.xlu0 %4734
      %4736 = vrot.lane.b32.xlu0 %v4644, 102
      %v4737 = vpop.permute.xlu0 %4736
      %vm4738 = vcmask 834560
      %v4739 = vsel %vm4738, %v4731, %v4733
      %v4740 = vsel %vm4738, %v4733, %v4735
      %v4741 = vsel %vm4738, %v4735, %v4737
      %v4746 = vmax.f32 %v4726, %v4739
      %v4747 = vmax.f32 %v4727, %v4740
      %v4748 = vmax.f32 %v4728, %v4741
      %v4749 = vmax.f32 %v4729, %v4737
      %4751 = vrot.lane.b32.xlu0 %v4641, 80
      %v4752 = vpop.permute.xlu0 %4751
      %4753 = vrot.lane.b32.xlu0 %v4642, 80
      %v4754 = vpop.permute.xlu0 %4753
      %4755 = vrot.lane.b32.xlu0 %v4643, 80
      %v4756 = vpop.permute.xlu0 %4755
      %4757 = vrot.lane.b32.xlu0 %v4644, 80
      %v4758 = vpop.permute.xlu0 %4757
      %4759 = vrot.lane.b32.xlu0 %v4645, 80
      %v4760 = vpop.permute.xlu0 %4759
      %vm4761 = vcmask 654336
      %v4762 = vsel %vm4761, %v4752, %v4754
      %v4763 = vsel %vm4761, %v4754, %v4756
      %v4764 = vsel %vm4761, %v4756, %v4758
      %v4765 = vsel %vm4761, %v4758, %v4760
      %v4770 = vmax.f32 %v4746, %v4762
      %v4771 = vmax.f32 %v4747, %v4763
      %v4772 = vmax.f32 %v4748, %v4764
      %v4773 = vmax.f32 %v4749, %v4765
      %4774 = vrot.lane.b32.xlu0 %v4641, 79
      %v4775 = vpop.permute.xlu0 %4774
      %4776 = vrot.lane.b32.xlu0 %v4642, 79
      %v4777 = vpop.permute.xlu0 %4776
      %4778 = vrot.lane.b32.xlu0 %v4643, 79
      %v4779 = vpop.permute.xlu0 %4778
      %4780 = vrot.lane.b32.xlu0 %v4644, 79
      %v4781 = vpop.permute.xlu0 %4780
      %4782 = vrot.lane.b32.xlu0 %v4645, 79
      %v4783 = vpop.permute.xlu0 %4782
      %vm4784 = vcmask 646144
      %v4785 = vsel %vm4784, %v4775, %v4777
      %v4786 = vsel %vm4784, %v4777, %v4779
      %v4787 = vsel %vm4784, %v4779, %v4781
      %v4788 = vsel %vm4784, %v4781, %v4783
      %v4793 = vmax.f32 %v4770, %v4785
      %v4794 = vmax.f32 %v4771, %v4786
      %v4795 = vmax.f32 %v4772, %v4787
      %v4796 = vmax.f32 %v4773, %v4788
      %4797 = vrot.lane.b32.xlu0 %v4641, 78
      %v4798 = vpop.permute.xlu0 %4797
      %4799 = vrot.lane.b32.xlu0 %v4642, 78
      %v4800 = vpop.permute.xlu0 %4799
      %4801 = vrot.lane.b32.xlu0 %v4643, 78
      %v4802 = vpop.permute.xlu0 %4801
      %4803 = vrot.lane.b32.xlu0 %v4644, 78
      %v4804 = vpop.permute.xlu0 %4803
      %4805 = vrot.lane.b32.xlu0 %v4645, 78
      %v4806 = vpop.permute.xlu0 %4805
      %vm4807 = vcmask 637952
      %v4808 = vsel %vm4807, %v4798, %v4800
      %v4809 = vsel %vm4807, %v4800, %v4802
      %v4810 = vsel %vm4807, %v4802, %v4804
      %v4811 = vsel %vm4807, %v4804, %v4806
      %v4816 = vmax.f32 %v4793, %v4808
      %v4817 = vmax.f32 %v4794, %v4809
      %v4818 = vmax.f32 %v4795, %v4810
      %v4819 = vmax.f32 %v4796, %v4811
      %4824 = vrot.lane.b32.xlu0 %v4816, 25
      %v4825 = vpop.permute.xlu0 %4824
      %4826 = vrot.lane.b32.xlu0 %v4817, 25
      %v4827 = vpop.permute.xlu0 %4826
      %4828 = vrot.lane.b32.xlu0 %v4818, 25
      %v4829 = vpop.permute.xlu0 %4828
      %4830 = vrot.lane.b32.xlu0 %v4819, 25
      %v4831 = vpop.permute.xlu0 %4830
      %vm4832 = vcmask 203776
      %v4833 = vsel %vm4832, %v4825, %v4827
      %v4834 = vsel %vm4832, %v4827, %v4829
      %v4835 = vsel %vm4832, %v4829, %v4831
      %v4840 = vsel %vm4630, %v4825, 0.0
      %v4841 = vsel %vm4631, %v4833, 0.0
      %v4842 = vsel %vm4632, %v4834, 0.0
      %v4843 = vsel %vm4633, %v4835, 0.0
      %v4844 = vpack.c.bf16 %v4840, %v4840
      %v4845 = vpack.c.bf16 %v4841, %v4841
      %v4846 = vpack.c.bf16 %v4842, %v4842
      %v4847 = vpack.c.bf16 %v4843, %v4843
      %v4848 = vld [vmem:[%s9] sm:$0x3]
      %v4849 = vld [vmem:[%s10] sm:$0xf]
      %4851 = vset.pattern.permute.xlu0 0
      %4852 = vperm.xlu0 %4851, %v4849
      %v4853 = vpop.permute.xlu0 %4852
      %4859 = vrot.lane.b32.xlu0 %v4844, 56
      %v4860 = vpop.permute.xlu0 %4859
      %4861 = vrot.lane.b32.xlu0 %v4845, 56
      %v4862 = vpop.permute.xlu0 %4861
      %4863 = vrot.lane.b32.xlu0 %v4846, 56
      %v4864 = vpop.permute.xlu0 %4863
      %4865 = vrot.lane.b32.xlu0 %v4847, 56
      %v4866 = vpop.permute.xlu0 %4865
      %v4867 = vsel %vm1109, %v4860, %v4862
      %v4868 = vsel %vm1109, %v4862, %v4864
      %v4869 = vsel %vm1109, %v4864, %v4866
      %v4871 = vsel %vm437, %v4848, 0
      %v4874 = vsel %vm441, %v4867, 0
      %v4877 = vsel %vm441, %v4868, 0
      %v4880 = vsel %vm441, %v4869, 0
      %v4883 = vsel %vm441, %v4866, 0
      %4885 = vmatprep.subr.bf16.mxu0 %v4877
      %4886 = vmatpush1.bf16.msra.mxu0 %v4874
      %4887 = vmatprep.subr.bf16.mxu0 0
      %4888 = vmatpush1.bf16.msra.mxu0 0
      %4889 = vmatprep.subr.bf16.mxu0 0
      %4890 = vmatpush1.bf16.msra.mxu0 0
      %4891 = vmatprep.subr.bf16.mxu0 0
      %4892 = vmatpush1.bf16.msra.mxu0 0
      %4893 = vmatprep.subr.bf16.mxu0 0
      %4894 = vmatpush1.bf16.msra.mxu0 0
      %4895 = vmatprep.subr.bf16.mxu0 0
      %4896 = vmatpush1.bf16.msra.mxu0 0
      %4897 = vmatprep.subr.bf16.mxu0 0
      %4898 = vmatpush1.bf16.msra.mxu0 0
      %4899 = vmatprep.subr.bf16.mxu0 0
      %4900 = vmatpush1.bf16.msra.mxu0 0
      %4901 = vmatprep.subr.bf16.mxu0 0
      %4902 = vmatpush1.bf16.msra.mxu0 0
      %4903 = vmatprep.subr.bf16.mxu0 0
      %4904 = vmatpush1.bf16.msra.mxu0 0
      %4905 = vmatprep.subr.bf16.mxu0 0
      %4906 = vmatpush1.bf16.msra.mxu0 0
      %4907 = vmatprep.subr.bf16.mxu0 0
      %4908 = vmatpush1.bf16.msra.mxu0 0
      %4909 = vmatprep.subr.bf16.mxu0 0
      %4910 = vmatpush1.bf16.msra.mxu0 0
      %4911 = vmatprep.subr.bf16.mxu0 0
      %4912 = vmatpush1.bf16.msra.mxu0 0
      %4913 = vmatprep.subr.bf16.mxu0 0
      %4914 = vmatpush1.bf16.msra.mxu0 0
      %4915 = vmatprep.subr.bf16.mxu0 0
      %4916 = vmatpush1.bf16.msra.mxu0 0
      %4917 = vmatprep.mubr.bf16.mxu0 0
      %4918 = vmatmul.mubr.bf16.gmra.mrb[0].mxu0 %v4871
      %v4919 = vpop.f32.mrb[0].mxu0
      %v4920 = vadd.f32 %v4853, %v4919
      %v4921 = vpop.f32.mrb[0].mxu0
      %v4922 = vadd.f32 %v4853, %v4921
      %v4923 = vpop.f32.mrb[0].mxu0
      %v4924 = vpop.f32.mrb[0].mxu0
      %4925 = vdwg.mxu0
      %4926 = vmatprep.subr.bf16.mxu0 %v4883
      %4927 = vmatpush1.bf16.msra.mxu0 %v4880
      %4928 = vmatprep.subr.bf16.mxu0 0
      %4929 = vmatpush1.bf16.msra.mxu0 0
      %4930 = vmatprep.subr.bf16.mxu0 0
      %4931 = vmatpush1.bf16.msra.mxu0 0
      %4932 = vmatprep.subr.bf16.mxu0 0
      %4933 = vmatpush1.bf16.msra.mxu0 0
      %4934 = vmatprep.subr.bf16.mxu0 0
      %4935 = vmatpush1.bf16.msra.mxu0 0
      %4936 = vmatprep.subr.bf16.mxu0 0
      %4937 = vmatpush1.bf16.msra.mxu0 0
      %4938 = vmatprep.subr.bf16.mxu0 0
      %4939 = vmatpush1.bf16.msra.mxu0 0
      %4940 = vmatprep.subr.bf16.mxu0 0
      %4941 = vmatpush1.bf16.msra.mxu0 0
      %4942 = vmatprep.subr.bf16.mxu0 0
      %4943 = vmatpush1.bf16.msra.mxu0 0
      %4944 = vmatprep.subr.bf16.mxu0 0
      %4945 = vmatpush1.bf16.msra.mxu0 0
      %4946 = vmatprep.subr.bf16.mxu0 0
      %4947 = vmatpush1.bf16.msra.mxu0 0
      %4948 = vmatprep.subr.bf16.mxu0 0
      %4949 = vmatpush1.bf16.msra.mxu0 0
      %4950 = vmatprep.subr.bf16.mxu0 0
      %4951 = vmatpush1.bf16.msra.mxu0 0
      %4952 = vmatprep.subr.bf16.mxu0 0
      %4953 = vmatpush1.bf16.msra.mxu0 0
      %4954 = vmatprep.subr.bf16.mxu0 0
      %4955 = vmatpush1.bf16.msra.mxu0 0
      %4956 = vmatprep.subr.bf16.mxu0 0
      %4957 = vmatpush1.bf16.msra.mxu0 0
      %4958 = vmatprep.mubr.bf16.mxu0 0
      %4959 = vmatmul.mubr.bf16.gmra.mrb[0].mxu0 %v4871
      %v4960 = vpop.f32.mrb[0].mxu0
      %v4961 = vadd.f32 %v4853, %v4960
      %v4962 = vpop.f32.mrb[0].mxu0
      %v4963 = vadd.f32 %v4853, %v4962
      %v4964 = vpop.f32.mrb[0].mxu0
      %v4965 = vpop.f32.mrb[0].mxu0
      %4966 = vdwg.mxu0
      %v4967 = vmax.f32 %v4920, 0.0
      %v4968 = vmax.f32 %v4922, 0.0
      %v4969 = vmax.f32 %v4961, 0.0
      %v4970 = vmax.f32 %v4963, 0.0
      %4975 = vrot.lane.b32.xlu0 %v584, 56
      %v4976 = vpop.permute.xlu0 %4975
      %4977 = vrot.lane.b32.xlu0 %v585, 56
      %v4978 = vpop.permute.xlu0 %4977
      %4979 = vrot.lane.b32.xlu0 %v586, 56
      %v4980 = vpop.permute.xlu0 %4979
      %4981 = vrot.lane.b32.xlu0 %v587, 56
      %v4982 = vpop.permute.xlu0 %4981
      %vm4983 = vcmask 457728
      %v4984 = vsel %vm4983, %v4976, %v4978
      %v4985 = vsel %vm4983, %v4978, %v4980
      %v4986 = vsel %vm4983, %v4980, %v4982
      %4991 = vst [vmem:[%s386] sm:$0xf] %v4984
      %4992 = vst [vmem:[%s386 + $0x8] sm:$0xf] %v4985
      %4993 = vst [vmem:[%s386 + $0x10] sm:$0xf] %v4986
      %vm4994 = vcmask 388096
      %4995 = vst.msk [vmem:[%s386 + $0x18] sm:$0xf] %vm4994, %v4982
      %v5000 = vrot.slane %v1695, 4
      %v5001 = vrot.slane %v1696, 4
      %v5002 = vrot.slane %v1697, 4
      %v5003 = vrot.slane %v1698, 4
      %5008 = vst [vmem:[%s386] sm:$0xf0] %v5000
      %5009 = vst [vmem:[%s386 + $0x8] sm:$0xf0] %v5001
      %5010 = vst [vmem:[%s386 + $0x10] sm:$0xf0] %v5002
      %vm5011 = vcmask 392196
      %5012 = vst.msk [vmem:[%s386 + $0x18] sm:$0xf0] %vm5011, %v5003
      %5013 = vst [vmem:[%s386 + $0x20] sm:$0xf] %v5000
      %5014 = vst [vmem:[%s386 + $0x28] sm:$0xf] %v5001
      %5015 = vst [vmem:[%s386 + $0x30] sm:$0xf] %v5002
      %5016 = vst.msk [vmem:[%s386 + $0x38] sm:$0xf] %vm4994, %v5003
      %v5021 = vrot.slane %v4601, 4
      %v5022 = vrot.slane %v4602, 4
      %v5023 = vrot.slane %v4603, 4
      %v5024 = vrot.slane %v4604, 4
      %5029 = vst [vmem:[%s386 + $0x20] sm:$0xf0] %v5021
      %5030 = vst [vmem:[%s386 + $0x28] sm:$0xf0] %v5022
      %5031 = vst [vmem:[%s386 + $0x30] sm:$0xf0] %v5023
      %5032 = vst.msk [vmem:[%s386 + $0x38] sm:$0xf0] %vm5011, %v5024
      %5033 = vst [vmem:[%s386 + $0x40] sm:$0xf] %v5021
      %5034 = vst [vmem:[%s386 + $0x48] sm:$0xf] %v5022
      %5035 = vst [vmem:[%s386 + $0x50] sm:$0xf] %v5023
      %5036 = vst.msk [vmem:[%s386 + $0x58] sm:$0xf] %vm4994, %v5024
      %v5041 = vrot.slane %v4967, 4
      %v5042 = vrot.slane %v4968, 4
      %v5043 = vrot.slane %v4969, 4
      %v5044 = vrot.slane %v4970, 4
      %5049 = vst [vmem:[%s386 + $0x40] sm:$0xf0] %v5041
      %5050 = vst [vmem:[%s386 + $0x48] sm:$0xf0] %v5042
      %5051 = vst [vmem:[%s386 + $0x50] sm:$0xf0] %v5043
      %5052 = vst.msk [vmem:[%s386 + $0x58] sm:$0xf0] %vm5011, %v5044
      %p5053 = scmp.lt.s32.totalorder %s22, 1
      %s5054 = scalar_select %p5053, %s22, 1
      %s5055 = smul.addr %s5054, 12
      %s5056 = smul.addr %s5055, 8
      %s5057 = scalar_lea.vmem %s11, %s5056
      // Predicated region
      $region65: #{inception_block.1} parent=63 // pred_check
        %p5058 = pneg %p276
      $region66: #{inception_block.1} parent=63 // pred_check_branch
        %5060 = sbr.rel (%p5058) target = $region68
      $region67: #{inception_block.1} parent=63 // pred_region
        _
      $region68: #{inception_block.1} parent=63 // pred_fallthru
        _
    $region64: #{inception_block.1} parent=5 // pred_fallthru
      _
    %p5061 = scmp.le.s32.totalorder 2, %s17
    // Predicated region
    $region69: #{inception_block.1} parent=5 // pred_check
      %p5062 = pneg %p5061
    $region70: #{inception_block.1} parent=5 // pred_check_branch
      %5064 = sbr.rel (%p5062) target = $region72
    $region71: #{inception_block.1} parent=5 // pred_region
      %s5065 = ssub.s32 %s17, 2
      // Predicated region
      $region73: #{inception_block.1} parent=71 // pred_check
        %p5066 = pneg %p282
      $region74: #{inception_block.1} parent=71 // pred_check_branch
        %5068 = sbr.rel (%p5066) target = $region76
      $region75: #{inception_block.1} parent=71 // pred_region
        %p5069 = scmp.lt.s32.totalorder %s23, 1
        %s5070 = scalar_select %p5069, %s23, 1
        %s5071 = smul.addr %s5070, 12
        %s5072 = smul.addr %s5071, 8
        %s5073 = scalar_lea.vmem %s11, %s5072
      $region76: #{inception_block.1} parent=71 // pred_fallthru
        _
    $region72: #{inception_block.1} parent=5 // pred_fallthru
      _
  $region6: #{inception_block.1} parent=0 // loop_footer
    %s21 = sadd.s32 1, %s17
  $region7: #{inception_block.1} parent=0 // loop_footer_branch
    %16 = sbr.rel target = $region3
  $region8: #{inception_block.1} parent=0 // loop_exit
    _

</llo_original>
